<compile_context>
chip_gen: v6e
topology: v6e:2x2x1
jax: 0.10.0
libtpu: 0.0.40
codegen_flags: <defaults>
</compile_context>

<pallas_src>
import jax
import jax.numpy as jnp
from jax.experimental import pallas as pl
from jax.experimental.pallas import tpu as pltpu

DIM = 784
HIDDEN = 256
N_FLOWS = 4
BATCH = 8
HALF = DIM // 2   # 392 = number of masked (and of transformed) features per flow
QTR = DIM // 4    # 196


def normalizing_flow_kernel(w1_ref, w2_ref, wst_ref, bb_ref, bst_ref, x_ref,
                            z_ref, ld_ref):
    """Single invocation: all 4 coupling layers unrolled, pruned params resident in VMEM.

    Feature axis is in de-interleaved order: lanes [0:392] = original even
    indices (ascending), lanes [392:784] = original odd indices (ascending).
    """
    x = x_ref[...]                                  # (B, DIM) f32, permuted order
    z_lo = x[:, :HALF]                              # even original features
    z_hi = x[:, HALF:]                              # odd  original features
    ld = jnp.zeros(ld_ref.shape, jnp.float32)       # (B, 1)

    # Static unrolled loop over the 4 flows (compile-time constant).
    for i in range(N_FLOWS):
        if i % 2 == 0:
            # 'alternate' mask: masked = evens (= z_lo), transformed = odds (= z_hi)
            xc = z_lo                                                    # (B, HALF)
        else:
            # 'split' mask: masked = originals < 392 = first quarter of each half
            xc = jnp.concatenate([z_lo[:, :QTR], z_hi[:, :QTR]], axis=-1)  # (B, HALF)

        bb = bb_ref[i]                                                   # (2, HIDDEN)
        # MLP on the compacted masked input: pruned W1 (HALF, HIDDEN), then
        # W2 (HIDDEN, HIDDEN), then the packed pruned [Ws | Wt] (HIDDEN, DIM).
        h1 = jnp.maximum(
            jnp.dot(xc, w1_ref[i], preferred_element_type=jnp.float32) + bb[0:1, :], 0.0)
        h2 = jnp.maximum(
            jnp.dot(h1, w2_ref[i], preferred_element_type=jnp.float32) + bb[1:2, :], 0.0)
        st = jnp.dot(h2, wst_ref[i], preferred_element_type=jnp.float32) + bst_ref[i]
        s = jnp.tanh(st[:, :HALF]) * 0.5                                 # (B, HALF)
        t = st[:, HALF:]                                                 # (B, HALF)

        # All pruned s columns correspond to (1 - mask) == 1 positions.
        ld = ld + jnp.sum(s, axis=1, keepdims=True)

        if i % 2 == 0:
            z_hi = z_hi * jnp.exp(s) + t
        else:
            z_lo = jnp.concatenate(
                [z_lo[:, :QTR], z_lo[:, QTR:] * jnp.exp(s[:, :QTR]) + t[:, :QTR]],
                axis=-1)
            z_hi = jnp.concatenate(
                [z_hi[:, :QTR], z_hi[:, QTR:] * jnp.exp(s[:, QTR:]) + t[:, QTR:]],
                axis=-1)

    # Single lane-dense writeback of the carried state.
    z_ref[...] = jnp.concatenate([z_lo, z_hi], axis=-1)
    ld_ref[...] = ld


def normalizing_flow_forward(x, packed):
    """x: (B, DIM) float32 (original feature order) -> (z: (B, DIM), log_det: (B,))."""
    w1p, w2, wstp, bbp, bstp = packed
    B = x.shape[0]

    perm = jnp.concatenate([jnp.arange(0, DIM, 2), jnp.arange(1, DIM, 2)])
    inv_perm = jnp.argsort(perm)
    x_perm = x[:, perm]                 # tiny XLA gather outside the kernel

    vmem = lambda: pl.BlockSpec(memory_space=pltpu.MemorySpace.VMEM)
    z_perm, ld = pl.pallas_call(
        normalizing_flow_kernel,
        out_shape=(jax.ShapeDtypeStruct((B, DIM), jnp.float32),
                   jax.ShapeDtypeStruct((B, 1), jnp.float32)),
        in_specs=[vmem() for _ in range(6)],
        out_specs=(vmem(), vmem()),
        compiler_params=pltpu.CompilerParams(
            vmem_limit_bytes=32 * 1024 * 1024),
    )(w1p, w2, wstp, bbp, bstp, x_perm)
    return z_perm[:, inv_perm], ld[:, 0]


def init_params(key, dim, hidden, n_flows):
    """Deterministic synthetic parameters matching the PyTorch module shapes."""
    masks = []
    for i in range(n_flows):
        m = jnp.zeros((dim,), jnp.float32)
        if i % 2 == 0:                      # 'alternate'
            m = m.at[::2].set(1.0)
        else:                               # 'split'
            m = m.at[: dim // 2].set(1.0)
        masks.append(m)
    masks = jnp.stack(masks).reshape(n_flows, 1, dim)

    def linear(k, fan_in, fan_out):
        kw, kb = jax.random.split(k)
        bound = 1.0 / float(fan_in) ** 0.5
        w = jax.random.uniform(kw, (fan_in, fan_out), jnp.float32, -bound, bound)
        b = jax.random.uniform(kb, (fan_out,), jnp.float32, -bound, bound)
        return w, b

    w1s, b1s, w2s, b2s, w3s, b3s = ([] for _ in range(6))
    keys = jax.random.split(key, n_flows)
    for i in range(n_flows):
        k1, k2, k3 = jax.random.split(keys[i], 3)
        w1, b1 = linear(k1, dim, hidden)
        w2, b2 = linear(k2, hidden, hidden)
        w3, b3 = linear(k3, hidden, 2 * dim)        # Linear(hidden, 2*dim)
        w1s.append(w1); b1s.append(b1)
        w2s.append(w2); b2s.append(b2)
        w3s.append(w3); b3s.append(b3)

    return (masks, jnp.stack(w1s), jnp.stack(b1s), jnp.stack(w2s),
            jnp.stack(b2s), jnp.stack(w3s), jnp.stack(b3s))


def pack_params(params):
    """Offline pruning + permutation of the full module params for the kernel.

    Drops the mask==0 rows of W1 and the mask==1 columns of Ws/Wt (exact f32
    math: those entries only ever multiply / are multiplied by exact zeros),
    and reorders everything to the kernel's de-interleaved [evens | odds]
    feature order so all in-kernel moves are contiguous slices.
    """
    _, w1, b1, w2, b2, w3, b3 = params
    n = w1.shape[0]
    evens = jnp.arange(0, DIM, 2)
    odds = jnp.arange(1, DIM, 2)

    w1p, wstp, bstp, bbp = [], [], [], []
    for i in range(n):
        if i % 2 == 0:   # 'alternate' mask: masked = evens, transformed = odds
            masked_order = evens
            trans_order = odds
        else:            # 'split' mask: masked = originals < DIM//2
            masked_order = jnp.concatenate([evens[:QTR], odds[:QTR]])
            trans_order = jnp.concatenate([evens[QTR:], odds[QTR:]])

        ws_i, wt_i = w3[i][:, :DIM], w3[i][:, DIM:]      # torch.chunk(nn_out, 2, dim=1)
        bs_i, bt_i = b3[i][:DIM], b3[i][DIM:]

        w1p.append(w1[i][masked_order, :])                               # (HALF, HIDDEN)
        wstp.append(jnp.concatenate([ws_i[:, trans_order],
                                     wt_i[:, trans_order]], axis=1))     # (HIDDEN, DIM)
        bstp.append(jnp.concatenate([bs_i[trans_order], bt_i[trans_order]]))  # (DIM,)
        bbp.append(jnp.stack([b1[i], b2[i]]))                            # (2, HIDDEN)

    return (jnp.stack(w1p), w2, jnp.stack(wstp),
            jnp.stack(bbp), jnp.stack(bstp).reshape(n, 1, DIM))


def reference_forward(x, params):
    """Pure-JAX reference mirroring the PyTorch semantics exactly (full params)."""
    masks, w1, b1, w2, b2, w3, b3 = params
    z = x
    ld = jnp.zeros((x.shape[0],), jnp.float32)
    for i in range(masks.shape[0]):
        m = masks[i]               # (1, D)
        inv = 1.0 - m
        xm = z * m
        h1 = jax.nn.relu(xm @ w1[i] + b1[i])
        h2 = jax.nn.relu(h1 @ w2[i] + b2[i])
        nn_out = h2 @ w3[i] + b3[i]
        s = jnp.tanh(nn_out[:, :DIM]) * 0.5
        t = nn_out[:, DIM:]
        z = xm + (z * inv * jnp.exp(s) + t) * inv
        ld = ld + jnp.sum(s * inv, axis=1)
    return z, ld


if __name__ == "__main__":
    key = jax.random.PRNGKey(0)
    k_param, k_x = jax.random.split(key)
    params = init_params(k_param, DIM, HIDDEN, N_FLOWS)
    packed = pack_params(params)
    x = jax.random.uniform(k_x, (BATCH, DIM), jnp.float32)

    z, log_det = normalizing_flow_forward(x, packed)
    z = jax.block_until_ready(z)
    log_det = jax.block_until_ready(log_det)

    z_ref, ld_ref = reference_forward(x, params)
    assert z.shape == (BATCH, DIM) and log_det.shape == (BATCH,)
    assert jnp.allclose(z, z_ref, rtol=1e-5, atol=1e-5)
    assert jnp.allclose(log_det, ld_ref, rtol=1e-5, atol=1e-5)

    print("KERNEL_OK")
</pallas_src>

<mosaic_0001>
module attributes {stable_mosaic.version = 11 : i64} {
  func.func @normalizing_flow_kernel(%arg0: memref<4x392x256xf32, #tpu.memory_space<vmem>>, %arg1: memref<4x256x256xf32, #tpu.memory_space<vmem>>, %arg2: memref<4x256x784xf32, #tpu.memory_space<vmem>>, %arg3: memref<4x2x256xf32, #tpu.memory_space<vmem>>, %arg4: memref<4x1x784xf32, #tpu.memory_space<vmem>>, %arg5: memref<8x784xf32, #tpu.memory_space<vmem>>, %arg6: memref<8x784xf32, #tpu.memory_space<vmem>>, %arg7: memref<8x1xf32, #tpu.memory_space<vmem>>) attributes {dimension_semantics = [], scalar_prefetch = 0 : i64, scratch_operands = 0 : i64, tpu.core_type = #tpu.core_type<tc>} {
    %c0 = arith.constant 0 : index
    %c0_0 = arith.constant 0 : index
    %0 = vector.load %arg5[%c0, %c0_0] : memref<8x784xf32, #tpu.memory_space<vmem>>, vector<8x784xf32>
    %1 = vector.extract_strided_slice %0 {offsets = [0, 0], sizes = [8, 392], strides = [1, 1]} : vector<8x784xf32> to vector<8x392xf32>
    %2 = vector.extract_strided_slice %0 {offsets = [0, 392], sizes = [8, 392], strides = [1, 1]} : vector<8x784xf32> to vector<8x392xf32>
    %cst = arith.constant 0.000000e+00 : f32
    %3 = vector.broadcast %cst : f32 to vector<8x1xf32>
    %c0_1 = arith.constant 0 : index
    %c0_2 = arith.constant 0 : index
    %c0_3 = arith.constant 0 : index
    %4 = vector.load %arg3[%c0_1, %c0_2, %c0_3] : memref<4x2x256xf32, #tpu.memory_space<vmem>>, vector<1x2x256xf32>
    %5 = vector.shape_cast %4 : vector<1x2x256xf32> to vector<2x256xf32>
    %c0_4 = arith.constant 0 : index
    %c0_5 = arith.constant 0 : index
    %c0_6 = arith.constant 0 : index
    %6 = vector.load %arg0[%c0_4, %c0_5, %c0_6] : memref<4x392x256xf32, #tpu.memory_space<vmem>>, vector<1x392x256xf32>
    %7 = vector.shape_cast %6 : vector<1x392x256xf32> to vector<392x256xf32>
    %cst_7 = arith.constant dense<0.000000e+00> : vector<8x256xf32>
    %8 = tpu.matmul %1, %7, %cst_7 {dimension_numbers = #tpu.dot_dimension_numbers<[1], [0], [0], [1], [0, 0, 1, 1], [], []>} : vector<8x392xf32>, vector<392x256xf32>, vector<8x256xf32> -> vector<8x256xf32>
    %9 = vector.extract_strided_slice %5 {offsets = [0, 0], sizes = [1, 256], strides = [1, 1]} : vector<2x256xf32> to vector<1x256xf32>
    %10 = vector.broadcast %9 : vector<1x256xf32> to vector<8x256xf32>
    %11 = arith.addf %8, %10 : vector<8x256xf32>
    %cst_8 = arith.constant 0.000000e+00 : f32
    %12 = vector.broadcast %cst_8 : f32 to vector<8x256xf32>
    %13 = arith.maximumf %11, %12 : vector<8x256xf32>
    %c0_9 = arith.constant 0 : index
    %c0_10 = arith.constant 0 : index
    %c0_11 = arith.constant 0 : index
    %14 = vector.load %arg1[%c0_9, %c0_10, %c0_11] : memref<4x256x256xf32, #tpu.memory_space<vmem>>, vector<1x256x256xf32>
    %15 = vector.shape_cast %14 : vector<1x256x256xf32> to vector<256x256xf32>
    %cst_12 = arith.constant dense<0.000000e+00> : vector<8x256xf32>
    %16 = tpu.matmul %13, %15, %cst_12 {dimension_numbers = #tpu.dot_dimension_numbers<[1], [0], [0], [1], [0, 0, 1, 1], [], []>} : vector<8x256xf32>, vector<256x256xf32>, vector<8x256xf32> -> vector<8x256xf32>
    %17 = vector.extract_strided_slice %5 {offsets = [1, 0], sizes = [1, 256], strides = [1, 1]} : vector<2x256xf32> to vector<1x256xf32>
    %18 = vector.broadcast %17 : vector<1x256xf32> to vector<8x256xf32>
    %19 = arith.addf %16, %18 : vector<8x256xf32>
    %cst_13 = arith.constant 0.000000e+00 : f32
    %20 = vector.broadcast %cst_13 : f32 to vector<8x256xf32>
    %21 = arith.maximumf %19, %20 : vector<8x256xf32>
    %c0_14 = arith.constant 0 : index
    %c0_15 = arith.constant 0 : index
    %c0_16 = arith.constant 0 : index
    %22 = vector.load %arg2[%c0_14, %c0_15, %c0_16] : memref<4x256x784xf32, #tpu.memory_space<vmem>>, vector<1x256x784xf32>
    %23 = vector.shape_cast %22 : vector<1x256x784xf32> to vector<256x784xf32>
    %cst_17 = arith.constant dense<0.000000e+00> : vector<8x784xf32>
    %24 = tpu.matmul %21, %23, %cst_17 {dimension_numbers = #tpu.dot_dimension_numbers<[1], [0], [0], [1], [0, 0, 1, 1], [], []>} : vector<8x256xf32>, vector<256x784xf32>, vector<8x784xf32> -> vector<8x784xf32>
    %c0_18 = arith.constant 0 : index
    %c0_19 = arith.constant 0 : index
    %c0_20 = arith.constant 0 : index
    %25 = vector.load %arg4[%c0_18, %c0_19, %c0_20] : memref<4x1x784xf32, #tpu.memory_space<vmem>>, vector<1x1x784xf32>
    %26 = vector.shape_cast %25 : vector<1x1x784xf32> to vector<1x784xf32>
    %27 = vector.broadcast %26 : vector<1x784xf32> to vector<8x784xf32>
    %28 = arith.addf %24, %27 : vector<8x784xf32>
    %29 = vector.extract_strided_slice %28 {offsets = [0, 0], sizes = [8, 392], strides = [1, 1]} : vector<8x784xf32> to vector<8x392xf32>
    %30 = math.tanh %29 : vector<8x392xf32>
    %cst_21 = arith.constant 5.000000e-01 : f32
    %31 = vector.broadcast %cst_21 : f32 to vector<8x392xf32>
    %32 = arith.mulf %30, %31 : vector<8x392xf32>
    %33 = vector.extract_strided_slice %28 {offsets = [0, 392], sizes = [8, 392], strides = [1, 1]} : vector<8x784xf32> to vector<8x392xf32>
    %cst_22 = arith.constant dense<0.000000e+00> : vector<8xf32>
    %34 = vector.multi_reduction <add>, %32, %cst_22 [1] : vector<8x392xf32> to vector<8xf32>
    %35 = vector.shape_cast %34 : vector<8xf32> to vector<8x1xf32>
    %36 = arith.addf %3, %35 : vector<8x1xf32>
    %37 = math.exp %32 : vector<8x392xf32>
    %38 = arith.mulf %2, %37 : vector<8x392xf32>
    %39 = arith.addf %38, %33 : vector<8x392xf32>
    %40 = vector.extract_strided_slice %1 {offsets = [0, 0], sizes = [8, 196], strides = [1, 1]} : vector<8x392xf32> to vector<8x196xf32>
    %41 = vector.extract_strided_slice %39 {offsets = [0, 0], sizes = [8, 196], strides = [1, 1]} : vector<8x392xf32> to vector<8x196xf32>
    %42 = tpu.concatenate %40, %41 in 1 : vector<8x196xf32>, vector<8x196xf32> -> vector<8x392xf32>
    %c1 = arith.constant 1 : index
    %c0_23 = arith.constant 0 : index
    %c0_24 = arith.constant 0 : index
    %43 = vector.load %arg3[%c1, %c0_23, %c0_24] : memref<4x2x256xf32, #tpu.memory_space<vmem>>, vector<1x2x256xf32>
    %44 = vector.shape_cast %43 : vector<1x2x256xf32> to vector<2x256xf32>
    %c1_25 = arith.constant 1 : index
    %c0_26 = arith.constant 0 : index
    %c0_27 = arith.constant 0 : index
    %45 = vector.load %arg0[%c1_25, %c0_26, %c0_27] : memref<4x392x256xf32, #tpu.memory_space<vmem>>, vector<1x392x256xf32>
    %46 = vector.shape_cast %45 : vector<1x392x256xf32> to vector<392x256xf32>
    %cst_28 = arith.constant dense<0.000000e+00> : vector<8x256xf32>
    %47 = tpu.matmul %42, %46, %cst_28 {dimension_numbers = #tpu.dot_dimension_numbers<[1], [0], [0], [1], [0, 0, 1, 1], [], []>} : vector<8x392xf32>, vector<392x256xf32>, vector<8x256xf32> -> vector<8x256xf32>
    %48 = vector.extract_strided_slice %44 {offsets = [0, 0], sizes = [1, 256], strides = [1, 1]} : vector<2x256xf32> to vector<1x256xf32>
    %49 = vector.broadcast %48 : vector<1x256xf32> to vector<8x256xf32>
    %50 = arith.addf %47, %49 : vector<8x256xf32>
    %cst_29 = arith.constant 0.000000e+00 : f32
    %51 = vector.broadcast %cst_29 : f32 to vector<8x256xf32>
    %52 = arith.maximumf %50, %51 : vector<8x256xf32>
    %c1_30 = arith.constant 1 : index
    %c0_31 = arith.constant 0 : index
    %c0_32 = arith.constant 0 : index
    %53 = vector.load %arg1[%c1_30, %c0_31, %c0_32] : memref<4x256x256xf32, #tpu.memory_space<vmem>>, vector<1x256x256xf32>
    %54 = vector.shape_cast %53 : vector<1x256x256xf32> to vector<256x256xf32>
    %cst_33 = arith.constant dense<0.000000e+00> : vector<8x256xf32>
    %55 = tpu.matmul %52, %54, %cst_33 {dimension_numbers = #tpu.dot_dimension_numbers<[1], [0], [0], [1], [0, 0, 1, 1], [], []>} : vector<8x256xf32>, vector<256x256xf32>, vector<8x256xf32> -> vector<8x256xf32>
    %56 = vector.extract_strided_slice %44 {offsets = [1, 0], sizes = [1, 256], strides = [1, 1]} : vector<2x256xf32> to vector<1x256xf32>
    %57 = vector.broadcast %56 : vector<1x256xf32> to vector<8x256xf32>
    %58 = arith.addf %55, %57 : vector<8x256xf32>
    %cst_34 = arith.constant 0.000000e+00 : f32
    %59 = vector.broadcast %cst_34 : f32 to vector<8x256xf32>
    %60 = arith.maximumf %58, %59 : vector<8x256xf32>
    %c1_35 = arith.constant 1 : index
    %c0_36 = arith.constant 0 : index
    %c0_37 = arith.constant 0 : index
    %61 = vector.load %arg2[%c1_35, %c0_36, %c0_37] : memref<4x256x784xf32, #tpu.memory_space<vmem>>, vector<1x256x784xf32>
    %62 = vector.shape_cast %61 : vector<1x256x784xf32> to vector<256x784xf32>
    %cst_38 = arith.constant dense<0.000000e+00> : vector<8x784xf32>
    %63 = tpu.matmul %60, %62, %cst_38 {dimension_numbers = #tpu.dot_dimension_numbers<[1], [0], [0], [1], [0, 0, 1, 1], [], []>} : vector<8x256xf32>, vector<256x784xf32>, vector<8x784xf32> -> vector<8x784xf32>
    %c1_39 = arith.constant 1 : index
    %c0_40 = arith.constant 0 : index
    %c0_41 = arith.constant 0 : index
    %64 = vector.load %arg4[%c1_39, %c0_40, %c0_41] : memref<4x1x784xf32, #tpu.memory_space<vmem>>, vector<1x1x784xf32>
    %65 = vector.shape_cast %64 : vector<1x1x784xf32> to vector<1x784xf32>
    %66 = vector.broadcast %65 : vector<1x784xf32> to vector<8x784xf32>
    %67 = arith.addf %63, %66 : vector<8x784xf32>
    %68 = vector.extract_strided_slice %67 {offsets = [0, 0], sizes = [8, 392], strides = [1, 1]} : vector<8x784xf32> to vector<8x392xf32>
    %69 = math.tanh %68 : vector<8x392xf32>
    %cst_42 = arith.constant 5.000000e-01 : f32
    %70 = vector.broadcast %cst_42 : f32 to vector<8x392xf32>
    %71 = arith.mulf %69, %70 : vector<8x392xf32>
    %72 = vector.extract_strided_slice %67 {offsets = [0, 392], sizes = [8, 392], strides = [1, 1]} : vector<8x784xf32> to vector<8x392xf32>
    %cst_43 = arith.constant dense<0.000000e+00> : vector<8xf32>
    %73 = vector.multi_reduction <add>, %71, %cst_43 [1] : vector<8x392xf32> to vector<8xf32>
    %74 = vector.shape_cast %73 : vector<8xf32> to vector<8x1xf32>
    %75 = arith.addf %36, %74 : vector<8x1xf32>
    %76 = vector.extract_strided_slice %1 {offsets = [0, 0], sizes = [8, 196], strides = [1, 1]} : vector<8x392xf32> to vector<8x196xf32>
    %77 = vector.extract_strided_slice %1 {offsets = [0, 196], sizes = [8, 196], strides = [1, 1]} : vector<8x392xf32> to vector<8x196xf32>
    %78 = vector.extract_strided_slice %71 {offsets = [0, 0], sizes = [8, 196], strides = [1, 1]} : vector<8x392xf32> to vector<8x196xf32>
    %79 = math.exp %78 : vector<8x196xf32>
    %80 = arith.mulf %77, %79 : vector<8x196xf32>
    %81 = vector.extract_strided_slice %72 {offsets = [0, 0], sizes = [8, 196], strides = [1, 1]} : vector<8x392xf32> to vector<8x196xf32>
    %82 = arith.addf %80, %81 : vector<8x196xf32>
    %83 = tpu.concatenate %76, %82 in 1 : vector<8x196xf32>, vector<8x196xf32> -> vector<8x392xf32>
    %84 = vector.extract_strided_slice %39 {offsets = [0, 0], sizes = [8, 196], strides = [1, 1]} : vector<8x392xf32> to vector<8x196xf32>
    %85 = vector.extract_strided_slice %39 {offsets = [0, 196], sizes = [8, 196], strides = [1, 1]} : vector<8x392xf32> to vector<8x196xf32>
    %86 = vector.extract_strided_slice %71 {offsets = [0, 196], sizes = [8, 196], strides = [1, 1]} : vector<8x392xf32> to vector<8x196xf32>
    %87 = math.exp %86 : vector<8x196xf32>
    %88 = arith.mulf %85, %87 : vector<8x196xf32>
    %89 = vector.extract_strided_slice %72 {offsets = [0, 196], sizes = [8, 196], strides = [1, 1]} : vector<8x392xf32> to vector<8x196xf32>
    %90 = arith.addf %88, %89 : vector<8x196xf32>
    %91 = tpu.concatenate %84, %90 in 1 : vector<8x196xf32>, vector<8x196xf32> -> vector<8x392xf32>
    %c2 = arith.constant 2 : index
    %c0_44 = arith.constant 0 : index
    %c0_45 = arith.constant 0 : index
    %92 = vector.load %arg3[%c2, %c0_44, %c0_45] : memref<4x2x256xf32, #tpu.memory_space<vmem>>, vector<1x2x256xf32>
    %93 = vector.shape_cast %92 : vector<1x2x256xf32> to vector<2x256xf32>
    %c2_46 = arith.constant 2 : index
    %c0_47 = arith.constant 0 : index
    %c0_48 = arith.constant 0 : index
    %94 = vector.load %arg0[%c2_46, %c0_47, %c0_48] : memref<4x392x256xf32, #tpu.memory_space<vmem>>, vector<1x392x256xf32>
    %95 = vector.shape_cast %94 : vector<1x392x256xf32> to vector<392x256xf32>
    %cst_49 = arith.constant dense<0.000000e+00> : vector<8x256xf32>
    %96 = tpu.matmul %83, %95, %cst_49 {dimension_numbers = #tpu.dot_dimension_numbers<[1], [0], [0], [1], [0, 0, 1, 1], [], []>} : vector<8x392xf32>, vector<392x256xf32>, vector<8x256xf32> -> vector<8x256xf32>
    %97 = vector.extract_strided_slice %93 {offsets = [0, 0], sizes = [1, 256], strides = [1, 1]} : vector<2x256xf32> to vector<1x256xf32>
    %98 = vector.broadcast %97 : vector<1x256xf32> to vector<8x256xf32>
    %99 = arith.addf %96, %98 : vector<8x256xf32>
    %cst_50 = arith.constant 0.000000e+00 : f32
    %100 = vector.broadcast %cst_50 : f32 to vector<8x256xf32>
    %101 = arith.maximumf %99, %100 : vector<8x256xf32>
    %c2_51 = arith.constant 2 : index
    %c0_52 = arith.constant 0 : index
    %c0_53 = arith.constant 0 : index
    %102 = vector.load %arg1[%c2_51, %c0_52, %c0_53] : memref<4x256x256xf32, #tpu.memory_space<vmem>>, vector<1x256x256xf32>
    %103 = vector.shape_cast %102 : vector<1x256x256xf32> to vector<256x256xf32>
    %cst_54 = arith.constant dense<0.000000e+00> : vector<8x256xf32>
    %104 = tpu.matmul %101, %103, %cst_54 {dimension_numbers = #tpu.dot_dimension_numbers<[1], [0], [0], [1], [0, 0, 1, 1], [], []>} : vector<8x256xf32>, vector<256x256xf32>, vector<8x256xf32> -> vector<8x256xf32>
    %105 = vector.extract_strided_slice %93 {offsets = [1, 0], sizes = [1, 256], strides = [1, 1]} : vector<2x256xf32> to vector<1x256xf32>
    %106 = vector.broadcast %105 : vector<1x256xf32> to vector<8x256xf32>
    %107 = arith.addf %104, %106 : vector<8x256xf32>
    %cst_55 = arith.constant 0.000000e+00 : f32
    %108 = vector.broadcast %cst_55 : f32 to vector<8x256xf32>
    %109 = arith.maximumf %107, %108 : vector<8x256xf32>
    %c2_56 = arith.constant 2 : index
    %c0_57 = arith.constant 0 : index
    %c0_58 = arith.constant 0 : index
    %110 = vector.load %arg2[%c2_56, %c0_57, %c0_58] : memref<4x256x784xf32, #tpu.memory_space<vmem>>, vector<1x256x784xf32>
    %111 = vector.shape_cast %110 : vector<1x256x784xf32> to vector<256x784xf32>
    %cst_59 = arith.constant dense<0.000000e+00> : vector<8x784xf32>
    %112 = tpu.matmul %109, %111, %cst_59 {dimension_numbers = #tpu.dot_dimension_numbers<[1], [0], [0], [1], [0, 0, 1, 1], [], []>} : vector<8x256xf32>, vector<256x784xf32>, vector<8x784xf32> -> vector<8x784xf32>
    %c2_60 = arith.constant 2 : index
    %c0_61 = arith.constant 0 : index
    %c0_62 = arith.constant 0 : index
    %113 = vector.load %arg4[%c2_60, %c0_61, %c0_62] : memref<4x1x784xf32, #tpu.memory_space<vmem>>, vector<1x1x784xf32>
    %114 = vector.shape_cast %113 : vector<1x1x784xf32> to vector<1x784xf32>
    %115 = vector.broadcast %114 : vector<1x784xf32> to vector<8x784xf32>
    %116 = arith.addf %112, %115 : vector<8x784xf32>
    %117 = vector.extract_strided_slice %116 {offsets = [0, 0], sizes = [8, 392], strides = [1, 1]} : vector<8x784xf32> to vector<8x392xf32>
    %118 = math.tanh %117 : vector<8x392xf32>
    %cst_63 = arith.constant 5.000000e-01 : f32
    %119 = vector.broadcast %cst_63 : f32 to vector<8x392xf32>
    %120 = arith.mulf %118, %119 : vector<8x392xf32>
    %121 = vector.extract_strided_slice %116 {offsets = [0, 392], sizes = [8, 392], strides = [1, 1]} : vector<8x784xf32> to vector<8x392xf32>
    %cst_64 = arith.constant dense<0.000000e+00> : vector<8xf32>
    %122 = vector.multi_reduction <add>, %120, %cst_64 [1] : vector<8x392xf32> to vector<8xf32>
    %123 = vector.shape_cast %122 : vector<8xf32> to vector<8x1xf32>
    %124 = arith.addf %75, %123 : vector<8x1xf32>
    %125 = math.exp %120 : vector<8x392xf32>
    %126 = arith.mulf %91, %125 : vector<8x392xf32>
    %127 = arith.addf %126, %121 : vector<8x392xf32>
    %128 = vector.extract_strided_slice %83 {offsets = [0, 0], sizes = [8, 196], strides = [1, 1]} : vector<8x392xf32> to vector<8x196xf32>
    %129 = vector.extract_strided_slice %127 {offsets = [0, 0], sizes = [8, 196], strides = [1, 1]} : vector<8x392xf32> to vector<8x196xf32>
    %130 = tpu.concatenate %128, %129 in 1 : vector<8x196xf32>, vector<8x196xf32> -> vector<8x392xf32>
    %c3 = arith.constant 3 : index
    %c0_65 = arith.constant 0 : index
    %c0_66 = arith.constant 0 : index
    %131 = vector.load %arg3[%c3, %c0_65, %c0_66] : memref<4x2x256xf32, #tpu.memory_space<vmem>>, vector<1x2x256xf32>
    %132 = vector.shape_cast %131 : vector<1x2x256xf32> to vector<2x256xf32>
    %c3_67 = arith.constant 3 : index
    %c0_68 = arith.constant 0 : index
    %c0_69 = arith.constant 0 : index
    %133 = vector.load %arg0[%c3_67, %c0_68, %c0_69] : memref<4x392x256xf32, #tpu.memory_space<vmem>>, vector<1x392x256xf32>
    %134 = vector.shape_cast %133 : vector<1x392x256xf32> to vector<392x256xf32>
    %cst_70 = arith.constant dense<0.000000e+00> : vector<8x256xf32>
    %135 = tpu.matmul %130, %134, %cst_70 {dimension_numbers = #tpu.dot_dimension_numbers<[1], [0], [0], [1], [0, 0, 1, 1], [], []>} : vector<8x392xf32>, vector<392x256xf32>, vector<8x256xf32> -> vector<8x256xf32>
    %136 = vector.extract_strided_slice %132 {offsets = [0, 0], sizes = [1, 256], strides = [1, 1]} : vector<2x256xf32> to vector<1x256xf32>
    %137 = vector.broadcast %136 : vector<1x256xf32> to vector<8x256xf32>
    %138 = arith.addf %135, %137 : vector<8x256xf32>
    %cst_71 = arith.constant 0.000000e+00 : f32
    %139 = vector.broadcast %cst_71 : f32 to vector<8x256xf32>
    %140 = arith.maximumf %138, %139 : vector<8x256xf32>
    %c3_72 = arith.constant 3 : index
    %c0_73 = arith.constant 0 : index
    %c0_74 = arith.constant 0 : index
    %141 = vector.load %arg1[%c3_72, %c0_73, %c0_74] : memref<4x256x256xf32, #tpu.memory_space<vmem>>, vector<1x256x256xf32>
    %142 = vector.shape_cast %141 : vector<1x256x256xf32> to vector<256x256xf32>
    %cst_75 = arith.constant dense<0.000000e+00> : vector<8x256xf32>
    %143 = tpu.matmul %140, %142, %cst_75 {dimension_numbers = #tpu.dot_dimension_numbers<[1], [0], [0], [1], [0, 0, 1, 1], [], []>} : vector<8x256xf32>, vector<256x256xf32>, vector<8x256xf32> -> vector<8x256xf32>
    %144 = vector.extract_strided_slice %132 {offsets = [1, 0], sizes = [1, 256], strides = [1, 1]} : vector<2x256xf32> to vector<1x256xf32>
    %145 = vector.broadcast %144 : vector<1x256xf32> to vector<8x256xf32>
    %146 = arith.addf %143, %145 : vector<8x256xf32>
    %cst_76 = arith.constant 0.000000e+00 : f32
    %147 = vector.broadcast %cst_76 : f32 to vector<8x256xf32>
    %148 = arith.maximumf %146, %147 : vector<8x256xf32>
    %c3_77 = arith.constant 3 : index
    %c0_78 = arith.constant 0 : index
    %c0_79 = arith.constant 0 : index
    %149 = vector.load %arg2[%c3_77, %c0_78, %c0_79] : memref<4x256x784xf32, #tpu.memory_space<vmem>>, vector<1x256x784xf32>
    %150 = vector.shape_cast %149 : vector<1x256x784xf32> to vector<256x784xf32>
    %cst_80 = arith.constant dense<0.000000e+00> : vector<8x784xf32>
    %151 = tpu.matmul %148, %150, %cst_80 {dimension_numbers = #tpu.dot_dimension_numbers<[1], [0], [0], [1], [0, 0, 1, 1], [], []>} : vector<8x256xf32>, vector<256x784xf32>, vector<8x784xf32> -> vector<8x784xf32>
    %c3_81 = arith.constant 3 : index
    %c0_82 = arith.constant 0 : index
    %c0_83 = arith.constant 0 : index
    %152 = vector.load %arg4[%c3_81, %c0_82, %c0_83] : memref<4x1x784xf32, #tpu.memory_space<vmem>>, vector<1x1x784xf32>
    %153 = vector.shape_cast %152 : vector<1x1x784xf32> to vector<1x784xf32>
    %154 = vector.broadcast %153 : vector<1x784xf32> to vector<8x784xf32>
    %155 = arith.addf %151, %154 : vector<8x784xf32>
    %156 = vector.extract_strided_slice %155 {offsets = [0, 0], sizes = [8, 392], strides = [1, 1]} : vector<8x784xf32> to vector<8x392xf32>
    %157 = math.tanh %156 : vector<8x392xf32>
    %cst_84 = arith.constant 5.000000e-01 : f32
    %158 = vector.broadcast %cst_84 : f32 to vector<8x392xf32>
    %159 = arith.mulf %157, %158 : vector<8x392xf32>
    %160 = vector.extract_strided_slice %155 {offsets = [0, 392], sizes = [8, 392], strides = [1, 1]} : vector<8x784xf32> to vector<8x392xf32>
    %cst_85 = arith.constant dense<0.000000e+00> : vector<8xf32>
    %161 = vector.multi_reduction <add>, %159, %cst_85 [1] : vector<8x392xf32> to vector<8xf32>
    %162 = vector.shape_cast %161 : vector<8xf32> to vector<8x1xf32>
    %163 = arith.addf %124, %162 : vector<8x1xf32>
    %164 = vector.extract_strided_slice %83 {offsets = [0, 0], sizes = [8, 196], strides = [1, 1]} : vector<8x392xf32> to vector<8x196xf32>
    %165 = vector.extract_strided_slice %83 {offsets = [0, 196], sizes = [8, 196], strides = [1, 1]} : vector<8x392xf32> to vector<8x196xf32>
    %166 = vector.extract_strided_slice %159 {offsets = [0, 0], sizes = [8, 196], strides = [1, 1]} : vector<8x392xf32> to vector<8x196xf32>
    %167 = math.exp %166 : vector<8x196xf32>
    %168 = arith.mulf %165, %167 : vector<8x196xf32>
    %169 = vector.extract_strided_slice %160 {offsets = [0, 0], sizes = [8, 196], strides = [1, 1]} : vector<8x392xf32> to vector<8x196xf32>
    %170 = arith.addf %168, %169 : vector<8x196xf32>
    %171 = tpu.concatenate %164, %170 in 1 : vector<8x196xf32>, vector<8x196xf32> -> vector<8x392xf32>
    %172 = vector.extract_strided_slice %127 {offsets = [0, 0], sizes = [8, 196], strides = [1, 1]} : vector<8x392xf32> to vector<8x196xf32>
    %173 = vector.extract_strided_slice %127 {offsets = [0, 196], sizes = [8, 196], strides = [1, 1]} : vector<8x392xf32> to vector<8x196xf32>
    %174 = vector.extract_strided_slice %159 {offsets = [0, 196], sizes = [8, 196], strides = [1, 1]} : vector<8x392xf32> to vector<8x196xf32>
    %175 = math.exp %174 : vector<8x196xf32>
    %176 = arith.mulf %173, %175 : vector<8x196xf32>
    %177 = vector.extract_strided_slice %160 {offsets = [0, 196], sizes = [8, 196], strides = [1, 1]} : vector<8x392xf32> to vector<8x196xf32>
    %178 = arith.addf %176, %177 : vector<8x196xf32>
    %179 = tpu.concatenate %172, %178 in 1 : vector<8x196xf32>, vector<8x196xf32> -> vector<8x392xf32>
    %180 = tpu.concatenate %171, %179 in 1 : vector<8x392xf32>, vector<8x392xf32> -> vector<8x784xf32>
    %c0_86 = arith.constant 0 : index
    %c0_87 = arith.constant 0 : index
    %181 = vector.load %arg6[%c0_86, %c0_87] : memref<8x784xf32, #tpu.memory_space<vmem>>, vector<8x784xf32>
    tpu.vector_store %arg6[%c0_86, %c0_87], %180 {strides = array<i32>} : memref<8x784xf32, #tpu.memory_space<vmem>>, vector<8x784xf32>,
    %c0_88 = arith.constant 0 : index
    %c0_89 = arith.constant 0 : index
    %182 = vector.load %arg7[%c0_88, %c0_89] : memref<8x1xf32, #tpu.memory_space<vmem>>, vector<8x1xf32>
    tpu.vector_store %arg7[%c0_88, %c0_89], %163 {strides = array<i32>} : memref<8x1xf32, #tpu.memory_space<vmem>>, vector<8x1xf32>,
    return
  }
}

</mosaic_0001>

<llo_original>
// kernel: tpu_custom_call.1
$region0: #{tpu_custom_call.1}
  #allocation0 [shape = 'u32[]', space=smem, size = 0x4, offset = 0x4, fixed_abs, tag = 'smem constant byte address 0x4 - core index']
  #allocation1 [shape = 'u32[144,128]{1,0:T(1,128)}', space=vmem, size = 0x12000, scoped, tag = 'internal scratch']
  %s0 = inlined_call_operand.vmem [shape: f32[4,392,256], index: 0, kind: input, shape index: {}]
  %s1 = inlined_call_operand.vmem [shape: f32[4,256,256], index: 1, kind: input, shape index: {}]
  %s2 = inlined_call_operand.vmem [shape: f32[4,256,784], index: 2, kind: input, shape index: {}]
  %s3 = inlined_call_operand.vmem [shape: f32[4,2,256], index: 3, kind: input, shape index: {}]
  %s4 = inlined_call_operand.vmem [shape: f32[4,1,784], index: 4, kind: input, shape index: {}]
  %s5 = inlined_call_operand.vmem [shape: f32[8,784], index: 5, kind: input, shape index: {}]
  %s6 = inlined_call_operand.hbm [shape: f32[8,784], index: 6, kind: output, shape index: {0}]
  %s7 = inlined_call_operand.vmem [shape: f32[8,1], index: 7, kind: output, shape index: {1}]
  %8 = xla_tuple %s6, %s7
  %s9 = sld [smem:[#allocation0]]
  $region42: #{tpu_custom_call.1} parent=0
    _
  %s11 = ssub.s32 1, %s9
  %s12 = scalar_select 0, %s11, %s9
  $region1: #{tpu_custom_call.1} parent=0
    #allocation2 [shape = 'u8[28672]{0}', space=vmem, size = 0x7000, scoped, tag = 'output window, operand 0, single buffered']
    #allocation3 [shape = 's32[1]{0}', space=sflag, size = 0x4, scoped, tag = 'scoped memory for tpu_custom_call.1']
    %13 = vsyncpa [#allocation3], 0
    // Predicated region
    $region2: #{tpu_custom_call.1} parent=1 // pred_check
      _
    $region3: #{tpu_custom_call.1} parent=1 // pred_check_branch
      %15 = sbr.rel (0) target = $region5
    $region4: #{tpu_custom_call.1} parent=1 // pred_region
      _
    $region5: #{tpu_custom_call.1} parent=1 // pred_fallthru
      _
    // Predicated region
    $region6: #{tpu_custom_call.1} parent=1 // pred_check
      _
    $region7: #{tpu_custom_call.1} parent=1 // pred_check_branch
      %17 = sbr.rel (0) target = $region9
    $region8: #{tpu_custom_call.1} parent=1 // pred_region
      _
    $region9: #{tpu_custom_call.1} parent=1 // pred_fallthru
      _
    // Predicated region
    $region10: #{tpu_custom_call.1} parent=1 // pred_check
      _
    $region11: #{tpu_custom_call.1} parent=1 // pred_check_branch
      %19 = sbr.rel (0) target = $region13
    $region12: #{tpu_custom_call.1} parent=1 // pred_region
      _
    $region13: #{tpu_custom_call.1} parent=1 // pred_fallthru
      _
    // Predicated region
    $region14: #{tpu_custom_call.1} parent=1 // pred_check
      _
    $region15: #{tpu_custom_call.1} parent=1 // pred_check_branch
      %21 = sbr.rel (0) target = $region17
    $region16: #{tpu_custom_call.1} parent=1 // pred_region
      _
    $region17: #{tpu_custom_call.1} parent=1 // pred_fallthru
      _
    // Predicated region
    $region18: #{tpu_custom_call.1} parent=1 // pred_check
      _
    $region19: #{tpu_custom_call.1} parent=1 // pred_check_branch
      %23 = sbr.rel (0) target = $region21
    $region20: #{tpu_custom_call.1} parent=1 // pred_region
      _
    $region21: #{tpu_custom_call.1} parent=1 // pred_fallthru
      _
    // Predicated region
    $region22: #{tpu_custom_call.1} parent=1 // pred_check
      _
    $region23: #{tpu_custom_call.1} parent=1 // pred_check_branch
      %25 = sbr.rel (0) target = $region25
    $region24: #{tpu_custom_call.1} parent=1 // pred_region
      _
    $region25: #{tpu_custom_call.1} parent=1 // pred_fallthru
      _
    %v26 = vld [vmem:[%s5] sm:$0xff]
    %v27 = vld [vmem:[%s5 + $0x8] sm:$0xff]
    %v28 = vld [vmem:[%s5 + $0x10] sm:$0xff]
    %v29 = vld [vmem:[%s5 + $0x18] sm:$0xff]
    %v30 = vld [vmem:[%s5 + $0x20] sm:$0xff]
    %v31 = vld [vmem:[%s5 + $0x28] sm:$0xff]
    %v32 = vld [vmem:[%s5 + $0x30] sm:$0xff]
    %v33 = vld [vmem:[%s3] sm:$0xf]
    %v34 = vld [vmem:[%s0] sm:$0xff]
    %v35 = vld [vmem:[%s0 + $0x8] sm:$0xff]
    %v36 = vld [vmem:[%s0 + $0x10] sm:$0xff]
    %v37 = vld [vmem:[%s0 + $0x18] sm:$0xff]
    %v38 = vld [vmem:[%s0 + $0x20] sm:$0xff]
    %v39 = vld [vmem:[%s0 + $0x28] sm:$0xff]
    %v40 = vld [vmem:[%s0 + $0x30] sm:$0xff]
    %v41 = vld [vmem:[%s0 + $0x38] sm:$0xff]
    %v42 = vld [vmem:[%s0 + $0x40] sm:$0xff]
    %v43 = vld [vmem:[%s0 + $0x48] sm:$0xff]
    %v44 = vld [vmem:[%s0 + $0x50] sm:$0xff]
    %v45 = vld [vmem:[%s0 + $0x58] sm:$0xff]
    %v46 = vld [vmem:[%s0 + $0x60] sm:$0xff]
    %v47 = vld [vmem:[%s0 + $0x68] sm:$0xff]
    %v48 = vld [vmem:[%s0 + $0x70] sm:$0xff]
    %v49 = vld [vmem:[%s0 + $0x78] sm:$0xff]
    %v50 = vld [vmem:[%s0 + $0x80] sm:$0xff]
    %v51 = vld [vmem:[%s0 + $0x88] sm:$0xff]
    %v52 = vld [vmem:[%s0 + $0x90] sm:$0xff]
    %v53 = vld [vmem:[%s0 + $0x98] sm:$0xff]
    %v54 = vld [vmem:[%s0 + $0xa0] sm:$0xff]
    %v55 = vld [vmem:[%s0 + $0xa8] sm:$0xff]
    %v56 = vld [vmem:[%s0 + $0xb0] sm:$0xff]
    %v57 = vld [vmem:[%s0 + $0xb8] sm:$0xff]
    %v58 = vld [vmem:[%s0 + $0xc0] sm:$0xff]
    %v59 = vld [vmem:[%s0 + $0xc8] sm:$0xff]
    %v60 = vld [vmem:[%s0 + $0xd0] sm:$0xff]
    %v61 = vld [vmem:[%s0 + $0xd8] sm:$0xff]
    %v62 = vld [vmem:[%s0 + $0xe0] sm:$0xff]
    %v63 = vld [vmem:[%s0 + $0xe8] sm:$0xff]
    %v64 = vld [vmem:[%s0 + $0xf0] sm:$0xff]
    %v65 = vld [vmem:[%s0 + $0xf8] sm:$0xff]
    %v66 = vld [vmem:[%s0 + $0x100] sm:$0xff]
    %v67 = vld [vmem:[%s0 + $0x108] sm:$0xff]
    %v68 = vld [vmem:[%s0 + $0x110] sm:$0xff]
    %v69 = vld [vmem:[%s0 + $0x118] sm:$0xff]
    %v70 = vld [vmem:[%s0 + $0x120] sm:$0xff]
    %v71 = vld [vmem:[%s0 + $0x128] sm:$0xff]
    %v72 = vld [vmem:[%s0 + $0x130] sm:$0xff]
    %v73 = vld [vmem:[%s0 + $0x138] sm:$0xff]
    %v74 = vld [vmem:[%s0 + $0x140] sm:$0xff]
    %v75 = vld [vmem:[%s0 + $0x148] sm:$0xff]
    %v76 = vld [vmem:[%s0 + $0x150] sm:$0xff]
    %v77 = vld [vmem:[%s0 + $0x158] sm:$0xff]
    %v78 = vld [vmem:[%s0 + $0x160] sm:$0xff]
    %v79 = vld [vmem:[%s0 + $0x168] sm:$0xff]
    %v80 = vld [vmem:[%s0 + $0x170] sm:$0xff]
    %v81 = vld [vmem:[%s0 + $0x178] sm:$0xff]
    %v82 = vld [vmem:[%s0 + $0x180] sm:$0xff]
    %v83 = vld [vmem:[%s0 + $0x188] sm:$0xff]
    %v84 = vld [vmem:[%s0 + $0x190] sm:$0xff]
    %v85 = vld [vmem:[%s0 + $0x198] sm:$0xff]
    %v86 = vld [vmem:[%s0 + $0x1a0] sm:$0xff]
    %v87 = vld [vmem:[%s0 + $0x1a8] sm:$0xff]
    %v88 = vld [vmem:[%s0 + $0x1b0] sm:$0xff]
    %v89 = vld [vmem:[%s0 + $0x1b8] sm:$0xff]
    %v90 = vld [vmem:[%s0 + $0x1c0] sm:$0xff]
    %v91 = vld [vmem:[%s0 + $0x1c8] sm:$0xff]
    %v92 = vld [vmem:[%s0 + $0x1d0] sm:$0xff]
    %v93 = vld [vmem:[%s0 + $0x1d8] sm:$0xff]
    %v94 = vld [vmem:[%s0 + $0x1e0] sm:$0xff]
    %v95 = vld [vmem:[%s0 + $0x1e8] sm:$0xff]
    %v96 = vld [vmem:[%s0 + $0x1f0] sm:$0xff]
    %v97 = vld [vmem:[%s0 + $0x1f8] sm:$0xff]
    %v98 = vld [vmem:[%s0 + $0x200] sm:$0xff]
    %v99 = vld [vmem:[%s0 + $0x208] sm:$0xff]
    %v100 = vld [vmem:[%s0 + $0x210] sm:$0xff]
    %v101 = vld [vmem:[%s0 + $0x218] sm:$0xff]
    %v102 = vld [vmem:[%s0 + $0x220] sm:$0xff]
    %v103 = vld [vmem:[%s0 + $0x228] sm:$0xff]
    %v104 = vld [vmem:[%s0 + $0x230] sm:$0xff]
    %v105 = vld [vmem:[%s0 + $0x238] sm:$0xff]
    %v106 = vld [vmem:[%s0 + $0x240] sm:$0xff]
    %v107 = vld [vmem:[%s0 + $0x248] sm:$0xff]
    %v108 = vld [vmem:[%s0 + $0x250] sm:$0xff]
    %v109 = vld [vmem:[%s0 + $0x258] sm:$0xff]
    %v110 = vld [vmem:[%s0 + $0x260] sm:$0xff]
    %v111 = vld [vmem:[%s0 + $0x268] sm:$0xff]
    %v112 = vld [vmem:[%s0 + $0x270] sm:$0xff]
    %v113 = vld [vmem:[%s0 + $0x278] sm:$0xff]
    %v114 = vld [vmem:[%s0 + $0x280] sm:$0xff]
    %v115 = vld [vmem:[%s0 + $0x288] sm:$0xff]
    %v116 = vld [vmem:[%s0 + $0x290] sm:$0xff]
    %v117 = vld [vmem:[%s0 + $0x298] sm:$0xff]
    %v118 = vld [vmem:[%s0 + $0x2a0] sm:$0xff]
    %v119 = vld [vmem:[%s0 + $0x2a8] sm:$0xff]
    %v120 = vld [vmem:[%s0 + $0x2b0] sm:$0xff]
    %v121 = vld [vmem:[%s0 + $0x2b8] sm:$0xff]
    %v122 = vld [vmem:[%s0 + $0x2c0] sm:$0xff]
    %v123 = vld [vmem:[%s0 + $0x2c8] sm:$0xff]
    %v124 = vld [vmem:[%s0 + $0x2d0] sm:$0xff]
    %v125 = vld [vmem:[%s0 + $0x2d8] sm:$0xff]
    %v126 = vld [vmem:[%s0 + $0x2e0] sm:$0xff]
    %v127 = vld [vmem:[%s0 + $0x2e8] sm:$0xff]
    %v128 = vld [vmem:[%s0 + $0x2f0] sm:$0xff]
    %v129 = vld [vmem:[%s0 + $0x2f8] sm:$0xff]
    %v130 = vld [vmem:[%s0 + $0x300] sm:$0xff]
    %v131 = vld [vmem:[%s0 + $0x308] sm:$0xff]
    %v133 = vlaneseq
    %v134 = vshrl.u32 %v133, 7
    %v135 = vsub.s32 0, %v134
    %v136 = vrot.slane %v33, %v135
    %v137 = vlaneseq
    %v138 = vshrl.u32 %v137, 7
    %v139 = vsub.s32 2, %v138
    %v140 = vrot.slane %v33, %v139
    %v143 = vlaneseq
    %v144 = vshrl.u32 %v143, 7
    %v145 = vsub.s32 0, %v144
    %v146 = vrot.slane %v136, %v145
    %v147 = vlaneseq
    %v148 = vshrl.u32 %v147, 7
    %v149 = vsub.s32 0, %v148
    %v150 = vrot.slane %v140, %v149
    %vm151 = vcmask 64512
    %v153 = vsel %vm151, %v29, 0
    %155 = vmatprep.subr.mxu0 %v65
    %156 = vmatpush1.msra.mxu0 %v64
    %157 = vmatprep.subr.mxu0 %v63
    %158 = vmatpush1.msra.mxu0 %v62
    %159 = vmatprep.subr.mxu0 %v61
    %160 = vmatpush1.msra.mxu0 %v60
    %161 = vmatprep.subr.mxu0 %v59
    %162 = vmatpush1.msra.mxu0 %v58
    %163 = vmatprep.subr.mxu0 %v57
    %164 = vmatpush1.msra.mxu0 %v56
    %165 = vmatprep.subr.mxu0 %v55
    %166 = vmatpush1.msra.mxu0 %v54
    %167 = vmatprep.subr.mxu0 %v53
    %168 = vmatpush1.msra.mxu0 %v52
    %169 = vmatprep.subr.mxu0 %v51
    %170 = vmatpush1.msra.mxu0 %v50
    %171 = vmatprep.subr.mxu0 %v49
    %172 = vmatpush1.msra.mxu0 %v48
    %173 = vmatprep.subr.mxu0 %v47
    %174 = vmatpush1.msra.mxu0 %v46
    %175 = vmatprep.subr.mxu0 %v45
    %176 = vmatpush1.msra.mxu0 %v44
    %177 = vmatprep.subr.mxu0 %v43
    %178 = vmatpush1.msra.mxu0 %v42
    %179 = vmatprep.subr.mxu0 %v41
    %180 = vmatpush1.msra.mxu0 %v40
    %181 = vmatprep.subr.mxu0 %v39
    %182 = vmatpush1.msra.mxu0 %v38
    %183 = vmatprep.subr.mxu0 %v37
    %184 = vmatpush1.msra.mxu0 %v36
    %185 = vmatprep.subr.mxu0 %v35
    %186 = vmatpush1.msra.mxu0 %v34
    %187 = vmatprep.subr.mxu0 %v97
    %188 = vmatpush2.msra.mxu0 %v96
    %189 = vmatprep.subr.mxu0 %v95
    %190 = vmatpush2.msra.mxu0 %v94
    %191 = vmatprep.subr.mxu0 %v93
    %192 = vmatpush2.msra.mxu0 %v92
    %193 = vmatprep.subr.mxu0 %v91
    %194 = vmatpush2.msra.mxu0 %v90
    %195 = vmatprep.subr.mxu0 %v89
    %196 = vmatpush2.msra.mxu0 %v88
    %197 = vmatprep.subr.mxu0 %v87
    %198 = vmatpush2.msra.mxu0 %v86
    %199 = vmatprep.subr.mxu0 %v85
    %200 = vmatpush2.msra.mxu0 %v84
    %201 = vmatprep.subr.mxu0 %v83
    %202 = vmatpush2.msra.mxu0 %v82
    %203 = vmatprep.subr.mxu0 %v81
    %204 = vmatpush2.msra.mxu0 %v80
    %205 = vmatprep.subr.mxu0 %v79
    %206 = vmatpush2.msra.mxu0 %v78
    %207 = vmatprep.subr.mxu0 %v77
    %208 = vmatpush2.msra.mxu0 %v76
    %209 = vmatprep.subr.mxu0 %v75
    %210 = vmatpush2.msra.mxu0 %v74
    %211 = vmatprep.subr.mxu0 %v73
    %212 = vmatpush2.msra.mxu0 %v72
    %213 = vmatprep.subr.mxu0 %v71
    %214 = vmatpush2.msra.mxu0 %v70
    %215 = vmatprep.subr.mxu0 %v69
    %216 = vmatpush2.msra.mxu0 %v68
    %217 = vmatprep.subr.mxu0 %v67
    %218 = vmatpush2.msra.mxu0 %v66
    %219 = vmatprep.mubr.f32.mxu0 %v27
    %220 = vmatmul.mubr.f32.gmra.mxu0 %v26
    %v221 = vpop.f32.mrf.mxu0
    %v222 = vadd.f32 %v146, %v221
    %v223 = vpop.f32.mrf.mxu0
    %v224 = vadd.f32 %v150, %v223
    %225 = vdwg.mxu0
    %226 = vmatprep.subr.mxu0 %v129
    %227 = vmatpush1.msra.mxu0 %v128
    %228 = vmatprep.subr.mxu0 %v127
    %229 = vmatpush1.msra.mxu0 %v126
    %230 = vmatprep.subr.mxu0 %v125
    %231 = vmatpush1.msra.mxu0 %v124
    %232 = vmatprep.subr.mxu0 %v123
    %233 = vmatpush1.msra.mxu0 %v122
    %234 = vmatprep.subr.mxu0 %v121
    %235 = vmatpush1.msra.mxu0 %v120
    %236 = vmatprep.subr.mxu0 %v119
    %237 = vmatpush1.msra.mxu0 %v118
    %238 = vmatprep.subr.mxu0 %v117
    %239 = vmatpush1.msra.mxu0 %v116
    %240 = vmatprep.subr.mxu0 %v115
    %241 = vmatpush1.msra.mxu0 %v114
    %242 = vmatprep.subr.mxu0 %v113
    %243 = vmatpush1.msra.mxu0 %v112
    %244 = vmatprep.subr.mxu0 %v111
    %245 = vmatpush1.msra.mxu0 %v110
    %246 = vmatprep.subr.mxu0 %v109
    %247 = vmatpush1.msra.mxu0 %v108
    %248 = vmatprep.subr.mxu0 %v107
    %249 = vmatpush1.msra.mxu0 %v106
    %250 = vmatprep.subr.mxu0 %v105
    %251 = vmatpush1.msra.mxu0 %v104
    %252 = vmatprep.subr.mxu0 %v103
    %253 = vmatpush1.msra.mxu0 %v102
    %254 = vmatprep.subr.mxu0 %v101
    %255 = vmatpush1.msra.mxu0 %v100
    %256 = vmatprep.subr.mxu0 %v99
    %257 = vmatpush1.msra.mxu0 %v98
    %258 = vmatprep.subr.mxu0 0.0
    %259 = vmatpush2.msra.mxu0 0.0
    %260 = vmatprep.subr.mxu0 0.0
    %261 = vmatpush2.msra.mxu0 0.0
    %262 = vmatprep.subr.mxu0 0.0
    %263 = vmatpush2.msra.mxu0 0.0
    %264 = vmatprep.subr.mxu0 0.0
    %265 = vmatpush2.msra.mxu0 0.0
    %266 = vmatprep.subr.mxu0 0.0
    %267 = vmatpush2.msra.mxu0 0.0
    %268 = vmatprep.subr.mxu0 0.0
    %269 = vmatpush2.msra.mxu0 0.0
    %270 = vmatprep.subr.mxu0 0.0
    %271 = vmatpush2.msra.mxu0 0.0
    %272 = vmatprep.subr.mxu0 0.0
    %273 = vmatpush2.msra.mxu0 0.0
    %274 = vmatprep.subr.mxu0 0.0
    %275 = vmatpush2.msra.mxu0 0.0
    %276 = vmatprep.subr.mxu0 0.0
    %277 = vmatpush2.msra.mxu0 0.0
    %278 = vmatprep.subr.mxu0 0.0
    %279 = vmatpush2.msra.mxu0 0.0
    %280 = vmatprep.subr.mxu0 0.0
    %281 = vmatpush2.msra.mxu0 0.0
    %282 = vmatprep.subr.mxu0 0.0
    %283 = vmatpush2.msra.mxu0 0.0
    %284 = vmatprep.subr.mxu0 0.0
    %285 = vmatpush2.msra.mxu0 0.0
    %286 = vmatprep.subr.mxu0 0.0
    %287 = vmatpush2.msra.mxu0 0.0
    %288 = vmatprep.subr.mxu0 %v131
    %289 = vmatpush2.msra.mxu0 %v130
    %290 = vmatprep.mubr.f32.mxu0 %v153
    %291 = vmatmul.mubr.f32.gmra.mxu0 %v28
    %v292 = vpop.f32.mrf.mxu0
    %v293 = vadd.f32 %v222, %v292
    %v294 = vpop.f32.mrf.mxu0
    %v295 = vadd.f32 %v224, %v294
    %296 = vdwg.mxu0
    %v297 = vmax.f32 %v293, 0.0
    %v298 = vmax.f32 %v295, 0.0
    %v299 = vld [vmem:[%s1] sm:$0xff]
    %v300 = vld [vmem:[%s1 + $0x8] sm:$0xff]
    %v301 = vld [vmem:[%s1 + $0x10] sm:$0xff]
    %v302 = vld [vmem:[%s1 + $0x18] sm:$0xff]
    %v303 = vld [vmem:[%s1 + $0x20] sm:$0xff]
    %v304 = vld [vmem:[%s1 + $0x28] sm:$0xff]
    %v305 = vld [vmem:[%s1 + $0x30] sm:$0xff]
    %v306 = vld [vmem:[%s1 + $0x38] sm:$0xff]
    %v307 = vld [vmem:[%s1 + $0x40] sm:$0xff]
    %v308 = vld [vmem:[%s1 + $0x48] sm:$0xff]
    %v309 = vld [vmem:[%s1 + $0x50] sm:$0xff]
    %v310 = vld [vmem:[%s1 + $0x58] sm:$0xff]
    %v311 = vld [vmem:[%s1 + $0x60] sm:$0xff]
    %v312 = vld [vmem:[%s1 + $0x68] sm:$0xff]
    %v313 = vld [vmem:[%s1 + $0x70] sm:$0xff]
    %v314 = vld [vmem:[%s1 + $0x78] sm:$0xff]
    %v315 = vld [vmem:[%s1 + $0x80] sm:$0xff]
    %v316 = vld [vmem:[%s1 + $0x88] sm:$0xff]
    %v317 = vld [vmem:[%s1 + $0x90] sm:$0xff]
    %v318 = vld [vmem:[%s1 + $0x98] sm:$0xff]
    %v319 = vld [vmem:[%s1 + $0xa0] sm:$0xff]
    %v320 = vld [vmem:[%s1 + $0xa8] sm:$0xff]
    %v321 = vld [vmem:[%s1 + $0xb0] sm:$0xff]
    %v322 = vld [vmem:[%s1 + $0xb8] sm:$0xff]
    %v323 = vld [vmem:[%s1 + $0xc0] sm:$0xff]
    %v324 = vld [vmem:[%s1 + $0xc8] sm:$0xff]
    %v325 = vld [vmem:[%s1 + $0xd0] sm:$0xff]
    %v326 = vld [vmem:[%s1 + $0xd8] sm:$0xff]
    %v327 = vld [vmem:[%s1 + $0xe0] sm:$0xff]
    %v328 = vld [vmem:[%s1 + $0xe8] sm:$0xff]
    %v329 = vld [vmem:[%s1 + $0xf0] sm:$0xff]
    %v330 = vld [vmem:[%s1 + $0xf8] sm:$0xff]
    %v331 = vld [vmem:[%s1 + $0x100] sm:$0xff]
    %v332 = vld [vmem:[%s1 + $0x108] sm:$0xff]
    %v333 = vld [vmem:[%s1 + $0x110] sm:$0xff]
    %v334 = vld [vmem:[%s1 + $0x118] sm:$0xff]
    %v335 = vld [vmem:[%s1 + $0x120] sm:$0xff]
    %v336 = vld [vmem:[%s1 + $0x128] sm:$0xff]
    %v337 = vld [vmem:[%s1 + $0x130] sm:$0xff]
    %v338 = vld [vmem:[%s1 + $0x138] sm:$0xff]
    %v339 = vld [vmem:[%s1 + $0x140] sm:$0xff]
    %v340 = vld [vmem:[%s1 + $0x148] sm:$0xff]
    %v341 = vld [vmem:[%s1 + $0x150] sm:$0xff]
    %v342 = vld [vmem:[%s1 + $0x158] sm:$0xff]
    %v343 = vld [vmem:[%s1 + $0x160] sm:$0xff]
    %v344 = vld [vmem:[%s1 + $0x168] sm:$0xff]
    %v345 = vld [vmem:[%s1 + $0x170] sm:$0xff]
    %v346 = vld [vmem:[%s1 + $0x178] sm:$0xff]
    %v347 = vld [vmem:[%s1 + $0x180] sm:$0xff]
    %v348 = vld [vmem:[%s1 + $0x188] sm:$0xff]
    %v349 = vld [vmem:[%s1 + $0x190] sm:$0xff]
    %v350 = vld [vmem:[%s1 + $0x198] sm:$0xff]
    %v351 = vld [vmem:[%s1 + $0x1a0] sm:$0xff]
    %v352 = vld [vmem:[%s1 + $0x1a8] sm:$0xff]
    %v353 = vld [vmem:[%s1 + $0x1b0] sm:$0xff]
    %v354 = vld [vmem:[%s1 + $0x1b8] sm:$0xff]
    %v355 = vld [vmem:[%s1 + $0x1c0] sm:$0xff]
    %v356 = vld [vmem:[%s1 + $0x1c8] sm:$0xff]
    %v357 = vld [vmem:[%s1 + $0x1d0] sm:$0xff]
    %v358 = vld [vmem:[%s1 + $0x1d8] sm:$0xff]
    %v359 = vld [vmem:[%s1 + $0x1e0] sm:$0xff]
    %v360 = vld [vmem:[%s1 + $0x1e8] sm:$0xff]
    %v361 = vld [vmem:[%s1 + $0x1f0] sm:$0xff]
    %v362 = vld [vmem:[%s1 + $0x1f8] sm:$0xff]
    %v363 = vlaneseq
    %v364 = vshrl.u32 %v363, 7
    %v365 = vsub.s32 1, %v364
    %v366 = vrot.slane %v33, %v365
    %v367 = vlaneseq
    %v368 = vshrl.u32 %v367, 7
    %v369 = vsub.s32 3, %v368
    %v370 = vrot.slane %v33, %v369
    %v373 = vlaneseq
    %v374 = vshrl.u32 %v373, 7
    %v375 = vsub.s32 1, %v374
    %v376 = vrot.slane %v366, %v375
    %v377 = vlaneseq
    %v378 = vshrl.u32 %v377, 7
    %v379 = vsub.s32 1, %v378
    %v380 = vrot.slane %v370, %v379
    %381 = vmatprep.subr.mxu0 %v330
    %382 = vmatpush1.msra.mxu0 %v329
    %383 = vmatprep.subr.mxu0 %v328
    %384 = vmatpush1.msra.mxu0 %v327
    %385 = vmatprep.subr.mxu0 %v326
    %386 = vmatpush1.msra.mxu0 %v325
    %387 = vmatprep.subr.mxu0 %v324
    %388 = vmatpush1.msra.mxu0 %v323
    %389 = vmatprep.subr.mxu0 %v322
    %390 = vmatpush1.msra.mxu0 %v321
    %391 = vmatprep.subr.mxu0 %v320
    %392 = vmatpush1.msra.mxu0 %v319
    %393 = vmatprep.subr.mxu0 %v318
    %394 = vmatpush1.msra.mxu0 %v317
    %395 = vmatprep.subr.mxu0 %v316
    %396 = vmatpush1.msra.mxu0 %v315
    %397 = vmatprep.subr.mxu0 %v314
    %398 = vmatpush1.msra.mxu0 %v313
    %399 = vmatprep.subr.mxu0 %v312
    %400 = vmatpush1.msra.mxu0 %v311
    %401 = vmatprep.subr.mxu0 %v310
    %402 = vmatpush1.msra.mxu0 %v309
    %403 = vmatprep.subr.mxu0 %v308
    %404 = vmatpush1.msra.mxu0 %v307
    %405 = vmatprep.subr.mxu0 %v306
    %406 = vmatpush1.msra.mxu0 %v305
    %407 = vmatprep.subr.mxu0 %v304
    %408 = vmatpush1.msra.mxu0 %v303
    %409 = vmatprep.subr.mxu0 %v302
    %410 = vmatpush1.msra.mxu0 %v301
    %411 = vmatprep.subr.mxu0 %v300
    %412 = vmatpush1.msra.mxu0 %v299
    %413 = vmatprep.subr.mxu0 %v362
    %414 = vmatpush2.msra.mxu0 %v361
    %415 = vmatprep.subr.mxu0 %v360
    %416 = vmatpush2.msra.mxu0 %v359
    %417 = vmatprep.subr.mxu0 %v358
    %418 = vmatpush2.msra.mxu0 %v357
    %419 = vmatprep.subr.mxu0 %v356
    %420 = vmatpush2.msra.mxu0 %v355
    %421 = vmatprep.subr.mxu0 %v354
    %422 = vmatpush2.msra.mxu0 %v353
    %423 = vmatprep.subr.mxu0 %v352
    %424 = vmatpush2.msra.mxu0 %v351
    %425 = vmatprep.subr.mxu0 %v350
    %426 = vmatpush2.msra.mxu0 %v349
    %427 = vmatprep.subr.mxu0 %v348
    %428 = vmatpush2.msra.mxu0 %v347
    %429 = vmatprep.subr.mxu0 %v346
    %430 = vmatpush2.msra.mxu0 %v345
    %431 = vmatprep.subr.mxu0 %v344
    %432 = vmatpush2.msra.mxu0 %v343
    %433 = vmatprep.subr.mxu0 %v342
    %434 = vmatpush2.msra.mxu0 %v341
    %435 = vmatprep.subr.mxu0 %v340
    %436 = vmatpush2.msra.mxu0 %v339
    %437 = vmatprep.subr.mxu0 %v338
    %438 = vmatpush2.msra.mxu0 %v337
    %439 = vmatprep.subr.mxu0 %v336
    %440 = vmatpush2.msra.mxu0 %v335
    %441 = vmatprep.subr.mxu0 %v334
    %442 = vmatpush2.msra.mxu0 %v333
    %443 = vmatprep.subr.mxu0 %v332
    %444 = vmatpush2.msra.mxu0 %v331
    %445 = vmatprep.mubr.f32.mxu0 %v298
    %446 = vmatmul.mubr.f32.gmra.mxu0 %v297
    %v447 = vpop.f32.mrf.mxu0
    %v448 = vadd.f32 %v376, %v447
    %v449 = vpop.f32.mrf.mxu0
    %v450 = vadd.f32 %v380, %v449
    %451 = vdwg.mxu0
    %v452 = vmax.f32 %v448, 0.0
    %v453 = vmax.f32 %v450, 0.0
    %v454 = vld [vmem:[%s2] sm:$0xff]
    %v455 = vld [vmem:[%s2 + $0x8] sm:$0xff]
    %v456 = vld [vmem:[%s2 + $0x10] sm:$0xff]
    %v457 = vld [vmem:[%s2 + $0x18] sm:$0xff]
    %v458 = vld [vmem:[%s2 + $0x20] sm:$0xff]
    %v459 = vld [vmem:[%s2 + $0x28] sm:$0xff]
    %v460 = vld [vmem:[%s2 + $0x30] sm:$0xff]
    %v461 = vld [vmem:[%s2 + $0x38] sm:$0xff]
    %v462 = vld [vmem:[%s2 + $0x40] sm:$0xff]
    %v463 = vld [vmem:[%s2 + $0x48] sm:$0xff]
    %v464 = vld [vmem:[%s2 + $0x50] sm:$0xff]
    %v465 = vld [vmem:[%s2 + $0x58] sm:$0xff]
    %v466 = vld [vmem:[%s2 + $0x60] sm:$0xff]
    %v467 = vld [vmem:[%s2 + $0x68] sm:$0xff]
    %v468 = vld [vmem:[%s2 + $0x70] sm:$0xff]
    %v469 = vld [vmem:[%s2 + $0x78] sm:$0xff]
    %v470 = vld [vmem:[%s2 + $0x80] sm:$0xff]
    %v471 = vld [vmem:[%s2 + $0x88] sm:$0xff]
    %v472 = vld [vmem:[%s2 + $0x90] sm:$0xff]
    %v473 = vld [vmem:[%s2 + $0x98] sm:$0xff]
    %v474 = vld [vmem:[%s2 + $0xa0] sm:$0xff]
    %v475 = vld [vmem:[%s2 + $0xa8] sm:$0xff]
    %v476 = vld [vmem:[%s2 + $0xb0] sm:$0xff]
    %v477 = vld [vmem:[%s2 + $0xb8] sm:$0xff]
    %v478 = vld [vmem:[%s2 + $0xc0] sm:$0xff]
    %v479 = vld [vmem:[%s2 + $0xc8] sm:$0xff]
    %v480 = vld [vmem:[%s2 + $0xd0] sm:$0xff]
    %v481 = vld [vmem:[%s2 + $0xd8] sm:$0xff]
    %v482 = vld [vmem:[%s2 + $0xe0] sm:$0xff]
    %v483 = vld [vmem:[%s2 + $0xe8] sm:$0xff]
    %v484 = vld [vmem:[%s2 + $0xf0] sm:$0xff]
    %v485 = vld [vmem:[%s2 + $0xf8] sm:$0xff]
    %v486 = vld [vmem:[%s2 + $0x100] sm:$0xff]
    %v487 = vld [vmem:[%s2 + $0x108] sm:$0xff]
    %v488 = vld [vmem:[%s2 + $0x110] sm:$0xff]
    %v489 = vld [vmem:[%s2 + $0x118] sm:$0xff]
    %v490 = vld [vmem:[%s2 + $0x120] sm:$0xff]
    %v491 = vld [vmem:[%s2 + $0x128] sm:$0xff]
    %v492 = vld [vmem:[%s2 + $0x130] sm:$0xff]
    %v493 = vld [vmem:[%s2 + $0x138] sm:$0xff]
    %v494 = vld [vmem:[%s2 + $0x140] sm:$0xff]
    %v495 = vld [vmem:[%s2 + $0x148] sm:$0xff]
    %v496 = vld [vmem:[%s2 + $0x150] sm:$0xff]
    %v497 = vld [vmem:[%s2 + $0x158] sm:$0xff]
    %v498 = vld [vmem:[%s2 + $0x160] sm:$0xff]
    %v499 = vld [vmem:[%s2 + $0x168] sm:$0xff]
    %v500 = vld [vmem:[%s2 + $0x170] sm:$0xff]
    %v501 = vld [vmem:[%s2 + $0x178] sm:$0xff]
    %v502 = vld [vmem:[%s2 + $0x180] sm:$0xff]
    %v503 = vld [vmem:[%s2 + $0x188] sm:$0xff]
    %v504 = vld [vmem:[%s2 + $0x190] sm:$0xff]
    %v505 = vld [vmem:[%s2 + $0x198] sm:$0xff]
    %v506 = vld [vmem:[%s2 + $0x1a0] sm:$0xff]
    %v507 = vld [vmem:[%s2 + $0x1a8] sm:$0xff]
    %v508 = vld [vmem:[%s2 + $0x1b0] sm:$0xff]
    %v509 = vld [vmem:[%s2 + $0x1b8] sm:$0xff]
    %v510 = vld [vmem:[%s2 + $0x1c0] sm:$0xff]
    %v511 = vld [vmem:[%s2 + $0x1c8] sm:$0xff]
    %v512 = vld [vmem:[%s2 + $0x1d0] sm:$0xff]
    %v513 = vld [vmem:[%s2 + $0x1d8] sm:$0xff]
    %v514 = vld [vmem:[%s2 + $0x1e0] sm:$0xff]
    %v515 = vld [vmem:[%s2 + $0x1e8] sm:$0xff]
    %v516 = vld [vmem:[%s2 + $0x1f0] sm:$0xff]
    %v517 = vld [vmem:[%s2 + $0x1f8] sm:$0xff]
    %v518 = vld [vmem:[%s2 + $0x200] sm:$0xff]
    %v519 = vld [vmem:[%s2 + $0x208] sm:$0xff]
    %v520 = vld [vmem:[%s2 + $0x210] sm:$0xff]
    %v521 = vld [vmem:[%s2 + $0x218] sm:$0xff]
    %v522 = vld [vmem:[%s2 + $0x220] sm:$0xff]
    %v523 = vld [vmem:[%s2 + $0x228] sm:$0xff]
    %v524 = vld [vmem:[%s2 + $0x230] sm:$0xff]
    %v525 = vld [vmem:[%s2 + $0x238] sm:$0xff]
    %v526 = vld [vmem:[%s2 + $0x240] sm:$0xff]
    %v527 = vld [vmem:[%s2 + $0x248] sm:$0xff]
    %v528 = vld [vmem:[%s2 + $0x250] sm:$0xff]
    %v529 = vld [vmem:[%s2 + $0x258] sm:$0xff]
    %v530 = vld [vmem:[%s2 + $0x260] sm:$0xff]
    %v531 = vld [vmem:[%s2 + $0x268] sm:$0xff]
    %v532 = vld [vmem:[%s2 + $0x270] sm:$0xff]
    %v533 = vld [vmem:[%s2 + $0x278] sm:$0xff]
    %v534 = vld [vmem:[%s2 + $0x280] sm:$0xff]
    %v535 = vld [vmem:[%s2 + $0x288] sm:$0xff]
    %v536 = vld [vmem:[%s2 + $0x290] sm:$0xff]
    %v537 = vld [vmem:[%s2 + $0x298] sm:$0xff]
    %v538 = vld [vmem:[%s2 + $0x2a0] sm:$0xff]
    %v539 = vld [vmem:[%s2 + $0x2a8] sm:$0xff]
    %v540 = vld [vmem:[%s2 + $0x2b0] sm:$0xff]
    %v541 = vld [vmem:[%s2 + $0x2b8] sm:$0xff]
    %v542 = vld [vmem:[%s2 + $0x2c0] sm:$0xff]
    %v543 = vld [vmem:[%s2 + $0x2c8] sm:$0xff]
    %v544 = vld [vmem:[%s2 + $0x2d0] sm:$0xff]
    %v545 = vld [vmem:[%s2 + $0x2d8] sm:$0xff]
    %v546 = vld [vmem:[%s2 + $0x2e0] sm:$0xff]
    %v547 = vld [vmem:[%s2 + $0x2e8] sm:$0xff]
    %v548 = vld [vmem:[%s2 + $0x2f0] sm:$0xff]
    %v549 = vld [vmem:[%s2 + $0x2f8] sm:$0xff]
    %v550 = vld [vmem:[%s2 + $0x300] sm:$0xff]
    %v551 = vld [vmem:[%s2 + $0x308] sm:$0xff]
    %v552 = vld [vmem:[%s2 + $0x310] sm:$0xff]
    %v553 = vld [vmem:[%s2 + $0x318] sm:$0xff]
    %v554 = vld [vmem:[%s2 + $0x320] sm:$0xff]
    %v555 = vld [vmem:[%s2 + $0x328] sm:$0xff]
    %v556 = vld [vmem:[%s2 + $0x330] sm:$0xff]
    %v557 = vld [vmem:[%s2 + $0x338] sm:$0xff]
    %v558 = vld [vmem:[%s2 + $0x340] sm:$0xff]
    %v559 = vld [vmem:[%s2 + $0x348] sm:$0xff]
    %v560 = vld [vmem:[%s2 + $0x350] sm:$0xff]
    %v561 = vld [vmem:[%s2 + $0x358] sm:$0xff]
    %v562 = vld [vmem:[%s2 + $0x360] sm:$0xff]
    %v563 = vld [vmem:[%s2 + $0x368] sm:$0xff]
    %v564 = vld [vmem:[%s2 + $0x370] sm:$0xff]
    %v565 = vld [vmem:[%s2 + $0x378] sm:$0xff]
    %v566 = vld [vmem:[%s2 + $0x380] sm:$0xff]
    %v567 = vld [vmem:[%s2 + $0x388] sm:$0xff]
    %v568 = vld [vmem:[%s2 + $0x390] sm:$0xff]
    %v569 = vld [vmem:[%s2 + $0x398] sm:$0xff]
    %v570 = vld [vmem:[%s2 + $0x3a0] sm:$0xff]
    %v571 = vld [vmem:[%s2 + $0x3a8] sm:$0xff]
    %v572 = vld [vmem:[%s2 + $0x3b0] sm:$0xff]
    %v573 = vld [vmem:[%s2 + $0x3b8] sm:$0xff]
    %v574 = vld [vmem:[%s2 + $0x3c0] sm:$0xff]
    %v575 = vld [vmem:[%s2 + $0x3c8] sm:$0xff]
    %v576 = vld [vmem:[%s2 + $0x3d0] sm:$0xff]
    %v577 = vld [vmem:[%s2 + $0x3d8] sm:$0xff]
    %v578 = vld [vmem:[%s2 + $0x3e0] sm:$0xff]
    %v579 = vld [vmem:[%s2 + $0x3e8] sm:$0xff]
    %v580 = vld [vmem:[%s2 + $0x3f0] sm:$0xff]
    %v581 = vld [vmem:[%s2 + $0x3f8] sm:$0xff]
    %v582 = vld [vmem:[%s2 + $0x400] sm:$0xff]
    %v583 = vld [vmem:[%s2 + $0x408] sm:$0xff]
    %v584 = vld [vmem:[%s2 + $0x410] sm:$0xff]
    %v585 = vld [vmem:[%s2 + $0x418] sm:$0xff]
    %v586 = vld [vmem:[%s2 + $0x420] sm:$0xff]
    %v587 = vld [vmem:[%s2 + $0x428] sm:$0xff]
    %v588 = vld [vmem:[%s2 + $0x430] sm:$0xff]
    %v589 = vld [vmem:[%s2 + $0x438] sm:$0xff]
    %v590 = vld [vmem:[%s2 + $0x440] sm:$0xff]
    %v591 = vld [vmem:[%s2 + $0x448] sm:$0xff]
    %v592 = vld [vmem:[%s2 + $0x450] sm:$0xff]
    %v593 = vld [vmem:[%s2 + $0x458] sm:$0xff]
    %v594 = vld [vmem:[%s2 + $0x460] sm:$0xff]
    %v595 = vld [vmem:[%s2 + $0x468] sm:$0xff]
    %v596 = vld [vmem:[%s2 + $0x470] sm:$0xff]
    %v597 = vld [vmem:[%s2 + $0x478] sm:$0xff]
    %v598 = vld [vmem:[%s2 + $0x480] sm:$0xff]
    %v599 = vld [vmem:[%s2 + $0x488] sm:$0xff]
    %v600 = vld [vmem:[%s2 + $0x490] sm:$0xff]
    %v601 = vld [vmem:[%s2 + $0x498] sm:$0xff]
    %v602 = vld [vmem:[%s2 + $0x4a0] sm:$0xff]
    %v603 = vld [vmem:[%s2 + $0x4a8] sm:$0xff]
    %v604 = vld [vmem:[%s2 + $0x4b0] sm:$0xff]
    %v605 = vld [vmem:[%s2 + $0x4b8] sm:$0xff]
    %v606 = vld [vmem:[%s2 + $0x4c0] sm:$0xff]
    %v607 = vld [vmem:[%s2 + $0x4c8] sm:$0xff]
    %v608 = vld [vmem:[%s2 + $0x4d0] sm:$0xff]
    %v609 = vld [vmem:[%s2 + $0x4d8] sm:$0xff]
    %v610 = vld [vmem:[%s2 + $0x4e0] sm:$0xff]
    %v611 = vld [vmem:[%s2 + $0x4e8] sm:$0xff]
    %v612 = vld [vmem:[%s2 + $0x4f0] sm:$0xff]
    %v613 = vld [vmem:[%s2 + $0x4f8] sm:$0xff]
    %v614 = vld [vmem:[%s2 + $0x500] sm:$0xff]
    %v615 = vld [vmem:[%s2 + $0x508] sm:$0xff]
    %v616 = vld [vmem:[%s2 + $0x510] sm:$0xff]
    %v617 = vld [vmem:[%s2 + $0x518] sm:$0xff]
    %v618 = vld [vmem:[%s2 + $0x520] sm:$0xff]
    %v619 = vld [vmem:[%s2 + $0x528] sm:$0xff]
    %v620 = vld [vmem:[%s2 + $0x530] sm:$0xff]
    %v621 = vld [vmem:[%s2 + $0x538] sm:$0xff]
    %v622 = vld [vmem:[%s2 + $0x540] sm:$0xff]
    %v623 = vld [vmem:[%s2 + $0x548] sm:$0xff]
    %v624 = vld [vmem:[%s2 + $0x550] sm:$0xff]
    %v625 = vld [vmem:[%s2 + $0x558] sm:$0xff]
    %v626 = vld [vmem:[%s2 + $0x560] sm:$0xff]
    %v627 = vld [vmem:[%s2 + $0x568] sm:$0xff]
    %v628 = vld [vmem:[%s2 + $0x570] sm:$0xff]
    %v629 = vld [vmem:[%s2 + $0x578] sm:$0xff]
    %v630 = vld [vmem:[%s2 + $0x580] sm:$0xff]
    %v631 = vld [vmem:[%s2 + $0x588] sm:$0xff]
    %v632 = vld [vmem:[%s2 + $0x590] sm:$0xff]
    %v633 = vld [vmem:[%s2 + $0x598] sm:$0xff]
    %v634 = vld [vmem:[%s2 + $0x5a0] sm:$0xff]
    %v635 = vld [vmem:[%s2 + $0x5a8] sm:$0xff]
    %v636 = vld [vmem:[%s2 + $0x5b0] sm:$0xff]
    %v637 = vld [vmem:[%s2 + $0x5b8] sm:$0xff]
    %v638 = vld [vmem:[%s2 + $0x5c0] sm:$0xff]
    %v639 = vld [vmem:[%s2 + $0x5c8] sm:$0xff]
    %v640 = vld [vmem:[%s2 + $0x5d0] sm:$0xff]
    %v641 = vld [vmem:[%s2 + $0x5d8] sm:$0xff]
    %v642 = vld [vmem:[%s2 + $0x5e0] sm:$0xff]
    %v643 = vld [vmem:[%s2 + $0x5e8] sm:$0xff]
    %v644 = vld [vmem:[%s2 + $0x5f0] sm:$0xff]
    %v645 = vld [vmem:[%s2 + $0x5f8] sm:$0xff]
    %v646 = vld [vmem:[%s2 + $0x600] sm:$0xff]
    %v647 = vld [vmem:[%s2 + $0x608] sm:$0xff]
    %v648 = vld [vmem:[%s2 + $0x610] sm:$0xff]
    %v649 = vld [vmem:[%s2 + $0x618] sm:$0xff]
    %v650 = vld [vmem:[%s2 + $0x620] sm:$0xff]
    %v651 = vld [vmem:[%s2 + $0x628] sm:$0xff]
    %v652 = vld [vmem:[%s2 + $0x630] sm:$0xff]
    %v653 = vld [vmem:[%s2 + $0x638] sm:$0xff]
    %v654 = vld [vmem:[%s2 + $0x640] sm:$0xff]
    %v655 = vld [vmem:[%s2 + $0x648] sm:$0xff]
    %v656 = vld [vmem:[%s2 + $0x650] sm:$0xff]
    %v657 = vld [vmem:[%s2 + $0x658] sm:$0xff]
    %v658 = vld [vmem:[%s2 + $0x660] sm:$0xff]
    %v659 = vld [vmem:[%s2 + $0x668] sm:$0xff]
    %v660 = vld [vmem:[%s2 + $0x670] sm:$0xff]
    %v661 = vld [vmem:[%s2 + $0x678] sm:$0xff]
    %v662 = vld [vmem:[%s2 + $0x680] sm:$0xff]
    %v663 = vld [vmem:[%s2 + $0x688] sm:$0xff]
    %v664 = vld [vmem:[%s2 + $0x690] sm:$0xff]
    %v665 = vld [vmem:[%s2 + $0x698] sm:$0xff]
    %v666 = vld [vmem:[%s2 + $0x6a0] sm:$0xff]
    %v667 = vld [vmem:[%s2 + $0x6a8] sm:$0xff]
    %v668 = vld [vmem:[%s2 + $0x6b0] sm:$0xff]
    %v669 = vld [vmem:[%s2 + $0x6b8] sm:$0xff]
    %v670 = vld [vmem:[%s2 + $0x6c0] sm:$0xff]
    %v671 = vld [vmem:[%s2 + $0x6c8] sm:$0xff]
    %v672 = vld [vmem:[%s2 + $0x6d0] sm:$0xff]
    %v673 = vld [vmem:[%s2 + $0x6d8] sm:$0xff]
    %v674 = vld [vmem:[%s2 + $0x6e0] sm:$0xff]
    %v675 = vld [vmem:[%s2 + $0x6e8] sm:$0xff]
    %v676 = vld [vmem:[%s2 + $0x6f0] sm:$0xff]
    %v677 = vld [vmem:[%s2 + $0x6f8] sm:$0xff]
    %v678 = vld [vmem:[%s4] sm:$0x7f]
    %v680 = vlaneseq
    %v681 = vshrl.u32 %v680, 7
    %v682 = vsub.s32 0, %v681
    %v683 = vrot.slane %v678, %v682
    %v684 = vlaneseq
    %v685 = vshrl.u32 %v684, 7
    %v686 = vsub.s32 1, %v685
    %v687 = vrot.slane %v678, %v686
    %v688 = vlaneseq
    %v689 = vshrl.u32 %v688, 7
    %v690 = vsub.s32 2, %v689
    %v691 = vrot.slane %v678, %v690
    %v692 = vlaneseq
    %v693 = vshrl.u32 %v692, 7
    %v694 = vsub.s32 3, %v693
    %v695 = vrot.slane %v678, %v694
    %v696 = vlaneseq
    %v697 = vshrl.u32 %v696, 7
    %v698 = vsub.s32 4, %v697
    %v699 = vrot.slane %v678, %v698
    %v700 = vlaneseq
    %v701 = vshrl.u32 %v700, 7
    %v702 = vsub.s32 5, %v701
    %v703 = vrot.slane %v678, %v702
    %v704 = vlaneseq
    %v705 = vshrl.u32 %v704, 7
    %v706 = vsub.s32 6, %v705
    %v707 = vrot.slane %v678, %v706
    %715 = vmatprep.subr.mxu0 %v560
    %716 = vmatpush1.msra.mxu0 %v559
    %717 = vmatprep.subr.mxu0 %v553
    %718 = vmatpush1.msra.mxu0 %v552
    %719 = vmatprep.subr.mxu0 %v546
    %720 = vmatpush1.msra.mxu0 %v545
    %721 = vmatprep.subr.mxu0 %v539
    %722 = vmatpush1.msra.mxu0 %v538
    %723 = vmatprep.subr.mxu0 %v532
    %724 = vmatpush1.msra.mxu0 %v531
    %725 = vmatprep.subr.mxu0 %v525
    %726 = vmatpush1.msra.mxu0 %v524
    %727 = vmatprep.subr.mxu0 %v518
    %728 = vmatpush1.msra.mxu0 %v517
    %729 = vmatprep.subr.mxu0 %v511
    %730 = vmatpush1.msra.mxu0 %v510
    %731 = vmatprep.subr.mxu0 %v504
    %732 = vmatpush1.msra.mxu0 %v503
    %733 = vmatprep.subr.mxu0 %v497
    %734 = vmatpush1.msra.mxu0 %v496
    %735 = vmatprep.subr.mxu0 %v490
    %736 = vmatpush1.msra.mxu0 %v489
    %737 = vmatprep.subr.mxu0 %v483
    %738 = vmatpush1.msra.mxu0 %v482
    %739 = vmatprep.subr.mxu0 %v476
    %740 = vmatpush1.msra.mxu0 %v475
    %741 = vmatprep.subr.mxu0 %v469
    %742 = vmatpush1.msra.mxu0 %v468
    %743 = vmatprep.subr.mxu0 %v462
    %744 = vmatpush1.msra.mxu0 %v461
    %745 = vmatprep.subr.mxu0 %v455
    %746 = vmatpush1.msra.mxu0 %v454
    %747 = vmatprep.subr.mxu0 %v672
    %748 = vmatpush2.msra.mxu0 %v671
    %749 = vmatprep.subr.mxu0 %v665
    %750 = vmatpush2.msra.mxu0 %v664
    %751 = vmatprep.subr.mxu0 %v658
    %752 = vmatpush2.msra.mxu0 %v657
    %753 = vmatprep.subr.mxu0 %v651
    %754 = vmatpush2.msra.mxu0 %v650
    %755 = vmatprep.subr.mxu0 %v644
    %756 = vmatpush2.msra.mxu0 %v643
    %757 = vmatprep.subr.mxu0 %v637
    %758 = vmatpush2.msra.mxu0 %v636
    %759 = vmatprep.subr.mxu0 %v630
    %760 = vmatpush2.msra.mxu0 %v629
    %761 = vmatprep.subr.mxu0 %v623
    %762 = vmatpush2.msra.mxu0 %v622
    %763 = vmatprep.subr.mxu0 %v616
    %764 = vmatpush2.msra.mxu0 %v615
    %765 = vmatprep.subr.mxu0 %v609
    %766 = vmatpush2.msra.mxu0 %v608
    %767 = vmatprep.subr.mxu0 %v602
    %768 = vmatpush2.msra.mxu0 %v601
    %769 = vmatprep.subr.mxu0 %v595
    %770 = vmatpush2.msra.mxu0 %v594
    %771 = vmatprep.subr.mxu0 %v588
    %772 = vmatpush2.msra.mxu0 %v587
    %773 = vmatprep.subr.mxu0 %v581
    %774 = vmatpush2.msra.mxu0 %v580
    %775 = vmatprep.subr.mxu0 %v574
    %776 = vmatpush2.msra.mxu0 %v573
    %777 = vmatprep.subr.mxu0 %v567
    %778 = vmatpush2.msra.mxu0 %v566
    %779 = vmatprep.mubr.f32.mxu0 %v453
    %780 = vmatmul.mubr.f32.gmra.mxu0 %v452
    %v781 = vpop.f32.mrf.mxu0
    %v782 = vadd.f32 %v683, %v781
    %v783 = vpop.f32.mrf.mxu0
    %v784 = vadd.f32 %v687, %v783
    %785 = vdwg.mxu0
    %786 = vmatprep.subr.mxu0 %v562
    %787 = vmatpush1.msra.mxu0 %v561
    %788 = vmatprep.subr.mxu0 %v555
    %789 = vmatpush1.msra.mxu0 %v554
    %790 = vmatprep.subr.mxu0 %v548
    %791 = vmatpush1.msra.mxu0 %v547
    %792 = vmatprep.subr.mxu0 %v541
    %793 = vmatpush1.msra.mxu0 %v540
    %794 = vmatprep.subr.mxu0 %v534
    %795 = vmatpush1.msra.mxu0 %v533
    %796 = vmatprep.subr.mxu0 %v527
    %797 = vmatpush1.msra.mxu0 %v526
    %798 = vmatprep.subr.mxu0 %v520
    %799 = vmatpush1.msra.mxu0 %v519
    %800 = vmatprep.subr.mxu0 %v513
    %801 = vmatpush1.msra.mxu0 %v512
    %802 = vmatprep.subr.mxu0 %v506
    %803 = vmatpush1.msra.mxu0 %v505
    %804 = vmatprep.subr.mxu0 %v499
    %805 = vmatpush1.msra.mxu0 %v498
    %806 = vmatprep.subr.mxu0 %v492
    %807 = vmatpush1.msra.mxu0 %v491
    %808 = vmatprep.subr.mxu0 %v485
    %809 = vmatpush1.msra.mxu0 %v484
    %810 = vmatprep.subr.mxu0 %v478
    %811 = vmatpush1.msra.mxu0 %v477
    %812 = vmatprep.subr.mxu0 %v471
    %813 = vmatpush1.msra.mxu0 %v470
    %814 = vmatprep.subr.mxu0 %v464
    %815 = vmatpush1.msra.mxu0 %v463
    %816 = vmatprep.subr.mxu0 %v457
    %817 = vmatpush1.msra.mxu0 %v456
    %818 = vmatprep.subr.mxu0 %v674
    %819 = vmatpush2.msra.mxu0 %v673
    %820 = vmatprep.subr.mxu0 %v667
    %821 = vmatpush2.msra.mxu0 %v666
    %822 = vmatprep.subr.mxu0 %v660
    %823 = vmatpush2.msra.mxu0 %v659
    %824 = vmatprep.subr.mxu0 %v653
    %825 = vmatpush2.msra.mxu0 %v652
    %826 = vmatprep.subr.mxu0 %v646
    %827 = vmatpush2.msra.mxu0 %v645
    %828 = vmatprep.subr.mxu0 %v639
    %829 = vmatpush2.msra.mxu0 %v638
    %830 = vmatprep.subr.mxu0 %v632
    %831 = vmatpush2.msra.mxu0 %v631
    %832 = vmatprep.subr.mxu0 %v625
    %833 = vmatpush2.msra.mxu0 %v624
    %834 = vmatprep.subr.mxu0 %v618
    %835 = vmatpush2.msra.mxu0 %v617
    %836 = vmatprep.subr.mxu0 %v611
    %837 = vmatpush2.msra.mxu0 %v610
    %838 = vmatprep.subr.mxu0 %v604
    %839 = vmatpush2.msra.mxu0 %v603
    %840 = vmatprep.subr.mxu0 %v597
    %841 = vmatpush2.msra.mxu0 %v596
    %842 = vmatprep.subr.mxu0 %v590
    %843 = vmatpush2.msra.mxu0 %v589
    %844 = vmatprep.subr.mxu0 %v583
    %845 = vmatpush2.msra.mxu0 %v582
    %846 = vmatprep.subr.mxu0 %v576
    %847 = vmatpush2.msra.mxu0 %v575
    %848 = vmatprep.subr.mxu0 %v569
    %849 = vmatpush2.msra.mxu0 %v568
    %850 = vmatprep.mubr.f32.mxu0 %v453
    %851 = vmatmul.mubr.f32.gmra.mxu0 %v452
    %v852 = vpop.f32.mrf.mxu0
    %v853 = vadd.f32 %v691, %v852
    %v854 = vpop.f32.mrf.mxu0
    %v855 = vadd.f32 %v695, %v854
    %856 = vdwg.mxu0
    %857 = vmatprep.subr.mxu0 %v564
    %858 = vmatpush1.msra.mxu0 %v563
    %859 = vmatprep.subr.mxu0 %v557
    %860 = vmatpush1.msra.mxu0 %v556
    %861 = vmatprep.subr.mxu0 %v550
    %862 = vmatpush1.msra.mxu0 %v549
    %863 = vmatprep.subr.mxu0 %v543
    %864 = vmatpush1.msra.mxu0 %v542
    %865 = vmatprep.subr.mxu0 %v536
    %866 = vmatpush1.msra.mxu0 %v535
    %867 = vmatprep.subr.mxu0 %v529
    %868 = vmatpush1.msra.mxu0 %v528
    %869 = vmatprep.subr.mxu0 %v522
    %870 = vmatpush1.msra.mxu0 %v521
    %871 = vmatprep.subr.mxu0 %v515
    %872 = vmatpush1.msra.mxu0 %v514
    %873 = vmatprep.subr.mxu0 %v508
    %874 = vmatpush1.msra.mxu0 %v507
    %875 = vmatprep.subr.mxu0 %v501
    %876 = vmatpush1.msra.mxu0 %v500
    %877 = vmatprep.subr.mxu0 %v494
    %878 = vmatpush1.msra.mxu0 %v493
    %879 = vmatprep.subr.mxu0 %v487
    %880 = vmatpush1.msra.mxu0 %v486
    %881 = vmatprep.subr.mxu0 %v480
    %882 = vmatpush1.msra.mxu0 %v479
    %883 = vmatprep.subr.mxu0 %v473
    %884 = vmatpush1.msra.mxu0 %v472
    %885 = vmatprep.subr.mxu0 %v466
    %886 = vmatpush1.msra.mxu0 %v465
    %887 = vmatprep.subr.mxu0 %v459
    %888 = vmatpush1.msra.mxu0 %v458
    %889 = vmatprep.subr.mxu0 %v676
    %890 = vmatpush2.msra.mxu0 %v675
    %891 = vmatprep.subr.mxu0 %v669
    %892 = vmatpush2.msra.mxu0 %v668
    %893 = vmatprep.subr.mxu0 %v662
    %894 = vmatpush2.msra.mxu0 %v661
    %895 = vmatprep.subr.mxu0 %v655
    %896 = vmatpush2.msra.mxu0 %v654
    %897 = vmatprep.subr.mxu0 %v648
    %898 = vmatpush2.msra.mxu0 %v647
    %899 = vmatprep.subr.mxu0 %v641
    %900 = vmatpush2.msra.mxu0 %v640
    %901 = vmatprep.subr.mxu0 %v634
    %902 = vmatpush2.msra.mxu0 %v633
    %903 = vmatprep.subr.mxu0 %v627
    %904 = vmatpush2.msra.mxu0 %v626
    %905 = vmatprep.subr.mxu0 %v620
    %906 = vmatpush2.msra.mxu0 %v619
    %907 = vmatprep.subr.mxu0 %v613
    %908 = vmatpush2.msra.mxu0 %v612
    %909 = vmatprep.subr.mxu0 %v606
    %910 = vmatpush2.msra.mxu0 %v605
    %911 = vmatprep.subr.mxu0 %v599
    %912 = vmatpush2.msra.mxu0 %v598
    %913 = vmatprep.subr.mxu0 %v592
    %914 = vmatpush2.msra.mxu0 %v591
    %915 = vmatprep.subr.mxu0 %v585
    %916 = vmatpush2.msra.mxu0 %v584
    %917 = vmatprep.subr.mxu0 %v578
    %918 = vmatpush2.msra.mxu0 %v577
    %919 = vmatprep.subr.mxu0 %v571
    %920 = vmatpush2.msra.mxu0 %v570
    %921 = vmatprep.mubr.f32.mxu0 %v453
    %922 = vmatmul.mubr.f32.gmra.mxu0 %v452
    %v923 = vpop.f32.mrf.mxu0
    %v924 = vadd.f32 %v699, %v923
    %v925 = vpop.f32.mrf.mxu0
    %v926 = vadd.f32 %v703, %v925
    %927 = vdwg.mxu0
    %928 = vmatprep.subr.mxu0 0.0
    %929 = vmatpush1.msra.mxu0 %v565
    %930 = vmatprep.subr.mxu0 0.0
    %931 = vmatpush1.msra.mxu0 %v558
    %932 = vmatprep.subr.mxu0 0.0
    %933 = vmatpush1.msra.mxu0 %v551
    %934 = vmatprep.subr.mxu0 0.0
    %935 = vmatpush1.msra.mxu0 %v544
    %936 = vmatprep.subr.mxu0 0.0
    %937 = vmatpush1.msra.mxu0 %v537
    %938 = vmatprep.subr.mxu0 0.0
    %939 = vmatpush1.msra.mxu0 %v530
    %940 = vmatprep.subr.mxu0 0.0
    %941 = vmatpush1.msra.mxu0 %v523
    %942 = vmatprep.subr.mxu0 0.0
    %943 = vmatpush1.msra.mxu0 %v516
    %944 = vmatprep.subr.mxu0 0.0
    %945 = vmatpush1.msra.mxu0 %v509
    %946 = vmatprep.subr.mxu0 0.0
    %947 = vmatpush1.msra.mxu0 %v502
    %948 = vmatprep.subr.mxu0 0.0
    %949 = vmatpush1.msra.mxu0 %v495
    %950 = vmatprep.subr.mxu0 0.0
    %951 = vmatpush1.msra.mxu0 %v488
    %952 = vmatprep.subr.mxu0 0.0
    %953 = vmatpush1.msra.mxu0 %v481
    %954 = vmatprep.subr.mxu0 0.0
    %955 = vmatpush1.msra.mxu0 %v474
    %956 = vmatprep.subr.mxu0 0.0
    %957 = vmatpush1.msra.mxu0 %v467
    %958 = vmatprep.subr.mxu0 0.0
    %959 = vmatpush1.msra.mxu0 %v460
    %960 = vmatprep.subr.mxu0 0.0
    %961 = vmatpush2.msra.mxu0 %v677
    %962 = vmatprep.subr.mxu0 0.0
    %963 = vmatpush2.msra.mxu0 %v670
    %964 = vmatprep.subr.mxu0 0.0
    %965 = vmatpush2.msra.mxu0 %v663
    %966 = vmatprep.subr.mxu0 0.0
    %967 = vmatpush2.msra.mxu0 %v656
    %968 = vmatprep.subr.mxu0 0.0
    %969 = vmatpush2.msra.mxu0 %v649
    %970 = vmatprep.subr.mxu0 0.0
    %971 = vmatpush2.msra.mxu0 %v642
    %972 = vmatprep.subr.mxu0 0.0
    %973 = vmatpush2.msra.mxu0 %v635
    %974 = vmatprep.subr.mxu0 0.0
    %975 = vmatpush2.msra.mxu0 %v628
    %976 = vmatprep.subr.mxu0 0.0
    %977 = vmatpush2.msra.mxu0 %v621
    %978 = vmatprep.subr.mxu0 0.0
    %979 = vmatpush2.msra.mxu0 %v614
    %980 = vmatprep.subr.mxu0 0.0
    %981 = vmatpush2.msra.mxu0 %v607
    %982 = vmatprep.subr.mxu0 0.0
    %983 = vmatpush2.msra.mxu0 %v600
    %984 = vmatprep.subr.mxu0 0.0
    %985 = vmatpush2.msra.mxu0 %v593
    %986 = vmatprep.subr.mxu0 0.0
    %987 = vmatpush2.msra.mxu0 %v586
    %988 = vmatprep.subr.mxu0 0.0
    %989 = vmatpush2.msra.mxu0 %v579
    %990 = vmatprep.subr.mxu0 0.0
    %991 = vmatpush2.msra.mxu0 %v572
    %992 = vmatprep.mubr.f32.mxu0 %v453
    %993 = vmatmul.mubr.f32.gmra.mxu0 %v452
    %v994 = vpop.f32.mrf.mxu0
    %v995 = vadd.f32 %v707, %v994
    %v996 = vpop.f32.mrf.mxu0
    %997 = vdwg.mxu0
    %v998 = vtanh.pop %v782
    %v999 = vtanh.pop %v784
    %v1000 = vtanh.pop %v853
    %v1001 = vtanh.pop %v855
    %v1002 = vmul.f32 %v998, 0.5
    %v1003 = vmul.f32 %v999, 0.5
    %v1004 = vmul.f32 %v1000, 0.5
    %v1005 = vmul.f32 %v1001, 0.5
    %v1006 = vadd.f32 %v1002, %v1003
    %v1007 = vadd.f32 %v1006, %v1004
    %v1008 = vsel %vm151, %v1005, 0.0
    %v1009 = vadd.f32 %v1007, %v1008
    %1010 = vadd.xlane.f32.xlu0 %v1009
    %v1011 = vpop.xlane.xlu0 %1010
    %v1012 = vadd.f32 %v1011, 0.0
    %v1013 = vmul.f32 %v1002, 1.442695
    %v1014 = vpow.pop %v1013
    %v1015 = vmul.f32 %v1003, 1.442695
    %v1016 = vpow.pop %v1015
    %v1017 = vmul.f32 %v1004, 1.442695
    %v1018 = vpow.pop %v1017
    %v1019 = vmul.f32 %v1005, 1.442695
    %v1020 = vpow.pop %v1019
    %1025 = vrot.lane.b32.xlu0 %v1014, 8
    %v1026 = vpop.permute.xlu0 %1025
    %1027 = vrot.lane.b32.xlu0 %v1016, 8
    %v1028 = vpop.permute.xlu0 %1027
    %1029 = vrot.lane.b32.xlu0 %v1018, 8
    %v1030 = vpop.permute.xlu0 %1029
    %1031 = vrot.lane.b32.xlu0 %v1020, 8
    %v1032 = vpop.permute.xlu0 %1031
    %v1033 = vsel %vm151, %v1026, %v1028
    %v1034 = vsel %vm151, %v1028, %v1030
    %v1035 = vsel %vm151, %v1030, %v1032
    %v1040 = vmul.f32 %v29, %v1026
    %v1041 = vmul.f32 %v30, %v1033
    %v1042 = vmul.f32 %v31, %v1034
    %v1043 = vmul.f32 %v32, %v1035
    %v1044 = vadd.f32 %v1040, %v855
    %v1045 = vadd.f32 %v1041, %v924
    %v1046 = vadd.f32 %v1042, %v926
    %v1047 = vadd.f32 %v1043, %v995
    %1050 = vrot.lane.b32.xlu0 %v1044, 60
    %v1051 = vpop.permute.xlu0 %1050
    %1052 = vrot.lane.b32.xlu0 %v1045, 60
    %v1053 = vpop.permute.xlu0 %1052
    %vm1054 = vcmask 490496
    %v1055 = vsel %vm1054, %v1051, %v1053
    %vm1058 = vcmask 556032
    %v1059 = vsel %vm1058, %v27, %v1051
    %s1060 = scalar_lea.vmem %s3, 4
    %v1061 = vld [vmem:[%s1060] sm:$0xf]
    %s1062 = scalar_lea.vmem %s0, 784
    %v1063 = vld [vmem:[%s1062] sm:$0xff]
    %v1064 = vld [vmem:[%s1062 + $0x8] sm:$0xff]
    %v1065 = vld [vmem:[%s1062 + $0x10] sm:$0xff]
    %v1066 = vld [vmem:[%s1062 + $0x18] sm:$0xff]
    %v1067 = vld [vmem:[%s1062 + $0x20] sm:$0xff]
    %v1068 = vld [vmem:[%s1062 + $0x28] sm:$0xff]
    %v1069 = vld [vmem:[%s1062 + $0x30] sm:$0xff]
    %v1070 = vld [vmem:[%s1062 + $0x38] sm:$0xff]
    %v1071 = vld [vmem:[%s1062 + $0x40] sm:$0xff]
    %v1072 = vld [vmem:[%s1062 + $0x48] sm:$0xff]
    %v1073 = vld [vmem:[%s1062 + $0x50] sm:$0xff]
    %v1074 = vld [vmem:[%s1062 + $0x58] sm:$0xff]
    %v1075 = vld [vmem:[%s1062 + $0x60] sm:$0xff]
    %v1076 = vld [vmem:[%s1062 + $0x68] sm:$0xff]
    %v1077 = vld [vmem:[%s1062 + $0x70] sm:$0xff]
    %v1078 = vld [vmem:[%s1062 + $0x78] sm:$0xff]
    %v1079 = vld [vmem:[%s1062 + $0x80] sm:$0xff]
    %v1080 = vld [vmem:[%s1062 + $0x88] sm:$0xff]
    %v1081 = vld [vmem:[%s1062 + $0x90] sm:$0xff]
    %v1082 = vld [vmem:[%s1062 + $0x98] sm:$0xff]
    %v1083 = vld [vmem:[%s1062 + $0xa0] sm:$0xff]
    %v1084 = vld [vmem:[%s1062 + $0xa8] sm:$0xff]
    %v1085 = vld [vmem:[%s1062 + $0xb0] sm:$0xff]
    %v1086 = vld [vmem:[%s1062 + $0xb8] sm:$0xff]
    %v1087 = vld [vmem:[%s1062 + $0xc0] sm:$0xff]
    %v1088 = vld [vmem:[%s1062 + $0xc8] sm:$0xff]
    %v1089 = vld [vmem:[%s1062 + $0xd0] sm:$0xff]
    %v1090 = vld [vmem:[%s1062 + $0xd8] sm:$0xff]
    %v1091 = vld [vmem:[%s1062 + $0xe0] sm:$0xff]
    %v1092 = vld [vmem:[%s1062 + $0xe8] sm:$0xff]
    %v1093 = vld [vmem:[%s1062 + $0xf0] sm:$0xff]
    %v1094 = vld [vmem:[%s1062 + $0xf8] sm:$0xff]
    %v1095 = vld [vmem:[%s1062 + $0x100] sm:$0xff]
    %v1096 = vld [vmem:[%s1062 + $0x108] sm:$0xff]
    %v1097 = vld [vmem:[%s1062 + $0x110] sm:$0xff]
    %v1098 = vld [vmem:[%s1062 + $0x118] sm:$0xff]
    %v1099 = vld [vmem:[%s1062 + $0x120] sm:$0xff]
    %v1100 = vld [vmem:[%s1062 + $0x128] sm:$0xff]
    %v1101 = vld [vmem:[%s1062 + $0x130] sm:$0xff]
    %v1102 = vld [vmem:[%s1062 + $0x138] sm:$0xff]
    %v1103 = vld [vmem:[%s1062 + $0x140] sm:$0xff]
    %v1104 = vld [vmem:[%s1062 + $0x148] sm:$0xff]
    %v1105 = vld [vmem:[%s1062 + $0x150] sm:$0xff]
    %v1106 = vld [vmem:[%s1062 + $0x158] sm:$0xff]
    %v1107 = vld [vmem:[%s1062 + $0x160] sm:$0xff]
    %v1108 = vld [vmem:[%s1062 + $0x168] sm:$0xff]
    %v1109 = vld [vmem:[%s1062 + $0x170] sm:$0xff]
    %v1110 = vld [vmem:[%s1062 + $0x178] sm:$0xff]
    %v1111 = vld [vmem:[%s1062 + $0x180] sm:$0xff]
    %v1112 = vld [vmem:[%s1062 + $0x188] sm:$0xff]
    %v1113 = vld [vmem:[%s1062 + $0x190] sm:$0xff]
    %v1114 = vld [vmem:[%s1062 + $0x198] sm:$0xff]
    %v1115 = vld [vmem:[%s1062 + $0x1a0] sm:$0xff]
    %v1116 = vld [vmem:[%s1062 + $0x1a8] sm:$0xff]
    %v1117 = vld [vmem:[%s1062 + $0x1b0] sm:$0xff]
    %v1118 = vld [vmem:[%s1062 + $0x1b8] sm:$0xff]
    %v1119 = vld [vmem:[%s1062 + $0x1c0] sm:$0xff]
    %v1120 = vld [vmem:[%s1062 + $0x1c8] sm:$0xff]
    %v1121 = vld [vmem:[%s1062 + $0x1d0] sm:$0xff]
    %v1122 = vld [vmem:[%s1062 + $0x1d8] sm:$0xff]
    %v1123 = vld [vmem:[%s1062 + $0x1e0] sm:$0xff]
    %v1124 = vld [vmem:[%s1062 + $0x1e8] sm:$0xff]
    %v1125 = vld [vmem:[%s1062 + $0x1f0] sm:$0xff]
    %v1126 = vld [vmem:[%s1062 + $0x1f8] sm:$0xff]
    %v1127 = vld [vmem:[%s1062 + $0x200] sm:$0xff]
    %v1128 = vld [vmem:[%s1062 + $0x208] sm:$0xff]
    %v1129 = vld [vmem:[%s1062 + $0x210] sm:$0xff]
    %v1130 = vld [vmem:[%s1062 + $0x218] sm:$0xff]
    %v1131 = vld [vmem:[%s1062 + $0x220] sm:$0xff]
    %v1132 = vld [vmem:[%s1062 + $0x228] sm:$0xff]
    %v1133 = vld [vmem:[%s1062 + $0x230] sm:$0xff]
    %v1134 = vld [vmem:[%s1062 + $0x238] sm:$0xff]
    %v1135 = vld [vmem:[%s1062 + $0x240] sm:$0xff]
    %v1136 = vld [vmem:[%s1062 + $0x248] sm:$0xff]
    %v1137 = vld [vmem:[%s1062 + $0x250] sm:$0xff]
    %v1138 = vld [vmem:[%s1062 + $0x258] sm:$0xff]
    %v1139 = vld [vmem:[%s1062 + $0x260] sm:$0xff]
    %v1140 = vld [vmem:[%s1062 + $0x268] sm:$0xff]
    %v1141 = vld [vmem:[%s1062 + $0x270] sm:$0xff]
    %v1142 = vld [vmem:[%s1062 + $0x278] sm:$0xff]
    %v1143 = vld [vmem:[%s1062 + $0x280] sm:$0xff]
    %v1144 = vld [vmem:[%s1062 + $0x288] sm:$0xff]
    %v1145 = vld [vmem:[%s1062 + $0x290] sm:$0xff]
    %v1146 = vld [vmem:[%s1062 + $0x298] sm:$0xff]
    %v1147 = vld [vmem:[%s1062 + $0x2a0] sm:$0xff]
    %v1148 = vld [vmem:[%s1062 + $0x2a8] sm:$0xff]
    %v1149 = vld [vmem:[%s1062 + $0x2b0] sm:$0xff]
    %v1150 = vld [vmem:[%s1062 + $0x2b8] sm:$0xff]
    %v1151 = vld [vmem:[%s1062 + $0x2c0] sm:$0xff]
    %v1152 = vld [vmem:[%s1062 + $0x2c8] sm:$0xff]
    %v1153 = vld [vmem:[%s1062 + $0x2d0] sm:$0xff]
    %v1154 = vld [vmem:[%s1062 + $0x2d8] sm:$0xff]
    %v1155 = vld [vmem:[%s1062 + $0x2e0] sm:$0xff]
    %v1156 = vld [vmem:[%s1062 + $0x2e8] sm:$0xff]
    %v1157 = vld [vmem:[%s1062 + $0x2f0] sm:$0xff]
    %v1158 = vld [vmem:[%s1062 + $0x2f8] sm:$0xff]
    %v1159 = vld [vmem:[%s1062 + $0x300] sm:$0xff]
    %v1160 = vld [vmem:[%s1062 + $0x308] sm:$0xff]
    %v1162 = vlaneseq
    %v1163 = vshrl.u32 %v1162, 7
    %v1164 = vsub.s32 0, %v1163
    %v1165 = vrot.slane %v1061, %v1164
    %v1166 = vlaneseq
    %v1167 = vshrl.u32 %v1166, 7
    %v1168 = vsub.s32 2, %v1167
    %v1169 = vrot.slane %v1061, %v1168
    %v1172 = vlaneseq
    %v1173 = vshrl.u32 %v1172, 7
    %v1174 = vsub.s32 0, %v1173
    %v1175 = vrot.slane %v1165, %v1174
    %v1176 = vlaneseq
    %v1177 = vshrl.u32 %v1176, 7
    %v1178 = vsub.s32 0, %v1177
    %v1179 = vrot.slane %v1169, %v1178
    %v1180 = vsel %vm151, %v1053, 0
    %1182 = vmatprep.subr.mxu0 %v1094
    %1183 = vmatpush1.msra.mxu0 %v1093
    %1184 = vmatprep.subr.mxu0 %v1092
    %1185 = vmatpush1.msra.mxu0 %v1091
    %1186 = vmatprep.subr.mxu0 %v1090
    %1187 = vmatpush1.msra.mxu0 %v1089
    %1188 = vmatprep.subr.mxu0 %v1088
    %1189 = vmatpush1.msra.mxu0 %v1087
    %1190 = vmatprep.subr.mxu0 %v1086
    %1191 = vmatpush1.msra.mxu0 %v1085
    %1192 = vmatprep.subr.mxu0 %v1084
    %1193 = vmatpush1.msra.mxu0 %v1083
    %1194 = vmatprep.subr.mxu0 %v1082
    %1195 = vmatpush1.msra.mxu0 %v1081
    %1196 = vmatprep.subr.mxu0 %v1080
    %1197 = vmatpush1.msra.mxu0 %v1079
    %1198 = vmatprep.subr.mxu0 %v1078
    %1199 = vmatpush1.msra.mxu0 %v1077
    %1200 = vmatprep.subr.mxu0 %v1076
    %1201 = vmatpush1.msra.mxu0 %v1075
    %1202 = vmatprep.subr.mxu0 %v1074
    %1203 = vmatpush1.msra.mxu0 %v1073
    %1204 = vmatprep.subr.mxu0 %v1072
    %1205 = vmatpush1.msra.mxu0 %v1071
    %1206 = vmatprep.subr.mxu0 %v1070
    %1207 = vmatpush1.msra.mxu0 %v1069
    %1208 = vmatprep.subr.mxu0 %v1068
    %1209 = vmatpush1.msra.mxu0 %v1067
    %1210 = vmatprep.subr.mxu0 %v1066
    %1211 = vmatpush1.msra.mxu0 %v1065
    %1212 = vmatprep.subr.mxu0 %v1064
    %1213 = vmatpush1.msra.mxu0 %v1063
    %1214 = vmatprep.subr.mxu0 %v1126
    %1215 = vmatpush2.msra.mxu0 %v1125
    %1216 = vmatprep.subr.mxu0 %v1124
    %1217 = vmatpush2.msra.mxu0 %v1123
    %1218 = vmatprep.subr.mxu0 %v1122
    %1219 = vmatpush2.msra.mxu0 %v1121
    %1220 = vmatprep.subr.mxu0 %v1120
    %1221 = vmatpush2.msra.mxu0 %v1119
    %1222 = vmatprep.subr.mxu0 %v1118
    %1223 = vmatpush2.msra.mxu0 %v1117
    %1224 = vmatprep.subr.mxu0 %v1116
    %1225 = vmatpush2.msra.mxu0 %v1115
    %1226 = vmatprep.subr.mxu0 %v1114
    %1227 = vmatpush2.msra.mxu0 %v1113
    %1228 = vmatprep.subr.mxu0 %v1112
    %1229 = vmatpush2.msra.mxu0 %v1111
    %1230 = vmatprep.subr.mxu0 %v1110
    %1231 = vmatpush2.msra.mxu0 %v1109
    %1232 = vmatprep.subr.mxu0 %v1108
    %1233 = vmatpush2.msra.mxu0 %v1107
    %1234 = vmatprep.subr.mxu0 %v1106
    %1235 = vmatpush2.msra.mxu0 %v1105
    %1236 = vmatprep.subr.mxu0 %v1104
    %1237 = vmatpush2.msra.mxu0 %v1103
    %1238 = vmatprep.subr.mxu0 %v1102
    %1239 = vmatpush2.msra.mxu0 %v1101
    %1240 = vmatprep.subr.mxu0 %v1100
    %1241 = vmatpush2.msra.mxu0 %v1099
    %1242 = vmatprep.subr.mxu0 %v1098
    %1243 = vmatpush2.msra.mxu0 %v1097
    %1244 = vmatprep.subr.mxu0 %v1096
    %1245 = vmatpush2.msra.mxu0 %v1095
    %1246 = vmatprep.mubr.f32.mxu0 %v1059
    %1247 = vmatmul.mubr.f32.gmra.mxu0 %v26
    %v1248 = vpop.f32.mrf.mxu0
    %v1249 = vadd.f32 %v1175, %v1248
    %v1250 = vpop.f32.mrf.mxu0
    %v1251 = vadd.f32 %v1179, %v1250
    %1252 = vdwg.mxu0
    %1253 = vmatprep.subr.mxu0 %v1158
    %1254 = vmatpush1.msra.mxu0 %v1157
    %1255 = vmatprep.subr.mxu0 %v1156
    %1256 = vmatpush1.msra.mxu0 %v1155
    %1257 = vmatprep.subr.mxu0 %v1154
    %1258 = vmatpush1.msra.mxu0 %v1153
    %1259 = vmatprep.subr.mxu0 %v1152
    %1260 = vmatpush1.msra.mxu0 %v1151
    %1261 = vmatprep.subr.mxu0 %v1150
    %1262 = vmatpush1.msra.mxu0 %v1149
    %1263 = vmatprep.subr.mxu0 %v1148
    %1264 = vmatpush1.msra.mxu0 %v1147
    %1265 = vmatprep.subr.mxu0 %v1146
    %1266 = vmatpush1.msra.mxu0 %v1145
    %1267 = vmatprep.subr.mxu0 %v1144
    %1268 = vmatpush1.msra.mxu0 %v1143
    %1269 = vmatprep.subr.mxu0 %v1142
    %1270 = vmatpush1.msra.mxu0 %v1141
    %1271 = vmatprep.subr.mxu0 %v1140
    %1272 = vmatpush1.msra.mxu0 %v1139
    %1273 = vmatprep.subr.mxu0 %v1138
    %1274 = vmatpush1.msra.mxu0 %v1137
    %1275 = vmatprep.subr.mxu0 %v1136
    %1276 = vmatpush1.msra.mxu0 %v1135
    %1277 = vmatprep.subr.mxu0 %v1134
    %1278 = vmatpush1.msra.mxu0 %v1133
    %1279 = vmatprep.subr.mxu0 %v1132
    %1280 = vmatpush1.msra.mxu0 %v1131
    %1281 = vmatprep.subr.mxu0 %v1130
    %1282 = vmatpush1.msra.mxu0 %v1129
    %1283 = vmatprep.subr.mxu0 %v1128
    %1284 = vmatpush1.msra.mxu0 %v1127
    %1285 = vmatprep.subr.mxu0 0.0
    %1286 = vmatpush2.msra.mxu0 0.0
    %1287 = vmatprep.subr.mxu0 0.0
    %1288 = vmatpush2.msra.mxu0 0.0
    %1289 = vmatprep.subr.mxu0 0.0
    %1290 = vmatpush2.msra.mxu0 0.0
    %1291 = vmatprep.subr.mxu0 0.0
    %1292 = vmatpush2.msra.mxu0 0.0
    %1293 = vmatprep.subr.mxu0 0.0
    %1294 = vmatpush2.msra.mxu0 0.0
    %1295 = vmatprep.subr.mxu0 0.0
    %1296 = vmatpush2.msra.mxu0 0.0
    %1297 = vmatprep.subr.mxu0 0.0
    %1298 = vmatpush2.msra.mxu0 0.0
    %1299 = vmatprep.subr.mxu0 0.0
    %1300 = vmatpush2.msra.mxu0 0.0
    %1301 = vmatprep.subr.mxu0 0.0
    %1302 = vmatpush2.msra.mxu0 0.0
    %1303 = vmatprep.subr.mxu0 0.0
    %1304 = vmatpush2.msra.mxu0 0.0
    %1305 = vmatprep.subr.mxu0 0.0
    %1306 = vmatpush2.msra.mxu0 0.0
    %1307 = vmatprep.subr.mxu0 0.0
    %1308 = vmatpush2.msra.mxu0 0.0
    %1309 = vmatprep.subr.mxu0 0.0
    %1310 = vmatpush2.msra.mxu0 0.0
    %1311 = vmatprep.subr.mxu0 0.0
    %1312 = vmatpush2.msra.mxu0 0.0
    %1313 = vmatprep.subr.mxu0 0.0
    %1314 = vmatpush2.msra.mxu0 0.0
    %1315 = vmatprep.subr.mxu0 %v1160
    %1316 = vmatpush2.msra.mxu0 %v1159
    %1317 = vmatprep.mubr.f32.mxu0 %v1180
    %1318 = vmatmul.mubr.f32.gmra.mxu0 %v1055
    %v1319 = vpop.f32.mrf.mxu0
    %v1320 = vadd.f32 %v1249, %v1319
    %v1321 = vpop.f32.mrf.mxu0
    %v1322 = vadd.f32 %v1251, %v1321
    %1323 = vdwg.mxu0
    %v1324 = vmax.f32 %v1320, 0.0
    %v1325 = vmax.f32 %v1322, 0.0
    %s1326 = scalar_lea.vmem %s1, 512
    %v1327 = vld [vmem:[%s1326] sm:$0xff]
    %v1328 = vld [vmem:[%s1326 + $0x8] sm:$0xff]
    %v1329 = vld [vmem:[%s1326 + $0x10] sm:$0xff]
    %v1330 = vld [vmem:[%s1326 + $0x18] sm:$0xff]
    %v1331 = vld [vmem:[%s1326 + $0x20] sm:$0xff]
    %v1332 = vld [vmem:[%s1326 + $0x28] sm:$0xff]
    %v1333 = vld [vmem:[%s1326 + $0x30] sm:$0xff]
    %v1334 = vld [vmem:[%s1326 + $0x38] sm:$0xff]
    %v1335 = vld [vmem:[%s1326 + $0x40] sm:$0xff]
    %v1336 = vld [vmem:[%s1326 + $0x48] sm:$0xff]
    %v1337 = vld [vmem:[%s1326 + $0x50] sm:$0xff]
    %v1338 = vld [vmem:[%s1326 + $0x58] sm:$0xff]
    %v1339 = vld [vmem:[%s1326 + $0x60] sm:$0xff]
    %v1340 = vld [vmem:[%s1326 + $0x68] sm:$0xff]
    %v1341 = vld [vmem:[%s1326 + $0x70] sm:$0xff]
    %v1342 = vld [vmem:[%s1326 + $0x78] sm:$0xff]
    %v1343 = vld [vmem:[%s1326 + $0x80] sm:$0xff]
    %v1344 = vld [vmem:[%s1326 + $0x88] sm:$0xff]
    %v1345 = vld [vmem:[%s1326 + $0x90] sm:$0xff]
    %v1346 = vld [vmem:[%s1326 + $0x98] sm:$0xff]
    %v1347 = vld [vmem:[%s1326 + $0xa0] sm:$0xff]
    %v1348 = vld [vmem:[%s1326 + $0xa8] sm:$0xff]
    %v1349 = vld [vmem:[%s1326 + $0xb0] sm:$0xff]
    %v1350 = vld [vmem:[%s1326 + $0xb8] sm:$0xff]
    %v1351 = vld [vmem:[%s1326 + $0xc0] sm:$0xff]
    %v1352 = vld [vmem:[%s1326 + $0xc8] sm:$0xff]
    %v1353 = vld [vmem:[%s1326 + $0xd0] sm:$0xff]
    %v1354 = vld [vmem:[%s1326 + $0xd8] sm:$0xff]
    %v1355 = vld [vmem:[%s1326 + $0xe0] sm:$0xff]
    %v1356 = vld [vmem:[%s1326 + $0xe8] sm:$0xff]
    %v1357 = vld [vmem:[%s1326 + $0xf0] sm:$0xff]
    %v1358 = vld [vmem:[%s1326 + $0xf8] sm:$0xff]
    %v1359 = vld [vmem:[%s1326 + $0x100] sm:$0xff]
    %v1360 = vld [vmem:[%s1326 + $0x108] sm:$0xff]
    %v1361 = vld [vmem:[%s1326 + $0x110] sm:$0xff]
    %v1362 = vld [vmem:[%s1326 + $0x118] sm:$0xff]
    %v1363 = vld [vmem:[%s1326 + $0x120] sm:$0xff]
    %v1364 = vld [vmem:[%s1326 + $0x128] sm:$0xff]
    %v1365 = vld [vmem:[%s1326 + $0x130] sm:$0xff]
    %v1366 = vld [vmem:[%s1326 + $0x138] sm:$0xff]
    %v1367 = vld [vmem:[%s1326 + $0x140] sm:$0xff]
    %v1368 = vld [vmem:[%s1326 + $0x148] sm:$0xff]
    %v1369 = vld [vmem:[%s1326 + $0x150] sm:$0xff]
    %v1370 = vld [vmem:[%s1326 + $0x158] sm:$0xff]
    %v1371 = vld [vmem:[%s1326 + $0x160] sm:$0xff]
    %v1372 = vld [vmem:[%s1326 + $0x168] sm:$0xff]
    %v1373 = vld [vmem:[%s1326 + $0x170] sm:$0xff]
    %v1374 = vld [vmem:[%s1326 + $0x178] sm:$0xff]
    %v1375 = vld [vmem:[%s1326 + $0x180] sm:$0xff]
    %v1376 = vld [vmem:[%s1326 + $0x188] sm:$0xff]
    %v1377 = vld [vmem:[%s1326 + $0x190] sm:$0xff]
    %v1378 = vld [vmem:[%s1326 + $0x198] sm:$0xff]
    %v1379 = vld [vmem:[%s1326 + $0x1a0] sm:$0xff]
    %v1380 = vld [vmem:[%s1326 + $0x1a8] sm:$0xff]
    %v1381 = vld [vmem:[%s1326 + $0x1b0] sm:$0xff]
    %v1382 = vld [vmem:[%s1326 + $0x1b8] sm:$0xff]
    %v1383 = vld [vmem:[%s1326 + $0x1c0] sm:$0xff]
    %v1384 = vld [vmem:[%s1326 + $0x1c8] sm:$0xff]
    %v1385 = vld [vmem:[%s1326 + $0x1d0] sm:$0xff]
    %v1386 = vld [vmem:[%s1326 + $0x1d8] sm:$0xff]
    %v1387 = vld [vmem:[%s1326 + $0x1e0] sm:$0xff]
    %v1388 = vld [vmem:[%s1326 + $0x1e8] sm:$0xff]
    %v1389 = vld [vmem:[%s1326 + $0x1f0] sm:$0xff]
    %v1390 = vld [vmem:[%s1326 + $0x1f8] sm:$0xff]
    %v1391 = vlaneseq
    %v1392 = vshrl.u32 %v1391, 7
    %v1393 = vsub.s32 1, %v1392
    %v1394 = vrot.slane %v1061, %v1393
    %v1395 = vlaneseq
    %v1396 = vshrl.u32 %v1395, 7
    %v1397 = vsub.s32 3, %v1396
    %v1398 = vrot.slane %v1061, %v1397
    %v1401 = vlaneseq
    %v1402 = vshrl.u32 %v1401, 7
    %v1403 = vsub.s32 1, %v1402
    %v1404 = vrot.slane %v1394, %v1403
    %v1405 = vlaneseq
    %v1406 = vshrl.u32 %v1405, 7
    %v1407 = vsub.s32 1, %v1406
    %v1408 = vrot.slane %v1398, %v1407
    %1409 = vmatprep.subr.mxu0 %v1358
    %1410 = vmatpush1.msra.mxu0 %v1357
    %1411 = vmatprep.subr.mxu0 %v1356
    %1412 = vmatpush1.msra.mxu0 %v1355
    %1413 = vmatprep.subr.mxu0 %v1354
    %1414 = vmatpush1.msra.mxu0 %v1353
    %1415 = vmatprep.subr.mxu0 %v1352
    %1416 = vmatpush1.msra.mxu0 %v1351
    %1417 = vmatprep.subr.mxu0 %v1350
    %1418 = vmatpush1.msra.mxu0 %v1349
    %1419 = vmatprep.subr.mxu0 %v1348
    %1420 = vmatpush1.msra.mxu0 %v1347
    %1421 = vmatprep.subr.mxu0 %v1346
    %1422 = vmatpush1.msra.mxu0 %v1345
    %1423 = vmatprep.subr.mxu0 %v1344
    %1424 = vmatpush1.msra.mxu0 %v1343
    %1425 = vmatprep.subr.mxu0 %v1342
    %1426 = vmatpush1.msra.mxu0 %v1341
    %1427 = vmatprep.subr.mxu0 %v1340
    %1428 = vmatpush1.msra.mxu0 %v1339
    %1429 = vmatprep.subr.mxu0 %v1338
    %1430 = vmatpush1.msra.mxu0 %v1337
    %1431 = vmatprep.subr.mxu0 %v1336
    %1432 = vmatpush1.msra.mxu0 %v1335
    %1433 = vmatprep.subr.mxu0 %v1334
    %1434 = vmatpush1.msra.mxu0 %v1333
    %1435 = vmatprep.subr.mxu0 %v1332
    %1436 = vmatpush1.msra.mxu0 %v1331
    %1437 = vmatprep.subr.mxu0 %v1330
    %1438 = vmatpush1.msra.mxu0 %v1329
    %1439 = vmatprep.subr.mxu0 %v1328
    %1440 = vmatpush1.msra.mxu0 %v1327
    %1441 = vmatprep.subr.mxu0 %v1390
    %1442 = vmatpush2.msra.mxu0 %v1389
    %1443 = vmatprep.subr.mxu0 %v1388
    %1444 = vmatpush2.msra.mxu0 %v1387
    %1445 = vmatprep.subr.mxu0 %v1386
    %1446 = vmatpush2.msra.mxu0 %v1385
    %1447 = vmatprep.subr.mxu0 %v1384
    %1448 = vmatpush2.msra.mxu0 %v1383
    %1449 = vmatprep.subr.mxu0 %v1382
    %1450 = vmatpush2.msra.mxu0 %v1381
    %1451 = vmatprep.subr.mxu0 %v1380
    %1452 = vmatpush2.msra.mxu0 %v1379
    %1453 = vmatprep.subr.mxu0 %v1378
    %1454 = vmatpush2.msra.mxu0 %v1377
    %1455 = vmatprep.subr.mxu0 %v1376
    %1456 = vmatpush2.msra.mxu0 %v1375
    %1457 = vmatprep.subr.mxu0 %v1374
    %1458 = vmatpush2.msra.mxu0 %v1373
    %1459 = vmatprep.subr.mxu0 %v1372
    %1460 = vmatpush2.msra.mxu0 %v1371
    %1461 = vmatprep.subr.mxu0 %v1370
    %1462 = vmatpush2.msra.mxu0 %v1369
    %1463 = vmatprep.subr.mxu0 %v1368
    %1464 = vmatpush2.msra.mxu0 %v1367
    %1465 = vmatprep.subr.mxu0 %v1366
    %1466 = vmatpush2.msra.mxu0 %v1365
    %1467 = vmatprep.subr.mxu0 %v1364
    %1468 = vmatpush2.msra.mxu0 %v1363
    %1469 = vmatprep.subr.mxu0 %v1362
    %1470 = vmatpush2.msra.mxu0 %v1361
    %1471 = vmatprep.subr.mxu0 %v1360
    %1472 = vmatpush2.msra.mxu0 %v1359
    %1473 = vmatprep.mubr.f32.mxu0 %v1325
    %1474 = vmatmul.mubr.f32.gmra.mxu0 %v1324
    %v1475 = vpop.f32.mrf.mxu0
    %v1476 = vadd.f32 %v1404, %v1475
    %v1477 = vpop.f32.mrf.mxu0
    %v1478 = vadd.f32 %v1408, %v1477
    %1479 = vdwg.mxu0
    %v1480 = vmax.f32 %v1476, 0.0
    %v1481 = vmax.f32 %v1478, 0.0
    %s1482 = scalar_lea.vmem %s2, 1792
    %v1483 = vld [vmem:[%s1482] sm:$0xff]
    %v1484 = vld [vmem:[%s1482 + $0x8] sm:$0xff]
    %v1485 = vld [vmem:[%s1482 + $0x10] sm:$0xff]
    %v1486 = vld [vmem:[%s1482 + $0x18] sm:$0xff]
    %v1487 = vld [vmem:[%s1482 + $0x20] sm:$0xff]
    %v1488 = vld [vmem:[%s1482 + $0x28] sm:$0xff]
    %v1489 = vld [vmem:[%s1482 + $0x30] sm:$0xff]
    %v1490 = vld [vmem:[%s1482 + $0x38] sm:$0xff]
    %v1491 = vld [vmem:[%s1482 + $0x40] sm:$0xff]
    %v1492 = vld [vmem:[%s1482 + $0x48] sm:$0xff]
    %v1493 = vld [vmem:[%s1482 + $0x50] sm:$0xff]
    %v1494 = vld [vmem:[%s1482 + $0x58] sm:$0xff]
    %v1495 = vld [vmem:[%s1482 + $0x60] sm:$0xff]
    %v1496 = vld [vmem:[%s1482 + $0x68] sm:$0xff]
    %v1497 = vld [vmem:[%s1482 + $0x70] sm:$0xff]
    %v1498 = vld [vmem:[%s1482 + $0x78] sm:$0xff]
    %v1499 = vld [vmem:[%s1482 + $0x80] sm:$0xff]
    %v1500 = vld [vmem:[%s1482 + $0x88] sm:$0xff]
    %v1501 = vld [vmem:[%s1482 + $0x90] sm:$0xff]
    %v1502 = vld [vmem:[%s1482 + $0x98] sm:$0xff]
    %v1503 = vld [vmem:[%s1482 + $0xa0] sm:$0xff]
    %v1504 = vld [vmem:[%s1482 + $0xa8] sm:$0xff]
    %v1505 = vld [vmem:[%s1482 + $0xb0] sm:$0xff]
    %v1506 = vld [vmem:[%s1482 + $0xb8] sm:$0xff]
    %v1507 = vld [vmem:[%s1482 + $0xc0] sm:$0xff]
    %v1508 = vld [vmem:[%s1482 + $0xc8] sm:$0xff]
    %v1509 = vld [vmem:[%s1482 + $0xd0] sm:$0xff]
    %v1510 = vld [vmem:[%s1482 + $0xd8] sm:$0xff]
    %v1511 = vld [vmem:[%s1482 + $0xe0] sm:$0xff]
    %v1512 = vld [vmem:[%s1482 + $0xe8] sm:$0xff]
    %v1513 = vld [vmem:[%s1482 + $0xf0] sm:$0xff]
    %v1514 = vld [vmem:[%s1482 + $0xf8] sm:$0xff]
    %v1515 = vld [vmem:[%s1482 + $0x100] sm:$0xff]
    %v1516 = vld [vmem:[%s1482 + $0x108] sm:$0xff]
    %v1517 = vld [vmem:[%s1482 + $0x110] sm:$0xff]
    %v1518 = vld [vmem:[%s1482 + $0x118] sm:$0xff]
    %v1519 = vld [vmem:[%s1482 + $0x120] sm:$0xff]
    %v1520 = vld [vmem:[%s1482 + $0x128] sm:$0xff]
    %v1521 = vld [vmem:[%s1482 + $0x130] sm:$0xff]
    %v1522 = vld [vmem:[%s1482 + $0x138] sm:$0xff]
    %v1523 = vld [vmem:[%s1482 + $0x140] sm:$0xff]
    %v1524 = vld [vmem:[%s1482 + $0x148] sm:$0xff]
    %v1525 = vld [vmem:[%s1482 + $0x150] sm:$0xff]
    %v1526 = vld [vmem:[%s1482 + $0x158] sm:$0xff]
    %v1527 = vld [vmem:[%s1482 + $0x160] sm:$0xff]
    %v1528 = vld [vmem:[%s1482 + $0x168] sm:$0xff]
    %v1529 = vld [vmem:[%s1482 + $0x170] sm:$0xff]
    %v1530 = vld [vmem:[%s1482 + $0x178] sm:$0xff]
    %v1531 = vld [vmem:[%s1482 + $0x180] sm:$0xff]
    %v1532 = vld [vmem:[%s1482 + $0x188] sm:$0xff]
    %v1533 = vld [vmem:[%s1482 + $0x190] sm:$0xff]
    %v1534 = vld [vmem:[%s1482 + $0x198] sm:$0xff]
    %v1535 = vld [vmem:[%s1482 + $0x1a0] sm:$0xff]
    %v1536 = vld [vmem:[%s1482 + $0x1a8] sm:$0xff]
    %v1537 = vld [vmem:[%s1482 + $0x1b0] sm:$0xff]
    %v1538 = vld [vmem:[%s1482 + $0x1b8] sm:$0xff]
    %v1539 = vld [vmem:[%s1482 + $0x1c0] sm:$0xff]
    %v1540 = vld [vmem:[%s1482 + $0x1c8] sm:$0xff]
    %v1541 = vld [vmem:[%s1482 + $0x1d0] sm:$0xff]
    %v1542 = vld [vmem:[%s1482 + $0x1d8] sm:$0xff]
    %v1543 = vld [vmem:[%s1482 + $0x1e0] sm:$0xff]
    %v1544 = vld [vmem:[%s1482 + $0x1e8] sm:$0xff]
    %v1545 = vld [vmem:[%s1482 + $0x1f0] sm:$0xff]
    %v1546 = vld [vmem:[%s1482 + $0x1f8] sm:$0xff]
    %v1547 = vld [vmem:[%s1482 + $0x200] sm:$0xff]
    %v1548 = vld [vmem:[%s1482 + $0x208] sm:$0xff]
    %v1549 = vld [vmem:[%s1482 + $0x210] sm:$0xff]
    %v1550 = vld [vmem:[%s1482 + $0x218] sm:$0xff]
    %v1551 = vld [vmem:[%s1482 + $0x220] sm:$0xff]
    %v1552 = vld [vmem:[%s1482 + $0x228] sm:$0xff]
    %v1553 = vld [vmem:[%s1482 + $0x230] sm:$0xff]
    %v1554 = vld [vmem:[%s1482 + $0x238] sm:$0xff]
    %v1555 = vld [vmem:[%s1482 + $0x240] sm:$0xff]
    %v1556 = vld [vmem:[%s1482 + $0x248] sm:$0xff]
    %v1557 = vld [vmem:[%s1482 + $0x250] sm:$0xff]
    %v1558 = vld [vmem:[%s1482 + $0x258] sm:$0xff]
    %v1559 = vld [vmem:[%s1482 + $0x260] sm:$0xff]
    %v1560 = vld [vmem:[%s1482 + $0x268] sm:$0xff]
    %v1561 = vld [vmem:[%s1482 + $0x270] sm:$0xff]
    %v1562 = vld [vmem:[%s1482 + $0x278] sm:$0xff]
    %v1563 = vld [vmem:[%s1482 + $0x280] sm:$0xff]
    %v1564 = vld [vmem:[%s1482 + $0x288] sm:$0xff]
    %v1565 = vld [vmem:[%s1482 + $0x290] sm:$0xff]
    %v1566 = vld [vmem:[%s1482 + $0x298] sm:$0xff]
    %v1567 = vld [vmem:[%s1482 + $0x2a0] sm:$0xff]
    %v1568 = vld [vmem:[%s1482 + $0x2a8] sm:$0xff]
    %v1569 = vld [vmem:[%s1482 + $0x2b0] sm:$0xff]
    %v1570 = vld [vmem:[%s1482 + $0x2b8] sm:$0xff]
    %v1571 = vld [vmem:[%s1482 + $0x2c0] sm:$0xff]
    %v1572 = vld [vmem:[%s1482 + $0x2c8] sm:$0xff]
    %v1573 = vld [vmem:[%s1482 + $0x2d0] sm:$0xff]
    %v1574 = vld [vmem:[%s1482 + $0x2d8] sm:$0xff]
    %v1575 = vld [vmem:[%s1482 + $0x2e0] sm:$0xff]
    %v1576 = vld [vmem:[%s1482 + $0x2e8] sm:$0xff]
    %v1577 = vld [vmem:[%s1482 + $0x2f0] sm:$0xff]
    %v1578 = vld [vmem:[%s1482 + $0x2f8] sm:$0xff]
    %v1579 = vld [vmem:[%s1482 + $0x300] sm:$0xff]
    %v1580 = vld [vmem:[%s1482 + $0x308] sm:$0xff]
    %v1581 = vld [vmem:[%s1482 + $0x310] sm:$0xff]
    %v1582 = vld [vmem:[%s1482 + $0x318] sm:$0xff]
    %v1583 = vld [vmem:[%s1482 + $0x320] sm:$0xff]
    %v1584 = vld [vmem:[%s1482 + $0x328] sm:$0xff]
    %v1585 = vld [vmem:[%s1482 + $0x330] sm:$0xff]
    %v1586 = vld [vmem:[%s1482 + $0x338] sm:$0xff]
    %v1587 = vld [vmem:[%s1482 + $0x340] sm:$0xff]
    %v1588 = vld [vmem:[%s1482 + $0x348] sm:$0xff]
    %v1589 = vld [vmem:[%s1482 + $0x350] sm:$0xff]
    %v1590 = vld [vmem:[%s1482 + $0x358] sm:$0xff]
    %v1591 = vld [vmem:[%s1482 + $0x360] sm:$0xff]
    %v1592 = vld [vmem:[%s1482 + $0x368] sm:$0xff]
    %v1593 = vld [vmem:[%s1482 + $0x370] sm:$0xff]
    %v1594 = vld [vmem:[%s1482 + $0x378] sm:$0xff]
    %v1595 = vld [vmem:[%s1482 + $0x380] sm:$0xff]
    %v1596 = vld [vmem:[%s1482 + $0x388] sm:$0xff]
    %v1597 = vld [vmem:[%s1482 + $0x390] sm:$0xff]
    %v1598 = vld [vmem:[%s1482 + $0x398] sm:$0xff]
    %v1599 = vld [vmem:[%s1482 + $0x3a0] sm:$0xff]
    %v1600 = vld [vmem:[%s1482 + $0x3a8] sm:$0xff]
    %v1601 = vld [vmem:[%s1482 + $0x3b0] sm:$0xff]
    %v1602 = vld [vmem:[%s1482 + $0x3b8] sm:$0xff]
    %v1603 = vld [vmem:[%s1482 + $0x3c0] sm:$0xff]
    %v1604 = vld [vmem:[%s1482 + $0x3c8] sm:$0xff]
    %v1605 = vld [vmem:[%s1482 + $0x3d0] sm:$0xff]
    %v1606 = vld [vmem:[%s1482 + $0x3d8] sm:$0xff]
    %v1607 = vld [vmem:[%s1482 + $0x3e0] sm:$0xff]
    %v1608 = vld [vmem:[%s1482 + $0x3e8] sm:$0xff]
    %v1609 = vld [vmem:[%s1482 + $0x3f0] sm:$0xff]
    %v1610 = vld [vmem:[%s1482 + $0x3f8] sm:$0xff]
    %v1611 = vld [vmem:[%s1482 + $0x400] sm:$0xff]
    %v1612 = vld [vmem:[%s1482 + $0x408] sm:$0xff]
    %v1613 = vld [vmem:[%s1482 + $0x410] sm:$0xff]
    %v1614 = vld [vmem:[%s1482 + $0x418] sm:$0xff]
    %v1615 = vld [vmem:[%s1482 + $0x420] sm:$0xff]
    %v1616 = vld [vmem:[%s1482 + $0x428] sm:$0xff]
    %v1617 = vld [vmem:[%s1482 + $0x430] sm:$0xff]
    %v1618 = vld [vmem:[%s1482 + $0x438] sm:$0xff]
    %v1619 = vld [vmem:[%s1482 + $0x440] sm:$0xff]
    %v1620 = vld [vmem:[%s1482 + $0x448] sm:$0xff]
    %v1621 = vld [vmem:[%s1482 + $0x450] sm:$0xff]
    %v1622 = vld [vmem:[%s1482 + $0x458] sm:$0xff]
    %v1623 = vld [vmem:[%s1482 + $0x460] sm:$0xff]
    %v1624 = vld [vmem:[%s1482 + $0x468] sm:$0xff]
    %v1625 = vld [vmem:[%s1482 + $0x470] sm:$0xff]
    %v1626 = vld [vmem:[%s1482 + $0x478] sm:$0xff]
    %v1627 = vld [vmem:[%s1482 + $0x480] sm:$0xff]
    %v1628 = vld [vmem:[%s1482 + $0x488] sm:$0xff]
    %v1629 = vld [vmem:[%s1482 + $0x490] sm:$0xff]
    %v1630 = vld [vmem:[%s1482 + $0x498] sm:$0xff]
    %v1631 = vld [vmem:[%s1482 + $0x4a0] sm:$0xff]
    %v1632 = vld [vmem:[%s1482 + $0x4a8] sm:$0xff]
    %v1633 = vld [vmem:[%s1482 + $0x4b0] sm:$0xff]
    %v1634 = vld [vmem:[%s1482 + $0x4b8] sm:$0xff]
    %v1635 = vld [vmem:[%s1482 + $0x4c0] sm:$0xff]
    %v1636 = vld [vmem:[%s1482 + $0x4c8] sm:$0xff]
    %v1637 = vld [vmem:[%s1482 + $0x4d0] sm:$0xff]
    %v1638 = vld [vmem:[%s1482 + $0x4d8] sm:$0xff]
    %v1639 = vld [vmem:[%s1482 + $0x4e0] sm:$0xff]
    %v1640 = vld [vmem:[%s1482 + $0x4e8] sm:$0xff]
    %v1641 = vld [vmem:[%s1482 + $0x4f0] sm:$0xff]
    %v1642 = vld [vmem:[%s1482 + $0x4f8] sm:$0xff]
    %v1643 = vld [vmem:[%s1482 + $0x500] sm:$0xff]
    %v1644 = vld [vmem:[%s1482 + $0x508] sm:$0xff]
    %v1645 = vld [vmem:[%s1482 + $0x510] sm:$0xff]
    %v1646 = vld [vmem:[%s1482 + $0x518] sm:$0xff]
    %v1647 = vld [vmem:[%s1482 + $0x520] sm:$0xff]
    %v1648 = vld [vmem:[%s1482 + $0x528] sm:$0xff]
    %v1649 = vld [vmem:[%s1482 + $0x530] sm:$0xff]
    %v1650 = vld [vmem:[%s1482 + $0x538] sm:$0xff]
    %v1651 = vld [vmem:[%s1482 + $0x540] sm:$0xff]
    %v1652 = vld [vmem:[%s1482 + $0x548] sm:$0xff]
    %v1653 = vld [vmem:[%s1482 + $0x550] sm:$0xff]
    %v1654 = vld [vmem:[%s1482 + $0x558] sm:$0xff]
    %v1655 = vld [vmem:[%s1482 + $0x560] sm:$0xff]
    %v1656 = vld [vmem:[%s1482 + $0x568] sm:$0xff]
    %v1657 = vld [vmem:[%s1482 + $0x570] sm:$0xff]
    %v1658 = vld [vmem:[%s1482 + $0x578] sm:$0xff]
    %v1659 = vld [vmem:[%s1482 + $0x580] sm:$0xff]
    %v1660 = vld [vmem:[%s1482 + $0x588] sm:$0xff]
    %v1661 = vld [vmem:[%s1482 + $0x590] sm:$0xff]
    %v1662 = vld [vmem:[%s1482 + $0x598] sm:$0xff]
    %v1663 = vld [vmem:[%s1482 + $0x5a0] sm:$0xff]
    %v1664 = vld [vmem:[%s1482 + $0x5a8] sm:$0xff]
    %v1665 = vld [vmem:[%s1482 + $0x5b0] sm:$0xff]
    %v1666 = vld [vmem:[%s1482 + $0x5b8] sm:$0xff]
    %v1667 = vld [vmem:[%s1482 + $0x5c0] sm:$0xff]
    %v1668 = vld [vmem:[%s1482 + $0x5c8] sm:$0xff]
    %v1669 = vld [vmem:[%s1482 + $0x5d0] sm:$0xff]
    %v1670 = vld [vmem:[%s1482 + $0x5d8] sm:$0xff]
    %v1671 = vld [vmem:[%s1482 + $0x5e0] sm:$0xff]
    %v1672 = vld [vmem:[%s1482 + $0x5e8] sm:$0xff]
    %v1673 = vld [vmem:[%s1482 + $0x5f0] sm:$0xff]
    %v1674 = vld [vmem:[%s1482 + $0x5f8] sm:$0xff]
    %v1675 = vld [vmem:[%s1482 + $0x600] sm:$0xff]
    %v1676 = vld [vmem:[%s1482 + $0x608] sm:$0xff]
    %v1677 = vld [vmem:[%s1482 + $0x610] sm:$0xff]
    %v1678 = vld [vmem:[%s1482 + $0x618] sm:$0xff]
    %v1679 = vld [vmem:[%s1482 + $0x620] sm:$0xff]
    %v1680 = vld [vmem:[%s1482 + $0x628] sm:$0xff]
    %v1681 = vld [vmem:[%s1482 + $0x630] sm:$0xff]
    %v1682 = vld [vmem:[%s1482 + $0x638] sm:$0xff]
    %v1683 = vld [vmem:[%s1482 + $0x640] sm:$0xff]
    %v1684 = vld [vmem:[%s1482 + $0x648] sm:$0xff]
    %v1685 = vld [vmem:[%s1482 + $0x650] sm:$0xff]
    %v1686 = vld [vmem:[%s1482 + $0x658] sm:$0xff]
    %v1687 = vld [vmem:[%s1482 + $0x660] sm:$0xff]
    %v1688 = vld [vmem:[%s1482 + $0x668] sm:$0xff]
    %v1689 = vld [vmem:[%s1482 + $0x670] sm:$0xff]
    %v1690 = vld [vmem:[%s1482 + $0x678] sm:$0xff]
    %v1691 = vld [vmem:[%s1482 + $0x680] sm:$0xff]
    %v1692 = vld [vmem:[%s1482 + $0x688] sm:$0xff]
    %v1693 = vld [vmem:[%s1482 + $0x690] sm:$0xff]
    %v1694 = vld [vmem:[%s1482 + $0x698] sm:$0xff]
    %v1695 = vld [vmem:[%s1482 + $0x6a0] sm:$0xff]
    %v1696 = vld [vmem:[%s1482 + $0x6a8] sm:$0xff]
    %v1697 = vld [vmem:[%s1482 + $0x6b0] sm:$0xff]
    %v1698 = vld [vmem:[%s1482 + $0x6b8] sm:$0xff]
    %v1699 = vld [vmem:[%s1482 + $0x6c0] sm:$0xff]
    %v1700 = vld [vmem:[%s1482 + $0x6c8] sm:$0xff]
    %v1701 = vld [vmem:[%s1482 + $0x6d0] sm:$0xff]
    %v1702 = vld [vmem:[%s1482 + $0x6d8] sm:$0xff]
    %v1703 = vld [vmem:[%s1482 + $0x6e0] sm:$0xff]
    %v1704 = vld [vmem:[%s1482 + $0x6e8] sm:$0xff]
    %v1705 = vld [vmem:[%s1482 + $0x6f0] sm:$0xff]
    %v1706 = vld [vmem:[%s1482 + $0x6f8] sm:$0xff]
    %s1707 = scalar_lea.vmem %s4, 7
    %v1708 = vld [vmem:[%s1707] sm:$0x7f]
    %v1710 = vlaneseq
    %v1711 = vshrl.u32 %v1710, 7
    %v1712 = vsub.s32 0, %v1711
    %v1713 = vrot.slane %v1708, %v1712
    %v1714 = vlaneseq
    %v1715 = vshrl.u32 %v1714, 7
    %v1716 = vsub.s32 1, %v1715
    %v1717 = vrot.slane %v1708, %v1716
    %v1718 = vlaneseq
    %v1719 = vshrl.u32 %v1718, 7
    %v1720 = vsub.s32 2, %v1719
    %v1721 = vrot.slane %v1708, %v1720
    %v1722 = vlaneseq
    %v1723 = vshrl.u32 %v1722, 7
    %v1724 = vsub.s32 3, %v1723
    %v1725 = vrot.slane %v1708, %v1724
    %v1726 = vlaneseq
    %v1727 = vshrl.u32 %v1726, 7
    %v1728 = vsub.s32 4, %v1727
    %v1729 = vrot.slane %v1708, %v1728
    %v1730 = vlaneseq
    %v1731 = vshrl.u32 %v1730, 7
    %v1732 = vsub.s32 5, %v1731
    %v1733 = vrot.slane %v1708, %v1732
    %v1734 = vlaneseq
    %v1735 = vshrl.u32 %v1734, 7
    %v1736 = vsub.s32 6, %v1735
    %v1737 = vrot.slane %v1708, %v1736
    %1745 = vmatprep.subr.mxu0 %v1589
    %1746 = vmatpush1.msra.mxu0 %v1588
    %1747 = vmatprep.subr.mxu0 %v1582
    %1748 = vmatpush1.msra.mxu0 %v1581
    %1749 = vmatprep.subr.mxu0 %v1575
    %1750 = vmatpush1.msra.mxu0 %v1574
    %1751 = vmatprep.subr.mxu0 %v1568
    %1752 = vmatpush1.msra.mxu0 %v1567
    %1753 = vmatprep.subr.mxu0 %v1561
    %1754 = vmatpush1.msra.mxu0 %v1560
    %1755 = vmatprep.subr.mxu0 %v1554
    %1756 = vmatpush1.msra.mxu0 %v1553
    %1757 = vmatprep.subr.mxu0 %v1547
    %1758 = vmatpush1.msra.mxu0 %v1546
    %1759 = vmatprep.subr.mxu0 %v1540
    %1760 = vmatpush1.msra.mxu0 %v1539
    %1761 = vmatprep.subr.mxu0 %v1533
    %1762 = vmatpush1.msra.mxu0 %v1532
    %1763 = vmatprep.subr.mxu0 %v1526
    %1764 = vmatpush1.msra.mxu0 %v1525
    %1765 = vmatprep.subr.mxu0 %v1519
    %1766 = vmatpush1.msra.mxu0 %v1518
    %1767 = vmatprep.subr.mxu0 %v1512
    %1768 = vmatpush1.msra.mxu0 %v1511
    %1769 = vmatprep.subr.mxu0 %v1505
    %1770 = vmatpush1.msra.mxu0 %v1504
    %1771 = vmatprep.subr.mxu0 %v1498
    %1772 = vmatpush1.msra.mxu0 %v1497
    %1773 = vmatprep.subr.mxu0 %v1491
    %1774 = vmatpush1.msra.mxu0 %v1490
    %1775 = vmatprep.subr.mxu0 %v1484
    %1776 = vmatpush1.msra.mxu0 %v1483
    %1777 = vmatprep.subr.mxu0 %v1701
    %1778 = vmatpush2.msra.mxu0 %v1700
    %1779 = vmatprep.subr.mxu0 %v1694
    %1780 = vmatpush2.msra.mxu0 %v1693
    %1781 = vmatprep.subr.mxu0 %v1687
    %1782 = vmatpush2.msra.mxu0 %v1686
    %1783 = vmatprep.subr.mxu0 %v1680
    %1784 = vmatpush2.msra.mxu0 %v1679
    %1785 = vmatprep.subr.mxu0 %v1673
    %1786 = vmatpush2.msra.mxu0 %v1672
    %1787 = vmatprep.subr.mxu0 %v1666
    %1788 = vmatpush2.msra.mxu0 %v1665
    %1789 = vmatprep.subr.mxu0 %v1659
    %1790 = vmatpush2.msra.mxu0 %v1658
    %1791 = vmatprep.subr.mxu0 %v1652
    %1792 = vmatpush2.msra.mxu0 %v1651
    %1793 = vmatprep.subr.mxu0 %v1645
    %1794 = vmatpush2.msra.mxu0 %v1644
    %1795 = vmatprep.subr.mxu0 %v1638
    %1796 = vmatpush2.msra.mxu0 %v1637
    %1797 = vmatprep.subr.mxu0 %v1631
    %1798 = vmatpush2.msra.mxu0 %v1630
    %1799 = vmatprep.subr.mxu0 %v1624
    %1800 = vmatpush2.msra.mxu0 %v1623
    %1801 = vmatprep.subr.mxu0 %v1617
    %1802 = vmatpush2.msra.mxu0 %v1616
    %1803 = vmatprep.subr.mxu0 %v1610
    %1804 = vmatpush2.msra.mxu0 %v1609
    %1805 = vmatprep.subr.mxu0 %v1603
    %1806 = vmatpush2.msra.mxu0 %v1602
    %1807 = vmatprep.subr.mxu0 %v1596
    %1808 = vmatpush2.msra.mxu0 %v1595
    %1809 = vmatprep.mubr.f32.mxu0 %v1481
    %1810 = vmatmul.mubr.f32.gmra.mxu0 %v1480
    %v1811 = vpop.f32.mrf.mxu0
    %v1812 = vadd.f32 %v1713, %v1811
    %v1813 = vpop.f32.mrf.mxu0
    %v1814 = vadd.f32 %v1717, %v1813
    %1815 = vdwg.mxu0
    %1816 = vmatprep.subr.mxu0 %v1591
    %1817 = vmatpush1.msra.mxu0 %v1590
    %1818 = vmatprep.subr.mxu0 %v1584
    %1819 = vmatpush1.msra.mxu0 %v1583
    %1820 = vmatprep.subr.mxu0 %v1577
    %1821 = vmatpush1.msra.mxu0 %v1576
    %1822 = vmatprep.subr.mxu0 %v1570
    %1823 = vmatpush1.msra.mxu0 %v1569
    %1824 = vmatprep.subr.mxu0 %v1563
    %1825 = vmatpush1.msra.mxu0 %v1562
    %1826 = vmatprep.subr.mxu0 %v1556
    %1827 = vmatpush1.msra.mxu0 %v1555
    %1828 = vmatprep.subr.mxu0 %v1549
    %1829 = vmatpush1.msra.mxu0 %v1548
    %1830 = vmatprep.subr.mxu0 %v1542
    %1831 = vmatpush1.msra.mxu0 %v1541
    %1832 = vmatprep.subr.mxu0 %v1535
    %1833 = vmatpush1.msra.mxu0 %v1534
    %1834 = vmatprep.subr.mxu0 %v1528
    %1835 = vmatpush1.msra.mxu0 %v1527
    %1836 = vmatprep.subr.mxu0 %v1521
    %1837 = vmatpush1.msra.mxu0 %v1520
    %1838 = vmatprep.subr.mxu0 %v1514
    %1839 = vmatpush1.msra.mxu0 %v1513
    %1840 = vmatprep.subr.mxu0 %v1507
    %1841 = vmatpush1.msra.mxu0 %v1506
    %1842 = vmatprep.subr.mxu0 %v1500
    %1843 = vmatpush1.msra.mxu0 %v1499
    %1844 = vmatprep.subr.mxu0 %v1493
    %1845 = vmatpush1.msra.mxu0 %v1492
    %1846 = vmatprep.subr.mxu0 %v1486
    %1847 = vmatpush1.msra.mxu0 %v1485
    %1848 = vmatprep.subr.mxu0 %v1703
    %1849 = vmatpush2.msra.mxu0 %v1702
    %1850 = vmatprep.subr.mxu0 %v1696
    %1851 = vmatpush2.msra.mxu0 %v1695
    %1852 = vmatprep.subr.mxu0 %v1689
    %1853 = vmatpush2.msra.mxu0 %v1688
    %1854 = vmatprep.subr.mxu0 %v1682
    %1855 = vmatpush2.msra.mxu0 %v1681
    %1856 = vmatprep.subr.mxu0 %v1675
    %1857 = vmatpush2.msra.mxu0 %v1674
    %1858 = vmatprep.subr.mxu0 %v1668
    %1859 = vmatpush2.msra.mxu0 %v1667
    %1860 = vmatprep.subr.mxu0 %v1661
    %1861 = vmatpush2.msra.mxu0 %v1660
    %1862 = vmatprep.subr.mxu0 %v1654
    %1863 = vmatpush2.msra.mxu0 %v1653
    %1864 = vmatprep.subr.mxu0 %v1647
    %1865 = vmatpush2.msra.mxu0 %v1646
    %1866 = vmatprep.subr.mxu0 %v1640
    %1867 = vmatpush2.msra.mxu0 %v1639
    %1868 = vmatprep.subr.mxu0 %v1633
    %1869 = vmatpush2.msra.mxu0 %v1632
    %1870 = vmatprep.subr.mxu0 %v1626
    %1871 = vmatpush2.msra.mxu0 %v1625
    %1872 = vmatprep.subr.mxu0 %v1619
    %1873 = vmatpush2.msra.mxu0 %v1618
    %1874 = vmatprep.subr.mxu0 %v1612
    %1875 = vmatpush2.msra.mxu0 %v1611
    %1876 = vmatprep.subr.mxu0 %v1605
    %1877 = vmatpush2.msra.mxu0 %v1604
    %1878 = vmatprep.subr.mxu0 %v1598
    %1879 = vmatpush2.msra.mxu0 %v1597
    %1880 = vmatprep.mubr.f32.mxu0 %v1481
    %1881 = vmatmul.mubr.f32.gmra.mxu0 %v1480
    %v1882 = vpop.f32.mrf.mxu0
    %v1883 = vadd.f32 %v1721, %v1882
    %v1884 = vpop.f32.mrf.mxu0
    %v1885 = vadd.f32 %v1725, %v1884
    %1886 = vdwg.mxu0
    %1887 = vmatprep.subr.mxu0 %v1593
    %1888 = vmatpush1.msra.mxu0 %v1592
    %1889 = vmatprep.subr.mxu0 %v1586
    %1890 = vmatpush1.msra.mxu0 %v1585
    %1891 = vmatprep.subr.mxu0 %v1579
    %1892 = vmatpush1.msra.mxu0 %v1578
    %1893 = vmatprep.subr.mxu0 %v1572
    %1894 = vmatpush1.msra.mxu0 %v1571
    %1895 = vmatprep.subr.mxu0 %v1565
    %1896 = vmatpush1.msra.mxu0 %v1564
    %1897 = vmatprep.subr.mxu0 %v1558
    %1898 = vmatpush1.msra.mxu0 %v1557
    %1899 = vmatprep.subr.mxu0 %v1551
    %1900 = vmatpush1.msra.mxu0 %v1550
    %1901 = vmatprep.subr.mxu0 %v1544
    %1902 = vmatpush1.msra.mxu0 %v1543
    %1903 = vmatprep.subr.mxu0 %v1537
    %1904 = vmatpush1.msra.mxu0 %v1536
    %1905 = vmatprep.subr.mxu0 %v1530
    %1906 = vmatpush1.msra.mxu0 %v1529
    %1907 = vmatprep.subr.mxu0 %v1523
    %1908 = vmatpush1.msra.mxu0 %v1522
    %1909 = vmatprep.subr.mxu0 %v1516
    %1910 = vmatpush1.msra.mxu0 %v1515
    %1911 = vmatprep.subr.mxu0 %v1509
    %1912 = vmatpush1.msra.mxu0 %v1508
    %1913 = vmatprep.subr.mxu0 %v1502
    %1914 = vmatpush1.msra.mxu0 %v1501
    %1915 = vmatprep.subr.mxu0 %v1495
    %1916 = vmatpush1.msra.mxu0 %v1494
    %1917 = vmatprep.subr.mxu0 %v1488
    %1918 = vmatpush1.msra.mxu0 %v1487
    %1919 = vmatprep.subr.mxu0 %v1705
    %1920 = vmatpush2.msra.mxu0 %v1704
    %1921 = vmatprep.subr.mxu0 %v1698
    %1922 = vmatpush2.msra.mxu0 %v1697
    %1923 = vmatprep.subr.mxu0 %v1691
    %1924 = vmatpush2.msra.mxu0 %v1690
    %1925 = vmatprep.subr.mxu0 %v1684
    %1926 = vmatpush2.msra.mxu0 %v1683
    %1927 = vmatprep.subr.mxu0 %v1677
    %1928 = vmatpush2.msra.mxu0 %v1676
    %1929 = vmatprep.subr.mxu0 %v1670
    %1930 = vmatpush2.msra.mxu0 %v1669
    %1931 = vmatprep.subr.mxu0 %v1663
    %1932 = vmatpush2.msra.mxu0 %v1662
    %1933 = vmatprep.subr.mxu0 %v1656
    %1934 = vmatpush2.msra.mxu0 %v1655
    %1935 = vmatprep.subr.mxu0 %v1649
    %1936 = vmatpush2.msra.mxu0 %v1648
    %1937 = vmatprep.subr.mxu0 %v1642
    %1938 = vmatpush2.msra.mxu0 %v1641
    %1939 = vmatprep.subr.mxu0 %v1635
    %1940 = vmatpush2.msra.mxu0 %v1634
    %1941 = vmatprep.subr.mxu0 %v1628
    %1942 = vmatpush2.msra.mxu0 %v1627
    %1943 = vmatprep.subr.mxu0 %v1621
    %1944 = vmatpush2.msra.mxu0 %v1620
    %1945 = vmatprep.subr.mxu0 %v1614
    %1946 = vmatpush2.msra.mxu0 %v1613
    %1947 = vmatprep.subr.mxu0 %v1607
    %1948 = vmatpush2.msra.mxu0 %v1606
    %1949 = vmatprep.subr.mxu0 %v1600
    %1950 = vmatpush2.msra.mxu0 %v1599
    %1951 = vmatprep.mubr.f32.mxu0 %v1481
    %1952 = vmatmul.mubr.f32.gmra.mxu0 %v1480
    %v1953 = vpop.f32.mrf.mxu0
    %v1954 = vadd.f32 %v1729, %v1953
    %v1955 = vpop.f32.mrf.mxu0
    %v1956 = vadd.f32 %v1733, %v1955
    %1957 = vdwg.mxu0
    %1958 = vmatprep.subr.mxu0 0.0
    %1959 = vmatpush1.msra.mxu0 %v1594
    %1960 = vmatprep.subr.mxu0 0.0
    %1961 = vmatpush1.msra.mxu0 %v1587
    %1962 = vmatprep.subr.mxu0 0.0
    %1963 = vmatpush1.msra.mxu0 %v1580
    %1964 = vmatprep.subr.mxu0 0.0
    %1965 = vmatpush1.msra.mxu0 %v1573
    %1966 = vmatprep.subr.mxu0 0.0
    %1967 = vmatpush1.msra.mxu0 %v1566
    %1968 = vmatprep.subr.mxu0 0.0
    %1969 = vmatpush1.msra.mxu0 %v1559
    %1970 = vmatprep.subr.mxu0 0.0
    %1971 = vmatpush1.msra.mxu0 %v1552
    %1972 = vmatprep.subr.mxu0 0.0
    %1973 = vmatpush1.msra.mxu0 %v1545
    %1974 = vmatprep.subr.mxu0 0.0
    %1975 = vmatpush1.msra.mxu0 %v1538
    %1976 = vmatprep.subr.mxu0 0.0
    %1977 = vmatpush1.msra.mxu0 %v1531
    %1978 = vmatprep.subr.mxu0 0.0
    %1979 = vmatpush1.msra.mxu0 %v1524
    %1980 = vmatprep.subr.mxu0 0.0
    %1981 = vmatpush1.msra.mxu0 %v1517
    %1982 = vmatprep.subr.mxu0 0.0
    %1983 = vmatpush1.msra.mxu0 %v1510
    %1984 = vmatprep.subr.mxu0 0.0
    %1985 = vmatpush1.msra.mxu0 %v1503
    %1986 = vmatprep.subr.mxu0 0.0
    %1987 = vmatpush1.msra.mxu0 %v1496
    %1988 = vmatprep.subr.mxu0 0.0
    %1989 = vmatpush1.msra.mxu0 %v1489
    %1990 = vmatprep.subr.mxu0 0.0
    %1991 = vmatpush2.msra.mxu0 %v1706
    %1992 = vmatprep.subr.mxu0 0.0
    %1993 = vmatpush2.msra.mxu0 %v1699
    %1994 = vmatprep.subr.mxu0 0.0
    %1995 = vmatpush2.msra.mxu0 %v1692
    %1996 = vmatprep.subr.mxu0 0.0
    %1997 = vmatpush2.msra.mxu0 %v1685
    %1998 = vmatprep.subr.mxu0 0.0
    %1999 = vmatpush2.msra.mxu0 %v1678
    %2000 = vmatprep.subr.mxu0 0.0
    %2001 = vmatpush2.msra.mxu0 %v1671
    %2002 = vmatprep.subr.mxu0 0.0
    %2003 = vmatpush2.msra.mxu0 %v1664
    %2004 = vmatprep.subr.mxu0 0.0
    %2005 = vmatpush2.msra.mxu0 %v1657
    %2006 = vmatprep.subr.mxu0 0.0
    %2007 = vmatpush2.msra.mxu0 %v1650
    %2008 = vmatprep.subr.mxu0 0.0
    %2009 = vmatpush2.msra.mxu0 %v1643
    %2010 = vmatprep.subr.mxu0 0.0
    %2011 = vmatpush2.msra.mxu0 %v1636
    %2012 = vmatprep.subr.mxu0 0.0
    %2013 = vmatpush2.msra.mxu0 %v1629
    %2014 = vmatprep.subr.mxu0 0.0
    %2015 = vmatpush2.msra.mxu0 %v1622
    %2016 = vmatprep.subr.mxu0 0.0
    %2017 = vmatpush2.msra.mxu0 %v1615
    %2018 = vmatprep.subr.mxu0 0.0
    %2019 = vmatpush2.msra.mxu0 %v1608
    %2020 = vmatprep.subr.mxu0 0.0
    %2021 = vmatpush2.msra.mxu0 %v1601
    %2022 = vmatprep.mubr.f32.mxu0 %v1481
    %2023 = vmatmul.mubr.f32.gmra.mxu0 %v1480
    %v2024 = vpop.f32.mrf.mxu0
    %v2025 = vadd.f32 %v1737, %v2024
    %v2026 = vpop.f32.mrf.mxu0
    %2027 = vdwg.mxu0
    %v2028 = vtanh.pop %v1812
    %v2029 = vtanh.pop %v1814
    %v2030 = vtanh.pop %v1883
    %v2031 = vtanh.pop %v1885
    %v2032 = vmul.f32 %v2028, 0.5
    %v2033 = vmul.f32 %v2029, 0.5
    %v2034 = vmul.f32 %v2030, 0.5
    %v2035 = vmul.f32 %v2031, 0.5
    %v2036 = vadd.f32 %v2032, %v2033
    %v2037 = vadd.f32 %v2036, %v2034
    %v2038 = vsel %vm151, %v2035, 0.0
    %v2039 = vadd.f32 %v2037, %v2038
    %2040 = vadd.xlane.f32.xlu0 %v2039
    %v2041 = vpop.xlane.xlu0 %2040
    %v2042 = vadd.f32 %v1012, %v2041
    %v2043 = vmul.f32 %v2032, 1.442695
    %v2044 = vpow.pop %v2043
    %v2045 = vmul.f32 %v2033, 1.442695
    %v2046 = vpow.pop %v2045
    %2049 = vrot.lane.b32.xlu0 %v2044, 68
    %v2050 = vpop.permute.xlu0 %2049
    %2051 = vrot.lane.b32.xlu0 %v2046, 68
    %v2052 = vpop.permute.xlu0 %2051
    %v2053 = vsel %vm1058, %v2050, %v2052
    %v2057 = vmul.f32 %v27, %v2050
    %v2058 = vmul.f32 %v28, %v2053
    %v2059 = vmul.f32 %v29, %v2052
    %2062 = vrot.lane.b32.xlu0 %v1885, 60
    %v2063 = vpop.permute.xlu0 %2062
    %2064 = vrot.lane.b32.xlu0 %v1954, 60
    %v2065 = vpop.permute.xlu0 %2064
    %v2066 = vsel %vm1054, %v2063, %v2065
    %v2070 = vadd.f32 %v2057, %v2063
    %v2071 = vadd.f32 %v2058, %v2066
    %v2072 = vadd.f32 %v2059, %v2065
    %v2073 = vsel %vm1058, %v27, %v2070
    %v2074 = vmul.f32 %v2034, 1.442695
    %v2075 = vpow.pop %v2074
    %v2076 = vmul.f32 %v2035, 1.442695
    %v2077 = vpow.pop %v2076
    %2080 = vrot.lane.b32.xlu0 %v2046, 8
    %v2081 = vpop.permute.xlu0 %2080
    %2082 = vrot.lane.b32.xlu0 %v2075, 8
    %v2083 = vpop.permute.xlu0 %2082
    %2084 = vrot.lane.b32.xlu0 %v2077, 8
    %v2085 = vpop.permute.xlu0 %2084
    %v2086 = vsel %vm151, %v2081, %v2083
    %v2087 = vsel %vm151, %v2083, %v2085
    %v2091 = vmul.f32 %v1045, %v2081
    %v2092 = vmul.f32 %v1046, %v2086
    %v2093 = vmul.f32 %v1047, %v2087
    %v2094 = vadd.f32 %v2091, %v1954
    %v2095 = vadd.f32 %v2092, %v1956
    %v2096 = vadd.f32 %v2093, %v2025
    %2097 = vrot.lane.b32.xlu0 %v1044, 120
    %v2098 = vpop.permute.xlu0 %2097
    %2099 = vrot.lane.b32.xlu0 %v1045, 120
    %v2100 = vpop.permute.xlu0 %2099
    %vm2101 = vcmask 982016
    %v2102 = vsel %vm2101, %v2098, %v2100
    %2108 = vrot.lane.b32.xlu0 %v2094, 120
    %v2109 = vpop.permute.xlu0 %2108
    %2110 = vrot.lane.b32.xlu0 %v2095, 120
    %v2111 = vpop.permute.xlu0 %2110
    %2112 = vrot.lane.b32.xlu0 %v2096, 120
    %v2113 = vpop.permute.xlu0 %2112
    %v2114 = vsel %vm2101, %v2109, %v2111
    %v2115 = vsel %vm2101, %v2111, %v2113
    %v2119 = vsel %vm1058, %v2100, %v2114
    %s2120 = scalar_lea.vmem %s3, 8
    %v2121 = vld [vmem:[%s2120] sm:$0xf]
    %s2122 = scalar_lea.vmem %s0, 1568
    %v2123 = vld [vmem:[%s2122] sm:$0xff]
    %v2124 = vld [vmem:[%s2122 + $0x8] sm:$0xff]
    %v2125 = vld [vmem:[%s2122 + $0x10] sm:$0xff]
    %v2126 = vld [vmem:[%s2122 + $0x18] sm:$0xff]
    %v2127 = vld [vmem:[%s2122 + $0x20] sm:$0xff]
    %v2128 = vld [vmem:[%s2122 + $0x28] sm:$0xff]
    %v2129 = vld [vmem:[%s2122 + $0x30] sm:$0xff]
    %v2130 = vld [vmem:[%s2122 + $0x38] sm:$0xff]
    %v2131 = vld [vmem:[%s2122 + $0x40] sm:$0xff]
    %v2132 = vld [vmem:[%s2122 + $0x48] sm:$0xff]
    %v2133 = vld [vmem:[%s2122 + $0x50] sm:$0xff]
    %v2134 = vld [vmem:[%s2122 + $0x58] sm:$0xff]
    %v2135 = vld [vmem:[%s2122 + $0x60] sm:$0xff]
    %v2136 = vld [vmem:[%s2122 + $0x68] sm:$0xff]
    %v2137 = vld [vmem:[%s2122 + $0x70] sm:$0xff]
    %v2138 = vld [vmem:[%s2122 + $0x78] sm:$0xff]
    %v2139 = vld [vmem:[%s2122 + $0x80] sm:$0xff]
    %v2140 = vld [vmem:[%s2122 + $0x88] sm:$0xff]
    %v2141 = vld [vmem:[%s2122 + $0x90] sm:$0xff]
    %v2142 = vld [vmem:[%s2122 + $0x98] sm:$0xff]
    %v2143 = vld [vmem:[%s2122 + $0xa0] sm:$0xff]
    %v2144 = vld [vmem:[%s2122 + $0xa8] sm:$0xff]
    %v2145 = vld [vmem:[%s2122 + $0xb0] sm:$0xff]
    %v2146 = vld [vmem:[%s2122 + $0xb8] sm:$0xff]
    %v2147 = vld [vmem:[%s2122 + $0xc0] sm:$0xff]
    %v2148 = vld [vmem:[%s2122 + $0xc8] sm:$0xff]
    %v2149 = vld [vmem:[%s2122 + $0xd0] sm:$0xff]
    %v2150 = vld [vmem:[%s2122 + $0xd8] sm:$0xff]
    %v2151 = vld [vmem:[%s2122 + $0xe0] sm:$0xff]
    %v2152 = vld [vmem:[%s2122 + $0xe8] sm:$0xff]
    %v2153 = vld [vmem:[%s2122 + $0xf0] sm:$0xff]
    %v2154 = vld [vmem:[%s2122 + $0xf8] sm:$0xff]
    %v2155 = vld [vmem:[%s2122 + $0x100] sm:$0xff]
    %v2156 = vld [vmem:[%s2122 + $0x108] sm:$0xff]
    %v2157 = vld [vmem:[%s2122 + $0x110] sm:$0xff]
    %v2158 = vld [vmem:[%s2122 + $0x118] sm:$0xff]
    %v2159 = vld [vmem:[%s2122 + $0x120] sm:$0xff]
    %v2160 = vld [vmem:[%s2122 + $0x128] sm:$0xff]
    %v2161 = vld [vmem:[%s2122 + $0x130] sm:$0xff]
    %v2162 = vld [vmem:[%s2122 + $0x138] sm:$0xff]
    %v2163 = vld [vmem:[%s2122 + $0x140] sm:$0xff]
    %v2164 = vld [vmem:[%s2122 + $0x148] sm:$0xff]
    %v2165 = vld [vmem:[%s2122 + $0x150] sm:$0xff]
    %v2166 = vld [vmem:[%s2122 + $0x158] sm:$0xff]
    %v2167 = vld [vmem:[%s2122 + $0x160] sm:$0xff]
    %v2168 = vld [vmem:[%s2122 + $0x168] sm:$0xff]
    %v2169 = vld [vmem:[%s2122 + $0x170] sm:$0xff]
    %v2170 = vld [vmem:[%s2122 + $0x178] sm:$0xff]
    %v2171 = vld [vmem:[%s2122 + $0x180] sm:$0xff]
    %v2172 = vld [vmem:[%s2122 + $0x188] sm:$0xff]
    %v2173 = vld [vmem:[%s2122 + $0x190] sm:$0xff]
    %v2174 = vld [vmem:[%s2122 + $0x198] sm:$0xff]
    %v2175 = vld [vmem:[%s2122 + $0x1a0] sm:$0xff]
    %v2176 = vld [vmem:[%s2122 + $0x1a8] sm:$0xff]
    %v2177 = vld [vmem:[%s2122 + $0x1b0] sm:$0xff]
    %v2178 = vld [vmem:[%s2122 + $0x1b8] sm:$0xff]
    %v2179 = vld [vmem:[%s2122 + $0x1c0] sm:$0xff]
    %v2180 = vld [vmem:[%s2122 + $0x1c8] sm:$0xff]
    %v2181 = vld [vmem:[%s2122 + $0x1d0] sm:$0xff]
    %v2182 = vld [vmem:[%s2122 + $0x1d8] sm:$0xff]
    %v2183 = vld [vmem:[%s2122 + $0x1e0] sm:$0xff]
    %v2184 = vld [vmem:[%s2122 + $0x1e8] sm:$0xff]
    %v2185 = vld [vmem:[%s2122 + $0x1f0] sm:$0xff]
    %v2186 = vld [vmem:[%s2122 + $0x1f8] sm:$0xff]
    %v2187 = vld [vmem:[%s2122 + $0x200] sm:$0xff]
    %v2188 = vld [vmem:[%s2122 + $0x208] sm:$0xff]
    %v2189 = vld [vmem:[%s2122 + $0x210] sm:$0xff]
    %v2190 = vld [vmem:[%s2122 + $0x218] sm:$0xff]
    %v2191 = vld [vmem:[%s2122 + $0x220] sm:$0xff]
    %v2192 = vld [vmem:[%s2122 + $0x228] sm:$0xff]
    %v2193 = vld [vmem:[%s2122 + $0x230] sm:$0xff]
    %v2194 = vld [vmem:[%s2122 + $0x238] sm:$0xff]
    %v2195 = vld [vmem:[%s2122 + $0x240] sm:$0xff]
    %v2196 = vld [vmem:[%s2122 + $0x248] sm:$0xff]
    %v2197 = vld [vmem:[%s2122 + $0x250] sm:$0xff]
    %v2198 = vld [vmem:[%s2122 + $0x258] sm:$0xff]
    %v2199 = vld [vmem:[%s2122 + $0x260] sm:$0xff]
    %v2200 = vld [vmem:[%s2122 + $0x268] sm:$0xff]
    %v2201 = vld [vmem:[%s2122 + $0x270] sm:$0xff]
    %v2202 = vld [vmem:[%s2122 + $0x278] sm:$0xff]
    %v2203 = vld [vmem:[%s2122 + $0x280] sm:$0xff]
    %v2204 = vld [vmem:[%s2122 + $0x288] sm:$0xff]
    %v2205 = vld [vmem:[%s2122 + $0x290] sm:$0xff]
    %v2206 = vld [vmem:[%s2122 + $0x298] sm:$0xff]
    %v2207 = vld [vmem:[%s2122 + $0x2a0] sm:$0xff]
    %v2208 = vld [vmem:[%s2122 + $0x2a8] sm:$0xff]
    %v2209 = vld [vmem:[%s2122 + $0x2b0] sm:$0xff]
    %v2210 = vld [vmem:[%s2122 + $0x2b8] sm:$0xff]
    %v2211 = vld [vmem:[%s2122 + $0x2c0] sm:$0xff]
    %v2212 = vld [vmem:[%s2122 + $0x2c8] sm:$0xff]
    %v2213 = vld [vmem:[%s2122 + $0x2d0] sm:$0xff]
    %v2214 = vld [vmem:[%s2122 + $0x2d8] sm:$0xff]
    %v2215 = vld [vmem:[%s2122 + $0x2e0] sm:$0xff]
    %v2216 = vld [vmem:[%s2122 + $0x2e8] sm:$0xff]
    %v2217 = vld [vmem:[%s2122 + $0x2f0] sm:$0xff]
    %v2218 = vld [vmem:[%s2122 + $0x2f8] sm:$0xff]
    %v2219 = vld [vmem:[%s2122 + $0x300] sm:$0xff]
    %v2220 = vld [vmem:[%s2122 + $0x308] sm:$0xff]
    %v2222 = vlaneseq
    %v2223 = vshrl.u32 %v2222, 7
    %v2224 = vsub.s32 0, %v2223
    %v2225 = vrot.slane %v2121, %v2224
    %v2226 = vlaneseq
    %v2227 = vshrl.u32 %v2226, 7
    %v2228 = vsub.s32 2, %v2227
    %v2229 = vrot.slane %v2121, %v2228
    %v2232 = vlaneseq
    %v2233 = vshrl.u32 %v2232, 7
    %v2234 = vsub.s32 0, %v2233
    %v2235 = vrot.slane %v2225, %v2234
    %v2236 = vlaneseq
    %v2237 = vshrl.u32 %v2236, 7
    %v2238 = vsub.s32 0, %v2237
    %v2239 = vrot.slane %v2229, %v2238
    %v2241 = vsel %vm151, %v2072, 0
    %2243 = vmatprep.subr.mxu0 %v2154
    %2244 = vmatpush1.msra.mxu0 %v2153
    %2245 = vmatprep.subr.mxu0 %v2152
    %2246 = vmatpush1.msra.mxu0 %v2151
    %2247 = vmatprep.subr.mxu0 %v2150
    %2248 = vmatpush1.msra.mxu0 %v2149
    %2249 = vmatprep.subr.mxu0 %v2148
    %2250 = vmatpush1.msra.mxu0 %v2147
    %2251 = vmatprep.subr.mxu0 %v2146
    %2252 = vmatpush1.msra.mxu0 %v2145
    %2253 = vmatprep.subr.mxu0 %v2144
    %2254 = vmatpush1.msra.mxu0 %v2143
    %2255 = vmatprep.subr.mxu0 %v2142
    %2256 = vmatpush1.msra.mxu0 %v2141
    %2257 = vmatprep.subr.mxu0 %v2140
    %2258 = vmatpush1.msra.mxu0 %v2139
    %2259 = vmatprep.subr.mxu0 %v2138
    %2260 = vmatpush1.msra.mxu0 %v2137
    %2261 = vmatprep.subr.mxu0 %v2136
    %2262 = vmatpush1.msra.mxu0 %v2135
    %2263 = vmatprep.subr.mxu0 %v2134
    %2264 = vmatpush1.msra.mxu0 %v2133
    %2265 = vmatprep.subr.mxu0 %v2132
    %2266 = vmatpush1.msra.mxu0 %v2131
    %2267 = vmatprep.subr.mxu0 %v2130
    %2268 = vmatpush1.msra.mxu0 %v2129
    %2269 = vmatprep.subr.mxu0 %v2128
    %2270 = vmatpush1.msra.mxu0 %v2127
    %2271 = vmatprep.subr.mxu0 %v2126
    %2272 = vmatpush1.msra.mxu0 %v2125
    %2273 = vmatprep.subr.mxu0 %v2124
    %2274 = vmatpush1.msra.mxu0 %v2123
    %2275 = vmatprep.subr.mxu0 %v2186
    %2276 = vmatpush2.msra.mxu0 %v2185
    %2277 = vmatprep.subr.mxu0 %v2184
    %2278 = vmatpush2.msra.mxu0 %v2183
    %2279 = vmatprep.subr.mxu0 %v2182
    %2280 = vmatpush2.msra.mxu0 %v2181
    %2281 = vmatprep.subr.mxu0 %v2180
    %2282 = vmatpush2.msra.mxu0 %v2179
    %2283 = vmatprep.subr.mxu0 %v2178
    %2284 = vmatpush2.msra.mxu0 %v2177
    %2285 = vmatprep.subr.mxu0 %v2176
    %2286 = vmatpush2.msra.mxu0 %v2175
    %2287 = vmatprep.subr.mxu0 %v2174
    %2288 = vmatpush2.msra.mxu0 %v2173
    %2289 = vmatprep.subr.mxu0 %v2172
    %2290 = vmatpush2.msra.mxu0 %v2171
    %2291 = vmatprep.subr.mxu0 %v2170
    %2292 = vmatpush2.msra.mxu0 %v2169
    %2293 = vmatprep.subr.mxu0 %v2168
    %2294 = vmatpush2.msra.mxu0 %v2167
    %2295 = vmatprep.subr.mxu0 %v2166
    %2296 = vmatpush2.msra.mxu0 %v2165
    %2297 = vmatprep.subr.mxu0 %v2164
    %2298 = vmatpush2.msra.mxu0 %v2163
    %2299 = vmatprep.subr.mxu0 %v2162
    %2300 = vmatpush2.msra.mxu0 %v2161
    %2301 = vmatprep.subr.mxu0 %v2160
    %2302 = vmatpush2.msra.mxu0 %v2159
    %2303 = vmatprep.subr.mxu0 %v2158
    %2304 = vmatpush2.msra.mxu0 %v2157
    %2305 = vmatprep.subr.mxu0 %v2156
    %2306 = vmatpush2.msra.mxu0 %v2155
    %2307 = vmatprep.mubr.f32.mxu0 %v2073
    %2308 = vmatmul.mubr.f32.gmra.mxu0 %v26
    %v2309 = vpop.f32.mrf.mxu0
    %v2310 = vadd.f32 %v2235, %v2309
    %v2311 = vpop.f32.mrf.mxu0
    %v2312 = vadd.f32 %v2239, %v2311
    %2313 = vdwg.mxu0
    %2314 = vmatprep.subr.mxu0 %v2218
    %2315 = vmatpush1.msra.mxu0 %v2217
    %2316 = vmatprep.subr.mxu0 %v2216
    %2317 = vmatpush1.msra.mxu0 %v2215
    %2318 = vmatprep.subr.mxu0 %v2214
    %2319 = vmatpush1.msra.mxu0 %v2213
    %2320 = vmatprep.subr.mxu0 %v2212
    %2321 = vmatpush1.msra.mxu0 %v2211
    %2322 = vmatprep.subr.mxu0 %v2210
    %2323 = vmatpush1.msra.mxu0 %v2209
    %2324 = vmatprep.subr.mxu0 %v2208
    %2325 = vmatpush1.msra.mxu0 %v2207
    %2326 = vmatprep.subr.mxu0 %v2206
    %2327 = vmatpush1.msra.mxu0 %v2205
    %2328 = vmatprep.subr.mxu0 %v2204
    %2329 = vmatpush1.msra.mxu0 %v2203
    %2330 = vmatprep.subr.mxu0 %v2202
    %2331 = vmatpush1.msra.mxu0 %v2201
    %2332 = vmatprep.subr.mxu0 %v2200
    %2333 = vmatpush1.msra.mxu0 %v2199
    %2334 = vmatprep.subr.mxu0 %v2198
    %2335 = vmatpush1.msra.mxu0 %v2197
    %2336 = vmatprep.subr.mxu0 %v2196
    %2337 = vmatpush1.msra.mxu0 %v2195
    %2338 = vmatprep.subr.mxu0 %v2194
    %2339 = vmatpush1.msra.mxu0 %v2193
    %2340 = vmatprep.subr.mxu0 %v2192
    %2341 = vmatpush1.msra.mxu0 %v2191
    %2342 = vmatprep.subr.mxu0 %v2190
    %2343 = vmatpush1.msra.mxu0 %v2189
    %2344 = vmatprep.subr.mxu0 %v2188
    %2345 = vmatpush1.msra.mxu0 %v2187
    %2346 = vmatprep.subr.mxu0 0.0
    %2347 = vmatpush2.msra.mxu0 0.0
    %2348 = vmatprep.subr.mxu0 0.0
    %2349 = vmatpush2.msra.mxu0 0.0
    %2350 = vmatprep.subr.mxu0 0.0
    %2351 = vmatpush2.msra.mxu0 0.0
    %2352 = vmatprep.subr.mxu0 0.0
    %2353 = vmatpush2.msra.mxu0 0.0
    %2354 = vmatprep.subr.mxu0 0.0
    %2355 = vmatpush2.msra.mxu0 0.0
    %2356 = vmatprep.subr.mxu0 0.0
    %2357 = vmatpush2.msra.mxu0 0.0
    %2358 = vmatprep.subr.mxu0 0.0
    %2359 = vmatpush2.msra.mxu0 0.0
    %2360 = vmatprep.subr.mxu0 0.0
    %2361 = vmatpush2.msra.mxu0 0.0
    %2362 = vmatprep.subr.mxu0 0.0
    %2363 = vmatpush2.msra.mxu0 0.0
    %2364 = vmatprep.subr.mxu0 0.0
    %2365 = vmatpush2.msra.mxu0 0.0
    %2366 = vmatprep.subr.mxu0 0.0
    %2367 = vmatpush2.msra.mxu0 0.0
    %2368 = vmatprep.subr.mxu0 0.0
    %2369 = vmatpush2.msra.mxu0 0.0
    %2370 = vmatprep.subr.mxu0 0.0
    %2371 = vmatpush2.msra.mxu0 0.0
    %2372 = vmatprep.subr.mxu0 0.0
    %2373 = vmatpush2.msra.mxu0 0.0
    %2374 = vmatprep.subr.mxu0 0.0
    %2375 = vmatpush2.msra.mxu0 0.0
    %2376 = vmatprep.subr.mxu0 %v2220
    %2377 = vmatpush2.msra.mxu0 %v2219
    %2378 = vmatprep.mubr.f32.mxu0 %v2241
    %2379 = vmatmul.mubr.f32.gmra.mxu0 %v2071
    %v2380 = vpop.f32.mrf.mxu0
    %v2381 = vadd.f32 %v2310, %v2380
    %v2382 = vpop.f32.mrf.mxu0
    %v2383 = vadd.f32 %v2312, %v2382
    %2384 = vdwg.mxu0
    %v2385 = vmax.f32 %v2381, 0.0
    %v2386 = vmax.f32 %v2383, 0.0
    %s2387 = scalar_lea.vmem %s1, 1024
    %v2388 = vld [vmem:[%s2387] sm:$0xff]
    %v2389 = vld [vmem:[%s2387 + $0x8] sm:$0xff]
    %v2390 = vld [vmem:[%s2387 + $0x10] sm:$0xff]
    %v2391 = vld [vmem:[%s2387 + $0x18] sm:$0xff]
    %v2392 = vld [vmem:[%s2387 + $0x20] sm:$0xff]
    %v2393 = vld [vmem:[%s2387 + $0x28] sm:$0xff]
    %v2394 = vld [vmem:[%s2387 + $0x30] sm:$0xff]
    %v2395 = vld [vmem:[%s2387 + $0x38] sm:$0xff]
    %v2396 = vld [vmem:[%s2387 + $0x40] sm:$0xff]
    %v2397 = vld [vmem:[%s2387 + $0x48] sm:$0xff]
    %v2398 = vld [vmem:[%s2387 + $0x50] sm:$0xff]
    %v2399 = vld [vmem:[%s2387 + $0x58] sm:$0xff]
    %v2400 = vld [vmem:[%s2387 + $0x60] sm:$0xff]
    %v2401 = vld [vmem:[%s2387 + $0x68] sm:$0xff]
    %v2402 = vld [vmem:[%s2387 + $0x70] sm:$0xff]
    %v2403 = vld [vmem:[%s2387 + $0x78] sm:$0xff]
    %v2404 = vld [vmem:[%s2387 + $0x80] sm:$0xff]
    %v2405 = vld [vmem:[%s2387 + $0x88] sm:$0xff]
    %v2406 = vld [vmem:[%s2387 + $0x90] sm:$0xff]
    %v2407 = vld [vmem:[%s2387 + $0x98] sm:$0xff]
    %v2408 = vld [vmem:[%s2387 + $0xa0] sm:$0xff]
    %v2409 = vld [vmem:[%s2387 + $0xa8] sm:$0xff]
    %v2410 = vld [vmem:[%s2387 + $0xb0] sm:$0xff]
    %v2411 = vld [vmem:[%s2387 + $0xb8] sm:$0xff]
    %v2412 = vld [vmem:[%s2387 + $0xc0] sm:$0xff]
    %v2413 = vld [vmem:[%s2387 + $0xc8] sm:$0xff]
    %v2414 = vld [vmem:[%s2387 + $0xd0] sm:$0xff]
    %v2415 = vld [vmem:[%s2387 + $0xd8] sm:$0xff]
    %v2416 = vld [vmem:[%s2387 + $0xe0] sm:$0xff]
    %v2417 = vld [vmem:[%s2387 + $0xe8] sm:$0xff]
    %v2418 = vld [vmem:[%s2387 + $0xf0] sm:$0xff]
    %v2419 = vld [vmem:[%s2387 + $0xf8] sm:$0xff]
    %v2420 = vld [vmem:[%s2387 + $0x100] sm:$0xff]
    %v2421 = vld [vmem:[%s2387 + $0x108] sm:$0xff]
    %v2422 = vld [vmem:[%s2387 + $0x110] sm:$0xff]
    %v2423 = vld [vmem:[%s2387 + $0x118] sm:$0xff]
    %v2424 = vld [vmem:[%s2387 + $0x120] sm:$0xff]
    %v2425 = vld [vmem:[%s2387 + $0x128] sm:$0xff]
    %v2426 = vld [vmem:[%s2387 + $0x130] sm:$0xff]
    %v2427 = vld [vmem:[%s2387 + $0x138] sm:$0xff]
    %v2428 = vld [vmem:[%s2387 + $0x140] sm:$0xff]
    %v2429 = vld [vmem:[%s2387 + $0x148] sm:$0xff]
    %v2430 = vld [vmem:[%s2387 + $0x150] sm:$0xff]
    %v2431 = vld [vmem:[%s2387 + $0x158] sm:$0xff]
    %v2432 = vld [vmem:[%s2387 + $0x160] sm:$0xff]
    %v2433 = vld [vmem:[%s2387 + $0x168] sm:$0xff]
    %v2434 = vld [vmem:[%s2387 + $0x170] sm:$0xff]
    %v2435 = vld [vmem:[%s2387 + $0x178] sm:$0xff]
    %v2436 = vld [vmem:[%s2387 + $0x180] sm:$0xff]
    %v2437 = vld [vmem:[%s2387 + $0x188] sm:$0xff]
    %v2438 = vld [vmem:[%s2387 + $0x190] sm:$0xff]
    %v2439 = vld [vmem:[%s2387 + $0x198] sm:$0xff]
    %v2440 = vld [vmem:[%s2387 + $0x1a0] sm:$0xff]
    %v2441 = vld [vmem:[%s2387 + $0x1a8] sm:$0xff]
    %v2442 = vld [vmem:[%s2387 + $0x1b0] sm:$0xff]
    %v2443 = vld [vmem:[%s2387 + $0x1b8] sm:$0xff]
    %v2444 = vld [vmem:[%s2387 + $0x1c0] sm:$0xff]
    %v2445 = vld [vmem:[%s2387 + $0x1c8] sm:$0xff]
    %v2446 = vld [vmem:[%s2387 + $0x1d0] sm:$0xff]
    %v2447 = vld [vmem:[%s2387 + $0x1d8] sm:$0xff]
    %v2448 = vld [vmem:[%s2387 + $0x1e0] sm:$0xff]
    %v2449 = vld [vmem:[%s2387 + $0x1e8] sm:$0xff]
    %v2450 = vld [vmem:[%s2387 + $0x1f0] sm:$0xff]
    %v2451 = vld [vmem:[%s2387 + $0x1f8] sm:$0xff]
    %v2452 = vlaneseq
    %v2453 = vshrl.u32 %v2452, 7
    %v2454 = vsub.s32 1, %v2453
    %v2455 = vrot.slane %v2121, %v2454
    %v2456 = vlaneseq
    %v2457 = vshrl.u32 %v2456, 7
    %v2458 = vsub.s32 3, %v2457
    %v2459 = vrot.slane %v2121, %v2458
    %v2462 = vlaneseq
    %v2463 = vshrl.u32 %v2462, 7
    %v2464 = vsub.s32 1, %v2463
    %v2465 = vrot.slane %v2455, %v2464
    %v2466 = vlaneseq
    %v2467 = vshrl.u32 %v2466, 7
    %v2468 = vsub.s32 1, %v2467
    %v2469 = vrot.slane %v2459, %v2468
    %2470 = vmatprep.subr.mxu0 %v2419
    %2471 = vmatpush1.msra.mxu0 %v2418
    %2472 = vmatprep.subr.mxu0 %v2417
    %2473 = vmatpush1.msra.mxu0 %v2416
    %2474 = vmatprep.subr.mxu0 %v2415
    %2475 = vmatpush1.msra.mxu0 %v2414
    %2476 = vmatprep.subr.mxu0 %v2413
    %2477 = vmatpush1.msra.mxu0 %v2412
    %2478 = vmatprep.subr.mxu0 %v2411
    %2479 = vmatpush1.msra.mxu0 %v2410
    %2480 = vmatprep.subr.mxu0 %v2409
    %2481 = vmatpush1.msra.mxu0 %v2408
    %2482 = vmatprep.subr.mxu0 %v2407
    %2483 = vmatpush1.msra.mxu0 %v2406
    %2484 = vmatprep.subr.mxu0 %v2405
    %2485 = vmatpush1.msra.mxu0 %v2404
    %2486 = vmatprep.subr.mxu0 %v2403
    %2487 = vmatpush1.msra.mxu0 %v2402
    %2488 = vmatprep.subr.mxu0 %v2401
    %2489 = vmatpush1.msra.mxu0 %v2400
    %2490 = vmatprep.subr.mxu0 %v2399
    %2491 = vmatpush1.msra.mxu0 %v2398
    %2492 = vmatprep.subr.mxu0 %v2397
    %2493 = vmatpush1.msra.mxu0 %v2396
    %2494 = vmatprep.subr.mxu0 %v2395
    %2495 = vmatpush1.msra.mxu0 %v2394
    %2496 = vmatprep.subr.mxu0 %v2393
    %2497 = vmatpush1.msra.mxu0 %v2392
    %2498 = vmatprep.subr.mxu0 %v2391
    %2499 = vmatpush1.msra.mxu0 %v2390
    %2500 = vmatprep.subr.mxu0 %v2389
    %2501 = vmatpush1.msra.mxu0 %v2388
    %2502 = vmatprep.subr.mxu0 %v2451
    %2503 = vmatpush2.msra.mxu0 %v2450
    %2504 = vmatprep.subr.mxu0 %v2449
    %2505 = vmatpush2.msra.mxu0 %v2448
    %2506 = vmatprep.subr.mxu0 %v2447
    %2507 = vmatpush2.msra.mxu0 %v2446
    %2508 = vmatprep.subr.mxu0 %v2445
    %2509 = vmatpush2.msra.mxu0 %v2444
    %2510 = vmatprep.subr.mxu0 %v2443
    %2511 = vmatpush2.msra.mxu0 %v2442
    %2512 = vmatprep.subr.mxu0 %v2441
    %2513 = vmatpush2.msra.mxu0 %v2440
    %2514 = vmatprep.subr.mxu0 %v2439
    %2515 = vmatpush2.msra.mxu0 %v2438
    %2516 = vmatprep.subr.mxu0 %v2437
    %2517 = vmatpush2.msra.mxu0 %v2436
    %2518 = vmatprep.subr.mxu0 %v2435
    %2519 = vmatpush2.msra.mxu0 %v2434
    %2520 = vmatprep.subr.mxu0 %v2433
    %2521 = vmatpush2.msra.mxu0 %v2432
    %2522 = vmatprep.subr.mxu0 %v2431
    %2523 = vmatpush2.msra.mxu0 %v2430
    %2524 = vmatprep.subr.mxu0 %v2429
    %2525 = vmatpush2.msra.mxu0 %v2428
    %2526 = vmatprep.subr.mxu0 %v2427
    %2527 = vmatpush2.msra.mxu0 %v2426
    %2528 = vmatprep.subr.mxu0 %v2425
    %2529 = vmatpush2.msra.mxu0 %v2424
    %2530 = vmatprep.subr.mxu0 %v2423
    %2531 = vmatpush2.msra.mxu0 %v2422
    %2532 = vmatprep.subr.mxu0 %v2421
    %2533 = vmatpush2.msra.mxu0 %v2420
    %2534 = vmatprep.mubr.f32.mxu0 %v2386
    %2535 = vmatmul.mubr.f32.gmra.mxu0 %v2385
    %v2536 = vpop.f32.mrf.mxu0
    %v2537 = vadd.f32 %v2465, %v2536
    %v2538 = vpop.f32.mrf.mxu0
    %v2539 = vadd.f32 %v2469, %v2538
    %2540 = vdwg.mxu0
    %v2541 = vmax.f32 %v2537, 0.0
    %v2542 = vmax.f32 %v2539, 0.0
    %s2543 = scalar_lea.vmem %s2, 3584
    %v2544 = vld [vmem:[%s2543] sm:$0xff]
    %v2545 = vld [vmem:[%s2543 + $0x8] sm:$0xff]
    %v2546 = vld [vmem:[%s2543 + $0x10] sm:$0xff]
    %v2547 = vld [vmem:[%s2543 + $0x18] sm:$0xff]
    %v2548 = vld [vmem:[%s2543 + $0x20] sm:$0xff]
    %v2549 = vld [vmem:[%s2543 + $0x28] sm:$0xff]
    %v2550 = vld [vmem:[%s2543 + $0x30] sm:$0xff]
    %v2551 = vld [vmem:[%s2543 + $0x38] sm:$0xff]
    %v2552 = vld [vmem:[%s2543 + $0x40] sm:$0xff]
    %v2553 = vld [vmem:[%s2543 + $0x48] sm:$0xff]
    %v2554 = vld [vmem:[%s2543 + $0x50] sm:$0xff]
    %v2555 = vld [vmem:[%s2543 + $0x58] sm:$0xff]
    %v2556 = vld [vmem:[%s2543 + $0x60] sm:$0xff]
    %v2557 = vld [vmem:[%s2543 + $0x68] sm:$0xff]
    %v2558 = vld [vmem:[%s2543 + $0x70] sm:$0xff]
    %v2559 = vld [vmem:[%s2543 + $0x78] sm:$0xff]
    %v2560 = vld [vmem:[%s2543 + $0x80] sm:$0xff]
    %v2561 = vld [vmem:[%s2543 + $0x88] sm:$0xff]
    %v2562 = vld [vmem:[%s2543 + $0x90] sm:$0xff]
    %v2563 = vld [vmem:[%s2543 + $0x98] sm:$0xff]
    %v2564 = vld [vmem:[%s2543 + $0xa0] sm:$0xff]
    %v2565 = vld [vmem:[%s2543 + $0xa8] sm:$0xff]
    %v2566 = vld [vmem:[%s2543 + $0xb0] sm:$0xff]
    %v2567 = vld [vmem:[%s2543 + $0xb8] sm:$0xff]
    %v2568 = vld [vmem:[%s2543 + $0xc0] sm:$0xff]
    %v2569 = vld [vmem:[%s2543 + $0xc8] sm:$0xff]
    %v2570 = vld [vmem:[%s2543 + $0xd0] sm:$0xff]
    %v2571 = vld [vmem:[%s2543 + $0xd8] sm:$0xff]
    %v2572 = vld [vmem:[%s2543 + $0xe0] sm:$0xff]
    %v2573 = vld [vmem:[%s2543 + $0xe8] sm:$0xff]
    %v2574 = vld [vmem:[%s2543 + $0xf0] sm:$0xff]
    %v2575 = vld [vmem:[%s2543 + $0xf8] sm:$0xff]
    %v2576 = vld [vmem:[%s2543 + $0x100] sm:$0xff]
    %v2577 = vld [vmem:[%s2543 + $0x108] sm:$0xff]
    %v2578 = vld [vmem:[%s2543 + $0x110] sm:$0xff]
    %v2579 = vld [vmem:[%s2543 + $0x118] sm:$0xff]
    %v2580 = vld [vmem:[%s2543 + $0x120] sm:$0xff]
    %v2581 = vld [vmem:[%s2543 + $0x128] sm:$0xff]
    %v2582 = vld [vmem:[%s2543 + $0x130] sm:$0xff]
    %v2583 = vld [vmem:[%s2543 + $0x138] sm:$0xff]
    %v2584 = vld [vmem:[%s2543 + $0x140] sm:$0xff]
    %v2585 = vld [vmem:[%s2543 + $0x148] sm:$0xff]
    %v2586 = vld [vmem:[%s2543 + $0x150] sm:$0xff]
    %v2587 = vld [vmem:[%s2543 + $0x158] sm:$0xff]
    %v2588 = vld [vmem:[%s2543 + $0x160] sm:$0xff]
    %v2589 = vld [vmem:[%s2543 + $0x168] sm:$0xff]
    %v2590 = vld [vmem:[%s2543 + $0x170] sm:$0xff]
    %v2591 = vld [vmem:[%s2543 + $0x178] sm:$0xff]
    %v2592 = vld [vmem:[%s2543 + $0x180] sm:$0xff]
    %v2593 = vld [vmem:[%s2543 + $0x188] sm:$0xff]
    %v2594 = vld [vmem:[%s2543 + $0x190] sm:$0xff]
    %v2595 = vld [vmem:[%s2543 + $0x198] sm:$0xff]
    %v2596 = vld [vmem:[%s2543 + $0x1a0] sm:$0xff]
    %v2597 = vld [vmem:[%s2543 + $0x1a8] sm:$0xff]
    %v2598 = vld [vmem:[%s2543 + $0x1b0] sm:$0xff]
    %v2599 = vld [vmem:[%s2543 + $0x1b8] sm:$0xff]
    %v2600 = vld [vmem:[%s2543 + $0x1c0] sm:$0xff]
    %v2601 = vld [vmem:[%s2543 + $0x1c8] sm:$0xff]
    %v2602 = vld [vmem:[%s2543 + $0x1d0] sm:$0xff]
    %v2603 = vld [vmem:[%s2543 + $0x1d8] sm:$0xff]
    %v2604 = vld [vmem:[%s2543 + $0x1e0] sm:$0xff]
    %v2605 = vld [vmem:[%s2543 + $0x1e8] sm:$0xff]
    %v2606 = vld [vmem:[%s2543 + $0x1f0] sm:$0xff]
    %v2607 = vld [vmem:[%s2543 + $0x1f8] sm:$0xff]
    %v2608 = vld [vmem:[%s2543 + $0x200] sm:$0xff]
    %v2609 = vld [vmem:[%s2543 + $0x208] sm:$0xff]
    %v2610 = vld [vmem:[%s2543 + $0x210] sm:$0xff]
    %v2611 = vld [vmem:[%s2543 + $0x218] sm:$0xff]
    %v2612 = vld [vmem:[%s2543 + $0x220] sm:$0xff]
    %v2613 = vld [vmem:[%s2543 + $0x228] sm:$0xff]
    %v2614 = vld [vmem:[%s2543 + $0x230] sm:$0xff]
    %v2615 = vld [vmem:[%s2543 + $0x238] sm:$0xff]
    %v2616 = vld [vmem:[%s2543 + $0x240] sm:$0xff]
    %v2617 = vld [vmem:[%s2543 + $0x248] sm:$0xff]
    %v2618 = vld [vmem:[%s2543 + $0x250] sm:$0xff]
    %v2619 = vld [vmem:[%s2543 + $0x258] sm:$0xff]
    %v2620 = vld [vmem:[%s2543 + $0x260] sm:$0xff]
    %v2621 = vld [vmem:[%s2543 + $0x268] sm:$0xff]
    %v2622 = vld [vmem:[%s2543 + $0x270] sm:$0xff]
    %v2623 = vld [vmem:[%s2543 + $0x278] sm:$0xff]
    %v2624 = vld [vmem:[%s2543 + $0x280] sm:$0xff]
    %v2625 = vld [vmem:[%s2543 + $0x288] sm:$0xff]
    %v2626 = vld [vmem:[%s2543 + $0x290] sm:$0xff]
    %v2627 = vld [vmem:[%s2543 + $0x298] sm:$0xff]
    %v2628 = vld [vmem:[%s2543 + $0x2a0] sm:$0xff]
    %v2629 = vld [vmem:[%s2543 + $0x2a8] sm:$0xff]
    %v2630 = vld [vmem:[%s2543 + $0x2b0] sm:$0xff]
    %v2631 = vld [vmem:[%s2543 + $0x2b8] sm:$0xff]
    %v2632 = vld [vmem:[%s2543 + $0x2c0] sm:$0xff]
    %v2633 = vld [vmem:[%s2543 + $0x2c8] sm:$0xff]
    %v2634 = vld [vmem:[%s2543 + $0x2d0] sm:$0xff]
    %v2635 = vld [vmem:[%s2543 + $0x2d8] sm:$0xff]
    %v2636 = vld [vmem:[%s2543 + $0x2e0] sm:$0xff]
    %v2637 = vld [vmem:[%s2543 + $0x2e8] sm:$0xff]
    %v2638 = vld [vmem:[%s2543 + $0x2f0] sm:$0xff]
    %v2639 = vld [vmem:[%s2543 + $0x2f8] sm:$0xff]
    %v2640 = vld [vmem:[%s2543 + $0x300] sm:$0xff]
    %v2641 = vld [vmem:[%s2543 + $0x308] sm:$0xff]
    %v2642 = vld [vmem:[%s2543 + $0x310] sm:$0xff]
    %v2643 = vld [vmem:[%s2543 + $0x318] sm:$0xff]
    %v2644 = vld [vmem:[%s2543 + $0x320] sm:$0xff]
    %v2645 = vld [vmem:[%s2543 + $0x328] sm:$0xff]
    %v2646 = vld [vmem:[%s2543 + $0x330] sm:$0xff]
    %v2647 = vld [vmem:[%s2543 + $0x338] sm:$0xff]
    %v2648 = vld [vmem:[%s2543 + $0x340] sm:$0xff]
    %v2649 = vld [vmem:[%s2543 + $0x348] sm:$0xff]
    %v2650 = vld [vmem:[%s2543 + $0x350] sm:$0xff]
    %v2651 = vld [vmem:[%s2543 + $0x358] sm:$0xff]
    %v2652 = vld [vmem:[%s2543 + $0x360] sm:$0xff]
    %v2653 = vld [vmem:[%s2543 + $0x368] sm:$0xff]
    %v2654 = vld [vmem:[%s2543 + $0x370] sm:$0xff]
    %v2655 = vld [vmem:[%s2543 + $0x378] sm:$0xff]
    %v2656 = vld [vmem:[%s2543 + $0x380] sm:$0xff]
    %v2657 = vld [vmem:[%s2543 + $0x388] sm:$0xff]
    %v2658 = vld [vmem:[%s2543 + $0x390] sm:$0xff]
    %v2659 = vld [vmem:[%s2543 + $0x398] sm:$0xff]
    %v2660 = vld [vmem:[%s2543 + $0x3a0] sm:$0xff]
    %v2661 = vld [vmem:[%s2543 + $0x3a8] sm:$0xff]
    %v2662 = vld [vmem:[%s2543 + $0x3b0] sm:$0xff]
    %v2663 = vld [vmem:[%s2543 + $0x3b8] sm:$0xff]
    %v2664 = vld [vmem:[%s2543 + $0x3c0] sm:$0xff]
    %v2665 = vld [vmem:[%s2543 + $0x3c8] sm:$0xff]
    %v2666 = vld [vmem:[%s2543 + $0x3d0] sm:$0xff]
    %v2667 = vld [vmem:[%s2543 + $0x3d8] sm:$0xff]
    %v2668 = vld [vmem:[%s2543 + $0x3e0] sm:$0xff]
    %v2669 = vld [vmem:[%s2543 + $0x3e8] sm:$0xff]
    %v2670 = vld [vmem:[%s2543 + $0x3f0] sm:$0xff]
    %v2671 = vld [vmem:[%s2543 + $0x3f8] sm:$0xff]
    %v2672 = vld [vmem:[%s2543 + $0x400] sm:$0xff]
    %v2673 = vld [vmem:[%s2543 + $0x408] sm:$0xff]
    %v2674 = vld [vmem:[%s2543 + $0x410] sm:$0xff]
    %v2675 = vld [vmem:[%s2543 + $0x418] sm:$0xff]
    %v2676 = vld [vmem:[%s2543 + $0x420] sm:$0xff]
    %v2677 = vld [vmem:[%s2543 + $0x428] sm:$0xff]
    %v2678 = vld [vmem:[%s2543 + $0x430] sm:$0xff]
    %v2679 = vld [vmem:[%s2543 + $0x438] sm:$0xff]
    %v2680 = vld [vmem:[%s2543 + $0x440] sm:$0xff]
    %v2681 = vld [vmem:[%s2543 + $0x448] sm:$0xff]
    %v2682 = vld [vmem:[%s2543 + $0x450] sm:$0xff]
    %v2683 = vld [vmem:[%s2543 + $0x458] sm:$0xff]
    %v2684 = vld [vmem:[%s2543 + $0x460] sm:$0xff]
    %v2685 = vld [vmem:[%s2543 + $0x468] sm:$0xff]
    %v2686 = vld [vmem:[%s2543 + $0x470] sm:$0xff]
    %v2687 = vld [vmem:[%s2543 + $0x478] sm:$0xff]
    %v2688 = vld [vmem:[%s2543 + $0x480] sm:$0xff]
    %v2689 = vld [vmem:[%s2543 + $0x488] sm:$0xff]
    %v2690 = vld [vmem:[%s2543 + $0x490] sm:$0xff]
    %v2691 = vld [vmem:[%s2543 + $0x498] sm:$0xff]
    %v2692 = vld [vmem:[%s2543 + $0x4a0] sm:$0xff]
    %v2693 = vld [vmem:[%s2543 + $0x4a8] sm:$0xff]
    %v2694 = vld [vmem:[%s2543 + $0x4b0] sm:$0xff]
    %v2695 = vld [vmem:[%s2543 + $0x4b8] sm:$0xff]
    %v2696 = vld [vmem:[%s2543 + $0x4c0] sm:$0xff]
    %v2697 = vld [vmem:[%s2543 + $0x4c8] sm:$0xff]
    %v2698 = vld [vmem:[%s2543 + $0x4d0] sm:$0xff]
    %v2699 = vld [vmem:[%s2543 + $0x4d8] sm:$0xff]
    %v2700 = vld [vmem:[%s2543 + $0x4e0] sm:$0xff]
    %v2701 = vld [vmem:[%s2543 + $0x4e8] sm:$0xff]
    %v2702 = vld [vmem:[%s2543 + $0x4f0] sm:$0xff]
    %v2703 = vld [vmem:[%s2543 + $0x4f8] sm:$0xff]
    %v2704 = vld [vmem:[%s2543 + $0x500] sm:$0xff]
    %v2705 = vld [vmem:[%s2543 + $0x508] sm:$0xff]
    %v2706 = vld [vmem:[%s2543 + $0x510] sm:$0xff]
    %v2707 = vld [vmem:[%s2543 + $0x518] sm:$0xff]
    %v2708 = vld [vmem:[%s2543 + $0x520] sm:$0xff]
    %v2709 = vld [vmem:[%s2543 + $0x528] sm:$0xff]
    %v2710 = vld [vmem:[%s2543 + $0x530] sm:$0xff]
    %v2711 = vld [vmem:[%s2543 + $0x538] sm:$0xff]
    %v2712 = vld [vmem:[%s2543 + $0x540] sm:$0xff]
    %v2713 = vld [vmem:[%s2543 + $0x548] sm:$0xff]
    %v2714 = vld [vmem:[%s2543 + $0x550] sm:$0xff]
    %v2715 = vld [vmem:[%s2543 + $0x558] sm:$0xff]
    %v2716 = vld [vmem:[%s2543 + $0x560] sm:$0xff]
    %v2717 = vld [vmem:[%s2543 + $0x568] sm:$0xff]
    %v2718 = vld [vmem:[%s2543 + $0x570] sm:$0xff]
    %v2719 = vld [vmem:[%s2543 + $0x578] sm:$0xff]
    %v2720 = vld [vmem:[%s2543 + $0x580] sm:$0xff]
    %v2721 = vld [vmem:[%s2543 + $0x588] sm:$0xff]
    %v2722 = vld [vmem:[%s2543 + $0x590] sm:$0xff]
    %v2723 = vld [vmem:[%s2543 + $0x598] sm:$0xff]
    %v2724 = vld [vmem:[%s2543 + $0x5a0] sm:$0xff]
    %v2725 = vld [vmem:[%s2543 + $0x5a8] sm:$0xff]
    %v2726 = vld [vmem:[%s2543 + $0x5b0] sm:$0xff]
    %v2727 = vld [vmem:[%s2543 + $0x5b8] sm:$0xff]
    %v2728 = vld [vmem:[%s2543 + $0x5c0] sm:$0xff]
    %v2729 = vld [vmem:[%s2543 + $0x5c8] sm:$0xff]
    %v2730 = vld [vmem:[%s2543 + $0x5d0] sm:$0xff]
    %v2731 = vld [vmem:[%s2543 + $0x5d8] sm:$0xff]
    %v2732 = vld [vmem:[%s2543 + $0x5e0] sm:$0xff]
    %v2733 = vld [vmem:[%s2543 + $0x5e8] sm:$0xff]
    %v2734 = vld [vmem:[%s2543 + $0x5f0] sm:$0xff]
    %v2735 = vld [vmem:[%s2543 + $0x5f8] sm:$0xff]
    %v2736 = vld [vmem:[%s2543 + $0x600] sm:$0xff]
    %v2737 = vld [vmem:[%s2543 + $0x608] sm:$0xff]
    %v2738 = vld [vmem:[%s2543 + $0x610] sm:$0xff]
    %v2739 = vld [vmem:[%s2543 + $0x618] sm:$0xff]
    %v2740 = vld [vmem:[%s2543 + $0x620] sm:$0xff]
    %v2741 = vld [vmem:[%s2543 + $0x628] sm:$0xff]
    %v2742 = vld [vmem:[%s2543 + $0x630] sm:$0xff]
    %v2743 = vld [vmem:[%s2543 + $0x638] sm:$0xff]
    %v2744 = vld [vmem:[%s2543 + $0x640] sm:$0xff]
    %v2745 = vld [vmem:[%s2543 + $0x648] sm:$0xff]
    %v2746 = vld [vmem:[%s2543 + $0x650] sm:$0xff]
    %v2747 = vld [vmem:[%s2543 + $0x658] sm:$0xff]
    %v2748 = vld [vmem:[%s2543 + $0x660] sm:$0xff]
    %v2749 = vld [vmem:[%s2543 + $0x668] sm:$0xff]
    %v2750 = vld [vmem:[%s2543 + $0x670] sm:$0xff]
    %v2751 = vld [vmem:[%s2543 + $0x678] sm:$0xff]
    %v2752 = vld [vmem:[%s2543 + $0x680] sm:$0xff]
    %v2753 = vld [vmem:[%s2543 + $0x688] sm:$0xff]
    %v2754 = vld [vmem:[%s2543 + $0x690] sm:$0xff]
    %v2755 = vld [vmem:[%s2543 + $0x698] sm:$0xff]
    %v2756 = vld [vmem:[%s2543 + $0x6a0] sm:$0xff]
    %v2757 = vld [vmem:[%s2543 + $0x6a8] sm:$0xff]
    %v2758 = vld [vmem:[%s2543 + $0x6b0] sm:$0xff]
    %v2759 = vld [vmem:[%s2543 + $0x6b8] sm:$0xff]
    %v2760 = vld [vmem:[%s2543 + $0x6c0] sm:$0xff]
    %v2761 = vld [vmem:[%s2543 + $0x6c8] sm:$0xff]
    %v2762 = vld [vmem:[%s2543 + $0x6d0] sm:$0xff]
    %v2763 = vld [vmem:[%s2543 + $0x6d8] sm:$0xff]
    %v2764 = vld [vmem:[%s2543 + $0x6e0] sm:$0xff]
    %v2765 = vld [vmem:[%s2543 + $0x6e8] sm:$0xff]
    %v2766 = vld [vmem:[%s2543 + $0x6f0] sm:$0xff]
    %v2767 = vld [vmem:[%s2543 + $0x6f8] sm:$0xff]
    %s2768 = scalar_lea.vmem %s4, 14
    %v2769 = vld [vmem:[%s2768] sm:$0x7f]
    %v2771 = vlaneseq
    %v2772 = vshrl.u32 %v2771, 7
    %v2773 = vsub.s32 0, %v2772
    %v2774 = vrot.slane %v2769, %v2773
    %v2775 = vlaneseq
    %v2776 = vshrl.u32 %v2775, 7
    %v2777 = vsub.s32 1, %v2776
    %v2778 = vrot.slane %v2769, %v2777
    %v2779 = vlaneseq
    %v2780 = vshrl.u32 %v2779, 7
    %v2781 = vsub.s32 2, %v2780
    %v2782 = vrot.slane %v2769, %v2781
    %v2783 = vlaneseq
    %v2784 = vshrl.u32 %v2783, 7
    %v2785 = vsub.s32 3, %v2784
    %v2786 = vrot.slane %v2769, %v2785
    %v2787 = vlaneseq
    %v2788 = vshrl.u32 %v2787, 7
    %v2789 = vsub.s32 4, %v2788
    %v2790 = vrot.slane %v2769, %v2789
    %v2791 = vlaneseq
    %v2792 = vshrl.u32 %v2791, 7
    %v2793 = vsub.s32 5, %v2792
    %v2794 = vrot.slane %v2769, %v2793
    %v2795 = vlaneseq
    %v2796 = vshrl.u32 %v2795, 7
    %v2797 = vsub.s32 6, %v2796
    %v2798 = vrot.slane %v2769, %v2797
    %2806 = vmatprep.subr.mxu0 %v2650
    %2807 = vmatpush1.msra.mxu0 %v2649
    %2808 = vmatprep.subr.mxu0 %v2643
    %2809 = vmatpush1.msra.mxu0 %v2642
    %2810 = vmatprep.subr.mxu0 %v2636
    %2811 = vmatpush1.msra.mxu0 %v2635
    %2812 = vmatprep.subr.mxu0 %v2629
    %2813 = vmatpush1.msra.mxu0 %v2628
    %2814 = vmatprep.subr.mxu0 %v2622
    %2815 = vmatpush1.msra.mxu0 %v2621
    %2816 = vmatprep.subr.mxu0 %v2615
    %2817 = vmatpush1.msra.mxu0 %v2614
    %2818 = vmatprep.subr.mxu0 %v2608
    %2819 = vmatpush1.msra.mxu0 %v2607
    %2820 = vmatprep.subr.mxu0 %v2601
    %2821 = vmatpush1.msra.mxu0 %v2600
    %2822 = vmatprep.subr.mxu0 %v2594
    %2823 = vmatpush1.msra.mxu0 %v2593
    %2824 = vmatprep.subr.mxu0 %v2587
    %2825 = vmatpush1.msra.mxu0 %v2586
    %2826 = vmatprep.subr.mxu0 %v2580
    %2827 = vmatpush1.msra.mxu0 %v2579
    %2828 = vmatprep.subr.mxu0 %v2573
    %2829 = vmatpush1.msra.mxu0 %v2572
    %2830 = vmatprep.subr.mxu0 %v2566
    %2831 = vmatpush1.msra.mxu0 %v2565
    %2832 = vmatprep.subr.mxu0 %v2559
    %2833 = vmatpush1.msra.mxu0 %v2558
    %2834 = vmatprep.subr.mxu0 %v2552
    %2835 = vmatpush1.msra.mxu0 %v2551
    %2836 = vmatprep.subr.mxu0 %v2545
    %2837 = vmatpush1.msra.mxu0 %v2544
    %2838 = vmatprep.subr.mxu0 %v2762
    %2839 = vmatpush2.msra.mxu0 %v2761
    %2840 = vmatprep.subr.mxu0 %v2755
    %2841 = vmatpush2.msra.mxu0 %v2754
    %2842 = vmatprep.subr.mxu0 %v2748
    %2843 = vmatpush2.msra.mxu0 %v2747
    %2844 = vmatprep.subr.mxu0 %v2741
    %2845 = vmatpush2.msra.mxu0 %v2740
    %2846 = vmatprep.subr.mxu0 %v2734
    %2847 = vmatpush2.msra.mxu0 %v2733
    %2848 = vmatprep.subr.mxu0 %v2727
    %2849 = vmatpush2.msra.mxu0 %v2726
    %2850 = vmatprep.subr.mxu0 %v2720
    %2851 = vmatpush2.msra.mxu0 %v2719
    %2852 = vmatprep.subr.mxu0 %v2713
    %2853 = vmatpush2.msra.mxu0 %v2712
    %2854 = vmatprep.subr.mxu0 %v2706
    %2855 = vmatpush2.msra.mxu0 %v2705
    %2856 = vmatprep.subr.mxu0 %v2699
    %2857 = vmatpush2.msra.mxu0 %v2698
    %2858 = vmatprep.subr.mxu0 %v2692
    %2859 = vmatpush2.msra.mxu0 %v2691
    %2860 = vmatprep.subr.mxu0 %v2685
    %2861 = vmatpush2.msra.mxu0 %v2684
    %2862 = vmatprep.subr.mxu0 %v2678
    %2863 = vmatpush2.msra.mxu0 %v2677
    %2864 = vmatprep.subr.mxu0 %v2671
    %2865 = vmatpush2.msra.mxu0 %v2670
    %2866 = vmatprep.subr.mxu0 %v2664
    %2867 = vmatpush2.msra.mxu0 %v2663
    %2868 = vmatprep.subr.mxu0 %v2657
    %2869 = vmatpush2.msra.mxu0 %v2656
    %2870 = vmatprep.mubr.f32.mxu0 %v2542
    %2871 = vmatmul.mubr.f32.gmra.mxu0 %v2541
    %v2872 = vpop.f32.mrf.mxu0
    %v2873 = vadd.f32 %v2774, %v2872
    %v2874 = vpop.f32.mrf.mxu0
    %v2875 = vadd.f32 %v2778, %v2874
    %2876 = vdwg.mxu0
    %2877 = vmatprep.subr.mxu0 %v2652
    %2878 = vmatpush1.msra.mxu0 %v2651
    %2879 = vmatprep.subr.mxu0 %v2645
    %2880 = vmatpush1.msra.mxu0 %v2644
    %2881 = vmatprep.subr.mxu0 %v2638
    %2882 = vmatpush1.msra.mxu0 %v2637
    %2883 = vmatprep.subr.mxu0 %v2631
    %2884 = vmatpush1.msra.mxu0 %v2630
    %2885 = vmatprep.subr.mxu0 %v2624
    %2886 = vmatpush1.msra.mxu0 %v2623
    %2887 = vmatprep.subr.mxu0 %v2617
    %2888 = vmatpush1.msra.mxu0 %v2616
    %2889 = vmatprep.subr.mxu0 %v2610
    %2890 = vmatpush1.msra.mxu0 %v2609
    %2891 = vmatprep.subr.mxu0 %v2603
    %2892 = vmatpush1.msra.mxu0 %v2602
    %2893 = vmatprep.subr.mxu0 %v2596
    %2894 = vmatpush1.msra.mxu0 %v2595
    %2895 = vmatprep.subr.mxu0 %v2589
    %2896 = vmatpush1.msra.mxu0 %v2588
    %2897 = vmatprep.subr.mxu0 %v2582
    %2898 = vmatpush1.msra.mxu0 %v2581
    %2899 = vmatprep.subr.mxu0 %v2575
    %2900 = vmatpush1.msra.mxu0 %v2574
    %2901 = vmatprep.subr.mxu0 %v2568
    %2902 = vmatpush1.msra.mxu0 %v2567
    %2903 = vmatprep.subr.mxu0 %v2561
    %2904 = vmatpush1.msra.mxu0 %v2560
    %2905 = vmatprep.subr.mxu0 %v2554
    %2906 = vmatpush1.msra.mxu0 %v2553
    %2907 = vmatprep.subr.mxu0 %v2547
    %2908 = vmatpush1.msra.mxu0 %v2546
    %2909 = vmatprep.subr.mxu0 %v2764
    %2910 = vmatpush2.msra.mxu0 %v2763
    %2911 = vmatprep.subr.mxu0 %v2757
    %2912 = vmatpush2.msra.mxu0 %v2756
    %2913 = vmatprep.subr.mxu0 %v2750
    %2914 = vmatpush2.msra.mxu0 %v2749
    %2915 = vmatprep.subr.mxu0 %v2743
    %2916 = vmatpush2.msra.mxu0 %v2742
    %2917 = vmatprep.subr.mxu0 %v2736
    %2918 = vmatpush2.msra.mxu0 %v2735
    %2919 = vmatprep.subr.mxu0 %v2729
    %2920 = vmatpush2.msra.mxu0 %v2728
    %2921 = vmatprep.subr.mxu0 %v2722
    %2922 = vmatpush2.msra.mxu0 %v2721
    %2923 = vmatprep.subr.mxu0 %v2715
    %2924 = vmatpush2.msra.mxu0 %v2714
    %2925 = vmatprep.subr.mxu0 %v2708
    %2926 = vmatpush2.msra.mxu0 %v2707
    %2927 = vmatprep.subr.mxu0 %v2701
    %2928 = vmatpush2.msra.mxu0 %v2700
    %2929 = vmatprep.subr.mxu0 %v2694
    %2930 = vmatpush2.msra.mxu0 %v2693
    %2931 = vmatprep.subr.mxu0 %v2687
    %2932 = vmatpush2.msra.mxu0 %v2686
    %2933 = vmatprep.subr.mxu0 %v2680
    %2934 = vmatpush2.msra.mxu0 %v2679
    %2935 = vmatprep.subr.mxu0 %v2673
    %2936 = vmatpush2.msra.mxu0 %v2672
    %2937 = vmatprep.subr.mxu0 %v2666
    %2938 = vmatpush2.msra.mxu0 %v2665
    %2939 = vmatprep.subr.mxu0 %v2659
    %2940 = vmatpush2.msra.mxu0 %v2658
    %2941 = vmatprep.mubr.f32.mxu0 %v2542
    %2942 = vmatmul.mubr.f32.gmra.mxu0 %v2541
    %v2943 = vpop.f32.mrf.mxu0
    %v2944 = vadd.f32 %v2782, %v2943
    %v2945 = vpop.f32.mrf.mxu0
    %v2946 = vadd.f32 %v2786, %v2945
    %2947 = vdwg.mxu0
    %2948 = vmatprep.subr.mxu0 %v2654
    %2949 = vmatpush1.msra.mxu0 %v2653
    %2950 = vmatprep.subr.mxu0 %v2647
    %2951 = vmatpush1.msra.mxu0 %v2646
    %2952 = vmatprep.subr.mxu0 %v2640
    %2953 = vmatpush1.msra.mxu0 %v2639
    %2954 = vmatprep.subr.mxu0 %v2633
    %2955 = vmatpush1.msra.mxu0 %v2632
    %2956 = vmatprep.subr.mxu0 %v2626
    %2957 = vmatpush1.msra.mxu0 %v2625
    %2958 = vmatprep.subr.mxu0 %v2619
    %2959 = vmatpush1.msra.mxu0 %v2618
    %2960 = vmatprep.subr.mxu0 %v2612
    %2961 = vmatpush1.msra.mxu0 %v2611
    %2962 = vmatprep.subr.mxu0 %v2605
    %2963 = vmatpush1.msra.mxu0 %v2604
    %2964 = vmatprep.subr.mxu0 %v2598
    %2965 = vmatpush1.msra.mxu0 %v2597
    %2966 = vmatprep.subr.mxu0 %v2591
    %2967 = vmatpush1.msra.mxu0 %v2590
    %2968 = vmatprep.subr.mxu0 %v2584
    %2969 = vmatpush1.msra.mxu0 %v2583
    %2970 = vmatprep.subr.mxu0 %v2577
    %2971 = vmatpush1.msra.mxu0 %v2576
    %2972 = vmatprep.subr.mxu0 %v2570
    %2973 = vmatpush1.msra.mxu0 %v2569
    %2974 = vmatprep.subr.mxu0 %v2563
    %2975 = vmatpush1.msra.mxu0 %v2562
    %2976 = vmatprep.subr.mxu0 %v2556
    %2977 = vmatpush1.msra.mxu0 %v2555
    %2978 = vmatprep.subr.mxu0 %v2549
    %2979 = vmatpush1.msra.mxu0 %v2548
    %2980 = vmatprep.subr.mxu0 %v2766
    %2981 = vmatpush2.msra.mxu0 %v2765
    %2982 = vmatprep.subr.mxu0 %v2759
    %2983 = vmatpush2.msra.mxu0 %v2758
    %2984 = vmatprep.subr.mxu0 %v2752
    %2985 = vmatpush2.msra.mxu0 %v2751
    %2986 = vmatprep.subr.mxu0 %v2745
    %2987 = vmatpush2.msra.mxu0 %v2744
    %2988 = vmatprep.subr.mxu0 %v2738
    %2989 = vmatpush2.msra.mxu0 %v2737
    %2990 = vmatprep.subr.mxu0 %v2731
    %2991 = vmatpush2.msra.mxu0 %v2730
    %2992 = vmatprep.subr.mxu0 %v2724
    %2993 = vmatpush2.msra.mxu0 %v2723
    %2994 = vmatprep.subr.mxu0 %v2717
    %2995 = vmatpush2.msra.mxu0 %v2716
    %2996 = vmatprep.subr.mxu0 %v2710
    %2997 = vmatpush2.msra.mxu0 %v2709
    %2998 = vmatprep.subr.mxu0 %v2703
    %2999 = vmatpush2.msra.mxu0 %v2702
    %3000 = vmatprep.subr.mxu0 %v2696
    %3001 = vmatpush2.msra.mxu0 %v2695
    %3002 = vmatprep.subr.mxu0 %v2689
    %3003 = vmatpush2.msra.mxu0 %v2688
    %3004 = vmatprep.subr.mxu0 %v2682
    %3005 = vmatpush2.msra.mxu0 %v2681
    %3006 = vmatprep.subr.mxu0 %v2675
    %3007 = vmatpush2.msra.mxu0 %v2674
    %3008 = vmatprep.subr.mxu0 %v2668
    %3009 = vmatpush2.msra.mxu0 %v2667
    %3010 = vmatprep.subr.mxu0 %v2661
    %3011 = vmatpush2.msra.mxu0 %v2660
    %3012 = vmatprep.mubr.f32.mxu0 %v2542
    %3013 = vmatmul.mubr.f32.gmra.mxu0 %v2541
    %v3014 = vpop.f32.mrf.mxu0
    %v3015 = vadd.f32 %v2790, %v3014
    %v3016 = vpop.f32.mrf.mxu0
    %v3017 = vadd.f32 %v2794, %v3016
    %3018 = vdwg.mxu0
    %3019 = vmatprep.subr.mxu0 0.0
    %3020 = vmatpush1.msra.mxu0 %v2655
    %3021 = vmatprep.subr.mxu0 0.0
    %3022 = vmatpush1.msra.mxu0 %v2648
    %3023 = vmatprep.subr.mxu0 0.0
    %3024 = vmatpush1.msra.mxu0 %v2641
    %3025 = vmatprep.subr.mxu0 0.0
    %3026 = vmatpush1.msra.mxu0 %v2634
    %3027 = vmatprep.subr.mxu0 0.0
    %3028 = vmatpush1.msra.mxu0 %v2627
    %3029 = vmatprep.subr.mxu0 0.0
    %3030 = vmatpush1.msra.mxu0 %v2620
    %3031 = vmatprep.subr.mxu0 0.0
    %3032 = vmatpush1.msra.mxu0 %v2613
    %3033 = vmatprep.subr.mxu0 0.0
    %3034 = vmatpush1.msra.mxu0 %v2606
    %3035 = vmatprep.subr.mxu0 0.0
    %3036 = vmatpush1.msra.mxu0 %v2599
    %3037 = vmatprep.subr.mxu0 0.0
    %3038 = vmatpush1.msra.mxu0 %v2592
    %3039 = vmatprep.subr.mxu0 0.0
    %3040 = vmatpush1.msra.mxu0 %v2585
    %3041 = vmatprep.subr.mxu0 0.0
    %3042 = vmatpush1.msra.mxu0 %v2578
    %3043 = vmatprep.subr.mxu0 0.0
    %3044 = vmatpush1.msra.mxu0 %v2571
    %3045 = vmatprep.subr.mxu0 0.0
    %3046 = vmatpush1.msra.mxu0 %v2564
    %3047 = vmatprep.subr.mxu0 0.0
    %3048 = vmatpush1.msra.mxu0 %v2557
    %3049 = vmatprep.subr.mxu0 0.0
    %3050 = vmatpush1.msra.mxu0 %v2550
    %3051 = vmatprep.subr.mxu0 0.0
    %3052 = vmatpush2.msra.mxu0 %v2767
    %3053 = vmatprep.subr.mxu0 0.0
    %3054 = vmatpush2.msra.mxu0 %v2760
    %3055 = vmatprep.subr.mxu0 0.0
    %3056 = vmatpush2.msra.mxu0 %v2753
    %3057 = vmatprep.subr.mxu0 0.0
    %3058 = vmatpush2.msra.mxu0 %v2746
    %3059 = vmatprep.subr.mxu0 0.0
    %3060 = vmatpush2.msra.mxu0 %v2739
    %3061 = vmatprep.subr.mxu0 0.0
    %3062 = vmatpush2.msra.mxu0 %v2732
    %3063 = vmatprep.subr.mxu0 0.0
    %3064 = vmatpush2.msra.mxu0 %v2725
    %3065 = vmatprep.subr.mxu0 0.0
    %3066 = vmatpush2.msra.mxu0 %v2718
    %3067 = vmatprep.subr.mxu0 0.0
    %3068 = vmatpush2.msra.mxu0 %v2711
    %3069 = vmatprep.subr.mxu0 0.0
    %3070 = vmatpush2.msra.mxu0 %v2704
    %3071 = vmatprep.subr.mxu0 0.0
    %3072 = vmatpush2.msra.mxu0 %v2697
    %3073 = vmatprep.subr.mxu0 0.0
    %3074 = vmatpush2.msra.mxu0 %v2690
    %3075 = vmatprep.subr.mxu0 0.0
    %3076 = vmatpush2.msra.mxu0 %v2683
    %3077 = vmatprep.subr.mxu0 0.0
    %3078 = vmatpush2.msra.mxu0 %v2676
    %3079 = vmatprep.subr.mxu0 0.0
    %3080 = vmatpush2.msra.mxu0 %v2669
    %3081 = vmatprep.subr.mxu0 0.0
    %3082 = vmatpush2.msra.mxu0 %v2662
    %3083 = vmatprep.mubr.f32.mxu0 %v2542
    %3084 = vmatmul.mubr.f32.gmra.mxu0 %v2541
    %v3085 = vpop.f32.mrf.mxu0
    %v3086 = vadd.f32 %v2798, %v3085
    %v3087 = vpop.f32.mrf.mxu0
    %3088 = vdwg.mxu0
    %v3089 = vtanh.pop %v2873
    %v3090 = vtanh.pop %v2875
    %v3091 = vtanh.pop %v2944
    %v3092 = vtanh.pop %v2946
    %v3093 = vmul.f32 %v3089, 0.5
    %v3094 = vmul.f32 %v3090, 0.5
    %v3095 = vmul.f32 %v3091, 0.5
    %v3096 = vmul.f32 %v3092, 0.5
    %v3097 = vadd.f32 %v3093, %v3094
    %v3098 = vadd.f32 %v3097, %v3095
    %v3099 = vsel %vm151, %v3096, 0.0
    %v3100 = vadd.f32 %v3098, %v3099
    %3101 = vadd.xlane.f32.xlu0 %v3100
    %v3102 = vpop.xlane.xlu0 %3101
    %v3103 = vadd.f32 %v2042, %v3102
    %v3104 = vmul.f32 %v3093, 1.442695
    %v3105 = vpow.pop %v3104
    %v3106 = vmul.f32 %v3094, 1.442695
    %v3107 = vpow.pop %v3106
    %v3108 = vmul.f32 %v3095, 1.442695
    %v3109 = vpow.pop %v3108
    %v3110 = vmul.f32 %v3096, 1.442695
    %v3111 = vpow.pop %v3110
    %v3112 = vmul.f32 %v2102, %v3105
    %v3113 = vmul.f32 %v2119, %v3107
    %v3114 = vmul.f32 %v2115, %v3109
    %v3115 = vmul.f32 %v2113, %v3111
    %3120 = vrot.lane.b32.xlu0 %v2946, 120
    %v3121 = vpop.permute.xlu0 %3120
    %3122 = vrot.lane.b32.xlu0 %v3015, 120
    %v3123 = vpop.permute.xlu0 %3122
    %3124 = vrot.lane.b32.xlu0 %v3017, 120
    %v3125 = vpop.permute.xlu0 %3124
    %3126 = vrot.lane.b32.xlu0 %v3086, 120
    %v3127 = vpop.permute.xlu0 %3126
    %v3128 = vsel %vm2101, %v3121, %v3123
    %v3129 = vsel %vm2101, %v3123, %v3125
    %v3130 = vsel %vm2101, %v3125, %v3127
    %v3135 = vadd.f32 %v3112, %v3128
    %v3136 = vadd.f32 %v3113, %v3129
    %v3137 = vadd.f32 %v3114, %v3130
    %v3138 = vadd.f32 %v3115, %v3127
    %3141 = vrot.lane.b32.xlu0 %v3135, 68
    %v3142 = vpop.permute.xlu0 %3141
    %3143 = vrot.lane.b32.xlu0 %v3136, 68
    %v3144 = vpop.permute.xlu0 %3143
    %v3145 = vsel %vm1058, %v3142, %v3144
    %v3148 = vsel %vm1058, %v2073, %v3142
    %s3149 = scalar_lea.vmem %s3, 12
    %v3150 = vld [vmem:[%s3149] sm:$0xf]
    %s3151 = scalar_lea.vmem %s0, 2352
    %v3152 = vld [vmem:[%s3151] sm:$0xff]
    %v3153 = vld [vmem:[%s3151 + $0x8] sm:$0xff]
    %v3154 = vld [vmem:[%s3151 + $0x10] sm:$0xff]
    %v3155 = vld [vmem:[%s3151 + $0x18] sm:$0xff]
    %v3156 = vld [vmem:[%s3151 + $0x20] sm:$0xff]
    %v3157 = vld [vmem:[%s3151 + $0x28] sm:$0xff]
    %v3158 = vld [vmem:[%s3151 + $0x30] sm:$0xff]
    %v3159 = vld [vmem:[%s3151 + $0x38] sm:$0xff]
    %v3160 = vld [vmem:[%s3151 + $0x40] sm:$0xff]
    %v3161 = vld [vmem:[%s3151 + $0x48] sm:$0xff]
    %v3162 = vld [vmem:[%s3151 + $0x50] sm:$0xff]
    %v3163 = vld [vmem:[%s3151 + $0x58] sm:$0xff]
    %v3164 = vld [vmem:[%s3151 + $0x60] sm:$0xff]
    %v3165 = vld [vmem:[%s3151 + $0x68] sm:$0xff]
    %v3166 = vld [vmem:[%s3151 + $0x70] sm:$0xff]
    %v3167 = vld [vmem:[%s3151 + $0x78] sm:$0xff]
    %v3168 = vld [vmem:[%s3151 + $0x80] sm:$0xff]
    %v3169 = vld [vmem:[%s3151 + $0x88] sm:$0xff]
    %v3170 = vld [vmem:[%s3151 + $0x90] sm:$0xff]
    %v3171 = vld [vmem:[%s3151 + $0x98] sm:$0xff]
    %v3172 = vld [vmem:[%s3151 + $0xa0] sm:$0xff]
    %v3173 = vld [vmem:[%s3151 + $0xa8] sm:$0xff]
    %v3174 = vld [vmem:[%s3151 + $0xb0] sm:$0xff]
    %v3175 = vld [vmem:[%s3151 + $0xb8] sm:$0xff]
    %v3176 = vld [vmem:[%s3151 + $0xc0] sm:$0xff]
    %v3177 = vld [vmem:[%s3151 + $0xc8] sm:$0xff]
    %v3178 = vld [vmem:[%s3151 + $0xd0] sm:$0xff]
    %v3179 = vld [vmem:[%s3151 + $0xd8] sm:$0xff]
    %v3180 = vld [vmem:[%s3151 + $0xe0] sm:$0xff]
    %v3181 = vld [vmem:[%s3151 + $0xe8] sm:$0xff]
    %v3182 = vld [vmem:[%s3151 + $0xf0] sm:$0xff]
    %v3183 = vld [vmem:[%s3151 + $0xf8] sm:$0xff]
    %v3184 = vld [vmem:[%s3151 + $0x100] sm:$0xff]
    %v3185 = vld [vmem:[%s3151 + $0x108] sm:$0xff]
    %v3186 = vld [vmem:[%s3151 + $0x110] sm:$0xff]
    %v3187 = vld [vmem:[%s3151 + $0x118] sm:$0xff]
    %v3188 = vld [vmem:[%s3151 + $0x120] sm:$0xff]
    %v3189 = vld [vmem:[%s3151 + $0x128] sm:$0xff]
    %v3190 = vld [vmem:[%s3151 + $0x130] sm:$0xff]
    %v3191 = vld [vmem:[%s3151 + $0x138] sm:$0xff]
    %v3192 = vld [vmem:[%s3151 + $0x140] sm:$0xff]
    %v3193 = vld [vmem:[%s3151 + $0x148] sm:$0xff]
    %v3194 = vld [vmem:[%s3151 + $0x150] sm:$0xff]
    %v3195 = vld [vmem:[%s3151 + $0x158] sm:$0xff]
    %v3196 = vld [vmem:[%s3151 + $0x160] sm:$0xff]
    %v3197 = vld [vmem:[%s3151 + $0x168] sm:$0xff]
    %v3198 = vld [vmem:[%s3151 + $0x170] sm:$0xff]
    %v3199 = vld [vmem:[%s3151 + $0x178] sm:$0xff]
    %v3200 = vld [vmem:[%s3151 + $0x180] sm:$0xff]
    %v3201 = vld [vmem:[%s3151 + $0x188] sm:$0xff]
    %v3202 = vld [vmem:[%s3151 + $0x190] sm:$0xff]
    %v3203 = vld [vmem:[%s3151 + $0x198] sm:$0xff]
    %v3204 = vld [vmem:[%s3151 + $0x1a0] sm:$0xff]
    %v3205 = vld [vmem:[%s3151 + $0x1a8] sm:$0xff]
    %v3206 = vld [vmem:[%s3151 + $0x1b0] sm:$0xff]
    %v3207 = vld [vmem:[%s3151 + $0x1b8] sm:$0xff]
    %v3208 = vld [vmem:[%s3151 + $0x1c0] sm:$0xff]
    %v3209 = vld [vmem:[%s3151 + $0x1c8] sm:$0xff]
    %v3210 = vld [vmem:[%s3151 + $0x1d0] sm:$0xff]
    %v3211 = vld [vmem:[%s3151 + $0x1d8] sm:$0xff]
    %v3212 = vld [vmem:[%s3151 + $0x1e0] sm:$0xff]
    %v3213 = vld [vmem:[%s3151 + $0x1e8] sm:$0xff]
    %v3214 = vld [vmem:[%s3151 + $0x1f0] sm:$0xff]
    %v3215 = vld [vmem:[%s3151 + $0x1f8] sm:$0xff]
    %v3216 = vld [vmem:[%s3151 + $0x200] sm:$0xff]
    %v3217 = vld [vmem:[%s3151 + $0x208] sm:$0xff]
    %v3218 = vld [vmem:[%s3151 + $0x210] sm:$0xff]
    %v3219 = vld [vmem:[%s3151 + $0x218] sm:$0xff]
    %v3220 = vld [vmem:[%s3151 + $0x220] sm:$0xff]
    %v3221 = vld [vmem:[%s3151 + $0x228] sm:$0xff]
    %v3222 = vld [vmem:[%s3151 + $0x230] sm:$0xff]
    %v3223 = vld [vmem:[%s3151 + $0x238] sm:$0xff]
    %v3224 = vld [vmem:[%s3151 + $0x240] sm:$0xff]
    %v3225 = vld [vmem:[%s3151 + $0x248] sm:$0xff]
    %v3226 = vld [vmem:[%s3151 + $0x250] sm:$0xff]
    %v3227 = vld [vmem:[%s3151 + $0x258] sm:$0xff]
    %v3228 = vld [vmem:[%s3151 + $0x260] sm:$0xff]
    %v3229 = vld [vmem:[%s3151 + $0x268] sm:$0xff]
    %v3230 = vld [vmem:[%s3151 + $0x270] sm:$0xff]
    %v3231 = vld [vmem:[%s3151 + $0x278] sm:$0xff]
    %v3232 = vld [vmem:[%s3151 + $0x280] sm:$0xff]
    %v3233 = vld [vmem:[%s3151 + $0x288] sm:$0xff]
    %v3234 = vld [vmem:[%s3151 + $0x290] sm:$0xff]
    %v3235 = vld [vmem:[%s3151 + $0x298] sm:$0xff]
    %v3236 = vld [vmem:[%s3151 + $0x2a0] sm:$0xff]
    %v3237 = vld [vmem:[%s3151 + $0x2a8] sm:$0xff]
    %v3238 = vld [vmem:[%s3151 + $0x2b0] sm:$0xff]
    %v3239 = vld [vmem:[%s3151 + $0x2b8] sm:$0xff]
    %v3240 = vld [vmem:[%s3151 + $0x2c0] sm:$0xff]
    %v3241 = vld [vmem:[%s3151 + $0x2c8] sm:$0xff]
    %v3242 = vld [vmem:[%s3151 + $0x2d0] sm:$0xff]
    %v3243 = vld [vmem:[%s3151 + $0x2d8] sm:$0xff]
    %v3244 = vld [vmem:[%s3151 + $0x2e0] sm:$0xff]
    %v3245 = vld [vmem:[%s3151 + $0x2e8] sm:$0xff]
    %v3246 = vld [vmem:[%s3151 + $0x2f0] sm:$0xff]
    %v3247 = vld [vmem:[%s3151 + $0x2f8] sm:$0xff]
    %v3248 = vld [vmem:[%s3151 + $0x300] sm:$0xff]
    %v3249 = vld [vmem:[%s3151 + $0x308] sm:$0xff]
    %v3251 = vlaneseq
    %v3252 = vshrl.u32 %v3251, 7
    %v3253 = vsub.s32 0, %v3252
    %v3254 = vrot.slane %v3150, %v3253
    %v3255 = vlaneseq
    %v3256 = vshrl.u32 %v3255, 7
    %v3257 = vsub.s32 2, %v3256
    %v3258 = vrot.slane %v3150, %v3257
    %v3261 = vlaneseq
    %v3262 = vshrl.u32 %v3261, 7
    %v3263 = vsub.s32 0, %v3262
    %v3264 = vrot.slane %v3254, %v3263
    %v3265 = vlaneseq
    %v3266 = vshrl.u32 %v3265, 7
    %v3267 = vsub.s32 0, %v3266
    %v3268 = vrot.slane %v3258, %v3267
    %v3269 = vsel %vm151, %v3144, 0
    %3271 = vmatprep.subr.mxu0 %v3183
    %3272 = vmatpush1.msra.mxu0 %v3182
    %3273 = vmatprep.subr.mxu0 %v3181
    %3274 = vmatpush1.msra.mxu0 %v3180
    %3275 = vmatprep.subr.mxu0 %v3179
    %3276 = vmatpush1.msra.mxu0 %v3178
    %3277 = vmatprep.subr.mxu0 %v3177
    %3278 = vmatpush1.msra.mxu0 %v3176
    %3279 = vmatprep.subr.mxu0 %v3175
    %3280 = vmatpush1.msra.mxu0 %v3174
    %3281 = vmatprep.subr.mxu0 %v3173
    %3282 = vmatpush1.msra.mxu0 %v3172
    %3283 = vmatprep.subr.mxu0 %v3171
    %3284 = vmatpush1.msra.mxu0 %v3170
    %3285 = vmatprep.subr.mxu0 %v3169
    %3286 = vmatpush1.msra.mxu0 %v3168
    %3287 = vmatprep.subr.mxu0 %v3167
    %3288 = vmatpush1.msra.mxu0 %v3166
    %3289 = vmatprep.subr.mxu0 %v3165
    %3290 = vmatpush1.msra.mxu0 %v3164
    %3291 = vmatprep.subr.mxu0 %v3163
    %3292 = vmatpush1.msra.mxu0 %v3162
    %3293 = vmatprep.subr.mxu0 %v3161
    %3294 = vmatpush1.msra.mxu0 %v3160
    %3295 = vmatprep.subr.mxu0 %v3159
    %3296 = vmatpush1.msra.mxu0 %v3158
    %3297 = vmatprep.subr.mxu0 %v3157
    %3298 = vmatpush1.msra.mxu0 %v3156
    %3299 = vmatprep.subr.mxu0 %v3155
    %3300 = vmatpush1.msra.mxu0 %v3154
    %3301 = vmatprep.subr.mxu0 %v3153
    %3302 = vmatpush1.msra.mxu0 %v3152
    %3303 = vmatprep.subr.mxu0 %v3215
    %3304 = vmatpush2.msra.mxu0 %v3214
    %3305 = vmatprep.subr.mxu0 %v3213
    %3306 = vmatpush2.msra.mxu0 %v3212
    %3307 = vmatprep.subr.mxu0 %v3211
    %3308 = vmatpush2.msra.mxu0 %v3210
    %3309 = vmatprep.subr.mxu0 %v3209
    %3310 = vmatpush2.msra.mxu0 %v3208
    %3311 = vmatprep.subr.mxu0 %v3207
    %3312 = vmatpush2.msra.mxu0 %v3206
    %3313 = vmatprep.subr.mxu0 %v3205
    %3314 = vmatpush2.msra.mxu0 %v3204
    %3315 = vmatprep.subr.mxu0 %v3203
    %3316 = vmatpush2.msra.mxu0 %v3202
    %3317 = vmatprep.subr.mxu0 %v3201
    %3318 = vmatpush2.msra.mxu0 %v3200
    %3319 = vmatprep.subr.mxu0 %v3199
    %3320 = vmatpush2.msra.mxu0 %v3198
    %3321 = vmatprep.subr.mxu0 %v3197
    %3322 = vmatpush2.msra.mxu0 %v3196
    %3323 = vmatprep.subr.mxu0 %v3195
    %3324 = vmatpush2.msra.mxu0 %v3194
    %3325 = vmatprep.subr.mxu0 %v3193
    %3326 = vmatpush2.msra.mxu0 %v3192
    %3327 = vmatprep.subr.mxu0 %v3191
    %3328 = vmatpush2.msra.mxu0 %v3190
    %3329 = vmatprep.subr.mxu0 %v3189
    %3330 = vmatpush2.msra.mxu0 %v3188
    %3331 = vmatprep.subr.mxu0 %v3187
    %3332 = vmatpush2.msra.mxu0 %v3186
    %3333 = vmatprep.subr.mxu0 %v3185
    %3334 = vmatpush2.msra.mxu0 %v3184
    %3335 = vmatprep.mubr.f32.mxu0 %v3148
    %3336 = vmatmul.mubr.f32.gmra.mxu0 %v26
    %v3337 = vpop.f32.mrf.mxu0
    %v3338 = vadd.f32 %v3264, %v3337
    %v3339 = vpop.f32.mrf.mxu0
    %v3340 = vadd.f32 %v3268, %v3339
    %3341 = vdwg.mxu0
    %3342 = vmatprep.subr.mxu0 %v3247
    %3343 = vmatpush1.msra.mxu0 %v3246
    %3344 = vmatprep.subr.mxu0 %v3245
    %3345 = vmatpush1.msra.mxu0 %v3244
    %3346 = vmatprep.subr.mxu0 %v3243
    %3347 = vmatpush1.msra.mxu0 %v3242
    %3348 = vmatprep.subr.mxu0 %v3241
    %3349 = vmatpush1.msra.mxu0 %v3240
    %3350 = vmatprep.subr.mxu0 %v3239
    %3351 = vmatpush1.msra.mxu0 %v3238
    %3352 = vmatprep.subr.mxu0 %v3237
    %3353 = vmatpush1.msra.mxu0 %v3236
    %3354 = vmatprep.subr.mxu0 %v3235
    %3355 = vmatpush1.msra.mxu0 %v3234
    %3356 = vmatprep.subr.mxu0 %v3233
    %3357 = vmatpush1.msra.mxu0 %v3232
    %3358 = vmatprep.subr.mxu0 %v3231
    %3359 = vmatpush1.msra.mxu0 %v3230
    %3360 = vmatprep.subr.mxu0 %v3229
    %3361 = vmatpush1.msra.mxu0 %v3228
    %3362 = vmatprep.subr.mxu0 %v3227
    %3363 = vmatpush1.msra.mxu0 %v3226
    %3364 = vmatprep.subr.mxu0 %v3225
    %3365 = vmatpush1.msra.mxu0 %v3224
    %3366 = vmatprep.subr.mxu0 %v3223
    %3367 = vmatpush1.msra.mxu0 %v3222
    %3368 = vmatprep.subr.mxu0 %v3221
    %3369 = vmatpush1.msra.mxu0 %v3220
    %3370 = vmatprep.subr.mxu0 %v3219
    %3371 = vmatpush1.msra.mxu0 %v3218
    %3372 = vmatprep.subr.mxu0 %v3217
    %3373 = vmatpush1.msra.mxu0 %v3216
    %3374 = vmatprep.subr.mxu0 0.0
    %3375 = vmatpush2.msra.mxu0 0.0
    %3376 = vmatprep.subr.mxu0 0.0
    %3377 = vmatpush2.msra.mxu0 0.0
    %3378 = vmatprep.subr.mxu0 0.0
    %3379 = vmatpush2.msra.mxu0 0.0
    %3380 = vmatprep.subr.mxu0 0.0
    %3381 = vmatpush2.msra.mxu0 0.0
    %3382 = vmatprep.subr.mxu0 0.0
    %3383 = vmatpush2.msra.mxu0 0.0
    %3384 = vmatprep.subr.mxu0 0.0
    %3385 = vmatpush2.msra.mxu0 0.0
    %3386 = vmatprep.subr.mxu0 0.0
    %3387 = vmatpush2.msra.mxu0 0.0
    %3388 = vmatprep.subr.mxu0 0.0
    %3389 = vmatpush2.msra.mxu0 0.0
    %3390 = vmatprep.subr.mxu0 0.0
    %3391 = vmatpush2.msra.mxu0 0.0
    %3392 = vmatprep.subr.mxu0 0.0
    %3393 = vmatpush2.msra.mxu0 0.0
    %3394 = vmatprep.subr.mxu0 0.0
    %3395 = vmatpush2.msra.mxu0 0.0
    %3396 = vmatprep.subr.mxu0 0.0
    %3397 = vmatpush2.msra.mxu0 0.0
    %3398 = vmatprep.subr.mxu0 0.0
    %3399 = vmatpush2.msra.mxu0 0.0
    %3400 = vmatprep.subr.mxu0 0.0
    %3401 = vmatpush2.msra.mxu0 0.0
    %3402 = vmatprep.subr.mxu0 0.0
    %3403 = vmatpush2.msra.mxu0 0.0
    %3404 = vmatprep.subr.mxu0 %v3249
    %3405 = vmatpush2.msra.mxu0 %v3248
    %3406 = vmatprep.mubr.f32.mxu0 %v3269
    %3407 = vmatmul.mubr.f32.gmra.mxu0 %v3145
    %v3408 = vpop.f32.mrf.mxu0
    %v3409 = vadd.f32 %v3338, %v3408
    %v3410 = vpop.f32.mrf.mxu0
    %v3411 = vadd.f32 %v3340, %v3410
    %3412 = vdwg.mxu0
    %v3413 = vmax.f32 %v3409, 0.0
    %v3414 = vmax.f32 %v3411, 0.0
    %s3415 = scalar_lea.vmem %s1, 1536
    %v3416 = vld [vmem:[%s3415] sm:$0xff]
    %v3417 = vld [vmem:[%s3415 + $0x8] sm:$0xff]
    %v3418 = vld [vmem:[%s3415 + $0x10] sm:$0xff]
    %v3419 = vld [vmem:[%s3415 + $0x18] sm:$0xff]
    %v3420 = vld [vmem:[%s3415 + $0x20] sm:$0xff]
    %v3421 = vld [vmem:[%s3415 + $0x28] sm:$0xff]
    %v3422 = vld [vmem:[%s3415 + $0x30] sm:$0xff]
    %v3423 = vld [vmem:[%s3415 + $0x38] sm:$0xff]
    %v3424 = vld [vmem:[%s3415 + $0x40] sm:$0xff]
    %v3425 = vld [vmem:[%s3415 + $0x48] sm:$0xff]
    %v3426 = vld [vmem:[%s3415 + $0x50] sm:$0xff]
    %v3427 = vld [vmem:[%s3415 + $0x58] sm:$0xff]
    %v3428 = vld [vmem:[%s3415 + $0x60] sm:$0xff]
    %v3429 = vld [vmem:[%s3415 + $0x68] sm:$0xff]
    %v3430 = vld [vmem:[%s3415 + $0x70] sm:$0xff]
    %v3431 = vld [vmem:[%s3415 + $0x78] sm:$0xff]
    %v3432 = vld [vmem:[%s3415 + $0x80] sm:$0xff]
    %v3433 = vld [vmem:[%s3415 + $0x88] sm:$0xff]
    %v3434 = vld [vmem:[%s3415 + $0x90] sm:$0xff]
    %v3435 = vld [vmem:[%s3415 + $0x98] sm:$0xff]
    %v3436 = vld [vmem:[%s3415 + $0xa0] sm:$0xff]
    %v3437 = vld [vmem:[%s3415 + $0xa8] sm:$0xff]
    %v3438 = vld [vmem:[%s3415 + $0xb0] sm:$0xff]
    %v3439 = vld [vmem:[%s3415 + $0xb8] sm:$0xff]
    %v3440 = vld [vmem:[%s3415 + $0xc0] sm:$0xff]
    %v3441 = vld [vmem:[%s3415 + $0xc8] sm:$0xff]
    %v3442 = vld [vmem:[%s3415 + $0xd0] sm:$0xff]
    %v3443 = vld [vmem:[%s3415 + $0xd8] sm:$0xff]
    %v3444 = vld [vmem:[%s3415 + $0xe0] sm:$0xff]
    %v3445 = vld [vmem:[%s3415 + $0xe8] sm:$0xff]
    %v3446 = vld [vmem:[%s3415 + $0xf0] sm:$0xff]
    %v3447 = vld [vmem:[%s3415 + $0xf8] sm:$0xff]
    %v3448 = vld [vmem:[%s3415 + $0x100] sm:$0xff]
    %v3449 = vld [vmem:[%s3415 + $0x108] sm:$0xff]
    %v3450 = vld [vmem:[%s3415 + $0x110] sm:$0xff]
    %v3451 = vld [vmem:[%s3415 + $0x118] sm:$0xff]
    %v3452 = vld [vmem:[%s3415 + $0x120] sm:$0xff]
    %v3453 = vld [vmem:[%s3415 + $0x128] sm:$0xff]
    %v3454 = vld [vmem:[%s3415 + $0x130] sm:$0xff]
    %v3455 = vld [vmem:[%s3415 + $0x138] sm:$0xff]
    %v3456 = vld [vmem:[%s3415 + $0x140] sm:$0xff]
    %v3457 = vld [vmem:[%s3415 + $0x148] sm:$0xff]
    %v3458 = vld [vmem:[%s3415 + $0x150] sm:$0xff]
    %v3459 = vld [vmem:[%s3415 + $0x158] sm:$0xff]
    %v3460 = vld [vmem:[%s3415 + $0x160] sm:$0xff]
    %v3461 = vld [vmem:[%s3415 + $0x168] sm:$0xff]
    %v3462 = vld [vmem:[%s3415 + $0x170] sm:$0xff]
    %v3463 = vld [vmem:[%s3415 + $0x178] sm:$0xff]
    %v3464 = vld [vmem:[%s3415 + $0x180] sm:$0xff]
    %v3465 = vld [vmem:[%s3415 + $0x188] sm:$0xff]
    %v3466 = vld [vmem:[%s3415 + $0x190] sm:$0xff]
    %v3467 = vld [vmem:[%s3415 + $0x198] sm:$0xff]
    %v3468 = vld [vmem:[%s3415 + $0x1a0] sm:$0xff]
    %v3469 = vld [vmem:[%s3415 + $0x1a8] sm:$0xff]
    %v3470 = vld [vmem:[%s3415 + $0x1b0] sm:$0xff]
    %v3471 = vld [vmem:[%s3415 + $0x1b8] sm:$0xff]
    %v3472 = vld [vmem:[%s3415 + $0x1c0] sm:$0xff]
    %v3473 = vld [vmem:[%s3415 + $0x1c8] sm:$0xff]
    %v3474 = vld [vmem:[%s3415 + $0x1d0] sm:$0xff]
    %v3475 = vld [vmem:[%s3415 + $0x1d8] sm:$0xff]
    %v3476 = vld [vmem:[%s3415 + $0x1e0] sm:$0xff]
    %v3477 = vld [vmem:[%s3415 + $0x1e8] sm:$0xff]
    %v3478 = vld [vmem:[%s3415 + $0x1f0] sm:$0xff]
    %v3479 = vld [vmem:[%s3415 + $0x1f8] sm:$0xff]
    %v3480 = vlaneseq
    %v3481 = vshrl.u32 %v3480, 7
    %v3482 = vsub.s32 1, %v3481
    %v3483 = vrot.slane %v3150, %v3482
    %v3484 = vlaneseq
    %v3485 = vshrl.u32 %v3484, 7
    %v3486 = vsub.s32 3, %v3485
    %v3487 = vrot.slane %v3150, %v3486
    %v3490 = vlaneseq
    %v3491 = vshrl.u32 %v3490, 7
    %v3492 = vsub.s32 1, %v3491
    %v3493 = vrot.slane %v3483, %v3492
    %v3494 = vlaneseq
    %v3495 = vshrl.u32 %v3494, 7
    %v3496 = vsub.s32 1, %v3495
    %v3497 = vrot.slane %v3487, %v3496
    %3498 = vmatprep.subr.mxu0 %v3447
    %3499 = vmatpush1.msra.mxu0 %v3446
    %3500 = vmatprep.subr.mxu0 %v3445
    %3501 = vmatpush1.msra.mxu0 %v3444
    %3502 = vmatprep.subr.mxu0 %v3443
    %3503 = vmatpush1.msra.mxu0 %v3442
    %3504 = vmatprep.subr.mxu0 %v3441
    %3505 = vmatpush1.msra.mxu0 %v3440
    %3506 = vmatprep.subr.mxu0 %v3439
    %3507 = vmatpush1.msra.mxu0 %v3438
    %3508 = vmatprep.subr.mxu0 %v3437
    %3509 = vmatpush1.msra.mxu0 %v3436
    %3510 = vmatprep.subr.mxu0 %v3435
    %3511 = vmatpush1.msra.mxu0 %v3434
    %3512 = vmatprep.subr.mxu0 %v3433
    %3513 = vmatpush1.msra.mxu0 %v3432
    %3514 = vmatprep.subr.mxu0 %v3431
    %3515 = vmatpush1.msra.mxu0 %v3430
    %3516 = vmatprep.subr.mxu0 %v3429
    %3517 = vmatpush1.msra.mxu0 %v3428
    %3518 = vmatprep.subr.mxu0 %v3427
    %3519 = vmatpush1.msra.mxu0 %v3426
    %3520 = vmatprep.subr.mxu0 %v3425
    %3521 = vmatpush1.msra.mxu0 %v3424
    %3522 = vmatprep.subr.mxu0 %v3423
    %3523 = vmatpush1.msra.mxu0 %v3422
    %3524 = vmatprep.subr.mxu0 %v3421
    %3525 = vmatpush1.msra.mxu0 %v3420
    %3526 = vmatprep.subr.mxu0 %v3419
    %3527 = vmatpush1.msra.mxu0 %v3418
    %3528 = vmatprep.subr.mxu0 %v3417
    %3529 = vmatpush1.msra.mxu0 %v3416
    %3530 = vmatprep.subr.mxu0 %v3479
    %3531 = vmatpush2.msra.mxu0 %v3478
    %3532 = vmatprep.subr.mxu0 %v3477
    %3533 = vmatpush2.msra.mxu0 %v3476
    %3534 = vmatprep.subr.mxu0 %v3475
    %3535 = vmatpush2.msra.mxu0 %v3474
    %3536 = vmatprep.subr.mxu0 %v3473
    %3537 = vmatpush2.msra.mxu0 %v3472
    %3538 = vmatprep.subr.mxu0 %v3471
    %3539 = vmatpush2.msra.mxu0 %v3470
    %3540 = vmatprep.subr.mxu0 %v3469
    %3541 = vmatpush2.msra.mxu0 %v3468
    %3542 = vmatprep.subr.mxu0 %v3467
    %3543 = vmatpush2.msra.mxu0 %v3466
    %3544 = vmatprep.subr.mxu0 %v3465
    %3545 = vmatpush2.msra.mxu0 %v3464
    %3546 = vmatprep.subr.mxu0 %v3463
    %3547 = vmatpush2.msra.mxu0 %v3462
    %3548 = vmatprep.subr.mxu0 %v3461
    %3549 = vmatpush2.msra.mxu0 %v3460
    %3550 = vmatprep.subr.mxu0 %v3459
    %3551 = vmatpush2.msra.mxu0 %v3458
    %3552 = vmatprep.subr.mxu0 %v3457
    %3553 = vmatpush2.msra.mxu0 %v3456
    %3554 = vmatprep.subr.mxu0 %v3455
    %3555 = vmatpush2.msra.mxu0 %v3454
    %3556 = vmatprep.subr.mxu0 %v3453
    %3557 = vmatpush2.msra.mxu0 %v3452
    %3558 = vmatprep.subr.mxu0 %v3451
    %3559 = vmatpush2.msra.mxu0 %v3450
    %3560 = vmatprep.subr.mxu0 %v3449
    %3561 = vmatpush2.msra.mxu0 %v3448
    %3562 = vmatprep.mubr.f32.mxu0 %v3414
    %3563 = vmatmul.mubr.f32.gmra.mxu0 %v3413
    %v3564 = vpop.f32.mrf.mxu0
    %v3565 = vadd.f32 %v3493, %v3564
    %v3566 = vpop.f32.mrf.mxu0
    %v3567 = vadd.f32 %v3497, %v3566
    %3568 = vdwg.mxu0
    %v3569 = vmax.f32 %v3565, 0.0
    %v3570 = vmax.f32 %v3567, 0.0
    %s3571 = scalar_lea.vmem %s2, 5376
    %v3572 = vld [vmem:[%s3571] sm:$0xff]
    %v3573 = vld [vmem:[%s3571 + $0x8] sm:$0xff]
    %v3574 = vld [vmem:[%s3571 + $0x10] sm:$0xff]
    %v3575 = vld [vmem:[%s3571 + $0x18] sm:$0xff]
    %v3576 = vld [vmem:[%s3571 + $0x20] sm:$0xff]
    %v3577 = vld [vmem:[%s3571 + $0x28] sm:$0xff]
    %v3578 = vld [vmem:[%s3571 + $0x30] sm:$0xff]
    %v3579 = vld [vmem:[%s3571 + $0x38] sm:$0xff]
    %v3580 = vld [vmem:[%s3571 + $0x40] sm:$0xff]
    %v3581 = vld [vmem:[%s3571 + $0x48] sm:$0xff]
    %v3582 = vld [vmem:[%s3571 + $0x50] sm:$0xff]
    %v3583 = vld [vmem:[%s3571 + $0x58] sm:$0xff]
    %v3584 = vld [vmem:[%s3571 + $0x60] sm:$0xff]
    %v3585 = vld [vmem:[%s3571 + $0x68] sm:$0xff]
    %v3586 = vld [vmem:[%s3571 + $0x70] sm:$0xff]
    %v3587 = vld [vmem:[%s3571 + $0x78] sm:$0xff]
    %v3588 = vld [vmem:[%s3571 + $0x80] sm:$0xff]
    %v3589 = vld [vmem:[%s3571 + $0x88] sm:$0xff]
    %v3590 = vld [vmem:[%s3571 + $0x90] sm:$0xff]
    %v3591 = vld [vmem:[%s3571 + $0x98] sm:$0xff]
    %v3592 = vld [vmem:[%s3571 + $0xa0] sm:$0xff]
    %v3593 = vld [vmem:[%s3571 + $0xa8] sm:$0xff]
    %v3594 = vld [vmem:[%s3571 + $0xb0] sm:$0xff]
    %v3595 = vld [vmem:[%s3571 + $0xb8] sm:$0xff]
    %v3596 = vld [vmem:[%s3571 + $0xc0] sm:$0xff]
    %v3597 = vld [vmem:[%s3571 + $0xc8] sm:$0xff]
    %v3598 = vld [vmem:[%s3571 + $0xd0] sm:$0xff]
    %v3599 = vld [vmem:[%s3571 + $0xd8] sm:$0xff]
    %v3600 = vld [vmem:[%s3571 + $0xe0] sm:$0xff]
    %v3601 = vld [vmem:[%s3571 + $0xe8] sm:$0xff]
    %v3602 = vld [vmem:[%s3571 + $0xf0] sm:$0xff]
    %v3603 = vld [vmem:[%s3571 + $0xf8] sm:$0xff]
    %v3604 = vld [vmem:[%s3571 + $0x100] sm:$0xff]
    %v3605 = vld [vmem:[%s3571 + $0x108] sm:$0xff]
    %v3606 = vld [vmem:[%s3571 + $0x110] sm:$0xff]
    %v3607 = vld [vmem:[%s3571 + $0x118] sm:$0xff]
    %v3608 = vld [vmem:[%s3571 + $0x120] sm:$0xff]
    %v3609 = vld [vmem:[%s3571 + $0x128] sm:$0xff]
    %v3610 = vld [vmem:[%s3571 + $0x130] sm:$0xff]
    %v3611 = vld [vmem:[%s3571 + $0x138] sm:$0xff]
    %v3612 = vld [vmem:[%s3571 + $0x140] sm:$0xff]
    %v3613 = vld [vmem:[%s3571 + $0x148] sm:$0xff]
    %v3614 = vld [vmem:[%s3571 + $0x150] sm:$0xff]
    %v3615 = vld [vmem:[%s3571 + $0x158] sm:$0xff]
    %v3616 = vld [vmem:[%s3571 + $0x160] sm:$0xff]
    %v3617 = vld [vmem:[%s3571 + $0x168] sm:$0xff]
    %v3618 = vld [vmem:[%s3571 + $0x170] sm:$0xff]
    %v3619 = vld [vmem:[%s3571 + $0x178] sm:$0xff]
    %v3620 = vld [vmem:[%s3571 + $0x180] sm:$0xff]
    %v3621 = vld [vmem:[%s3571 + $0x188] sm:$0xff]
    %v3622 = vld [vmem:[%s3571 + $0x190] sm:$0xff]
    %v3623 = vld [vmem:[%s3571 + $0x198] sm:$0xff]
    %v3624 = vld [vmem:[%s3571 + $0x1a0] sm:$0xff]
    %v3625 = vld [vmem:[%s3571 + $0x1a8] sm:$0xff]
    %v3626 = vld [vmem:[%s3571 + $0x1b0] sm:$0xff]
    %v3627 = vld [vmem:[%s3571 + $0x1b8] sm:$0xff]
    %v3628 = vld [vmem:[%s3571 + $0x1c0] sm:$0xff]
    %v3629 = vld [vmem:[%s3571 + $0x1c8] sm:$0xff]
    %v3630 = vld [vmem:[%s3571 + $0x1d0] sm:$0xff]
    %v3631 = vld [vmem:[%s3571 + $0x1d8] sm:$0xff]
    %v3632 = vld [vmem:[%s3571 + $0x1e0] sm:$0xff]
    %v3633 = vld [vmem:[%s3571 + $0x1e8] sm:$0xff]
    %v3634 = vld [vmem:[%s3571 + $0x1f0] sm:$0xff]
    %v3635 = vld [vmem:[%s3571 + $0x1f8] sm:$0xff]
    %v3636 = vld [vmem:[%s3571 + $0x200] sm:$0xff]
    %v3637 = vld [vmem:[%s3571 + $0x208] sm:$0xff]
    %v3638 = vld [vmem:[%s3571 + $0x210] sm:$0xff]
    %v3639 = vld [vmem:[%s3571 + $0x218] sm:$0xff]
    %v3640 = vld [vmem:[%s3571 + $0x220] sm:$0xff]
    %v3641 = vld [vmem:[%s3571 + $0x228] sm:$0xff]
    %v3642 = vld [vmem:[%s3571 + $0x230] sm:$0xff]
    %v3643 = vld [vmem:[%s3571 + $0x238] sm:$0xff]
    %v3644 = vld [vmem:[%s3571 + $0x240] sm:$0xff]
    %v3645 = vld [vmem:[%s3571 + $0x248] sm:$0xff]
    %v3646 = vld [vmem:[%s3571 + $0x250] sm:$0xff]
    %v3647 = vld [vmem:[%s3571 + $0x258] sm:$0xff]
    %v3648 = vld [vmem:[%s3571 + $0x260] sm:$0xff]
    %v3649 = vld [vmem:[%s3571 + $0x268] sm:$0xff]
    %v3650 = vld [vmem:[%s3571 + $0x270] sm:$0xff]
    %v3651 = vld [vmem:[%s3571 + $0x278] sm:$0xff]
    %v3652 = vld [vmem:[%s3571 + $0x280] sm:$0xff]
    %v3653 = vld [vmem:[%s3571 + $0x288] sm:$0xff]
    %v3654 = vld [vmem:[%s3571 + $0x290] sm:$0xff]
    %v3655 = vld [vmem:[%s3571 + $0x298] sm:$0xff]
    %v3656 = vld [vmem:[%s3571 + $0x2a0] sm:$0xff]
    %v3657 = vld [vmem:[%s3571 + $0x2a8] sm:$0xff]
    %v3658 = vld [vmem:[%s3571 + $0x2b0] sm:$0xff]
    %v3659 = vld [vmem:[%s3571 + $0x2b8] sm:$0xff]
    %v3660 = vld [vmem:[%s3571 + $0x2c0] sm:$0xff]
    %v3661 = vld [vmem:[%s3571 + $0x2c8] sm:$0xff]
    %v3662 = vld [vmem:[%s3571 + $0x2d0] sm:$0xff]
    %v3663 = vld [vmem:[%s3571 + $0x2d8] sm:$0xff]
    %v3664 = vld [vmem:[%s3571 + $0x2e0] sm:$0xff]
    %v3665 = vld [vmem:[%s3571 + $0x2e8] sm:$0xff]
    %v3666 = vld [vmem:[%s3571 + $0x2f0] sm:$0xff]
    %v3667 = vld [vmem:[%s3571 + $0x2f8] sm:$0xff]
    %v3668 = vld [vmem:[%s3571 + $0x300] sm:$0xff]
    %v3669 = vld [vmem:[%s3571 + $0x308] sm:$0xff]
    %v3670 = vld [vmem:[%s3571 + $0x310] sm:$0xff]
    %v3671 = vld [vmem:[%s3571 + $0x318] sm:$0xff]
    %v3672 = vld [vmem:[%s3571 + $0x320] sm:$0xff]
    %v3673 = vld [vmem:[%s3571 + $0x328] sm:$0xff]
    %v3674 = vld [vmem:[%s3571 + $0x330] sm:$0xff]
    %v3675 = vld [vmem:[%s3571 + $0x338] sm:$0xff]
    %v3676 = vld [vmem:[%s3571 + $0x340] sm:$0xff]
    %v3677 = vld [vmem:[%s3571 + $0x348] sm:$0xff]
    %v3678 = vld [vmem:[%s3571 + $0x350] sm:$0xff]
    %v3679 = vld [vmem:[%s3571 + $0x358] sm:$0xff]
    %v3680 = vld [vmem:[%s3571 + $0x360] sm:$0xff]
    %v3681 = vld [vmem:[%s3571 + $0x368] sm:$0xff]
    %v3682 = vld [vmem:[%s3571 + $0x370] sm:$0xff]
    %v3683 = vld [vmem:[%s3571 + $0x378] sm:$0xff]
    %v3684 = vld [vmem:[%s3571 + $0x380] sm:$0xff]
    %v3685 = vld [vmem:[%s3571 + $0x388] sm:$0xff]
    %v3686 = vld [vmem:[%s3571 + $0x390] sm:$0xff]
    %v3687 = vld [vmem:[%s3571 + $0x398] sm:$0xff]
    %v3688 = vld [vmem:[%s3571 + $0x3a0] sm:$0xff]
    %v3689 = vld [vmem:[%s3571 + $0x3a8] sm:$0xff]
    %v3690 = vld [vmem:[%s3571 + $0x3b0] sm:$0xff]
    %v3691 = vld [vmem:[%s3571 + $0x3b8] sm:$0xff]
    %v3692 = vld [vmem:[%s3571 + $0x3c0] sm:$0xff]
    %v3693 = vld [vmem:[%s3571 + $0x3c8] sm:$0xff]
    %v3694 = vld [vmem:[%s3571 + $0x3d0] sm:$0xff]
    %v3695 = vld [vmem:[%s3571 + $0x3d8] sm:$0xff]
    %v3696 = vld [vmem:[%s3571 + $0x3e0] sm:$0xff]
    %v3697 = vld [vmem:[%s3571 + $0x3e8] sm:$0xff]
    %v3698 = vld [vmem:[%s3571 + $0x3f0] sm:$0xff]
    %v3699 = vld [vmem:[%s3571 + $0x3f8] sm:$0xff]
    %v3700 = vld [vmem:[%s3571 + $0x400] sm:$0xff]
    %v3701 = vld [vmem:[%s3571 + $0x408] sm:$0xff]
    %v3702 = vld [vmem:[%s3571 + $0x410] sm:$0xff]
    %v3703 = vld [vmem:[%s3571 + $0x418] sm:$0xff]
    %v3704 = vld [vmem:[%s3571 + $0x420] sm:$0xff]
    %v3705 = vld [vmem:[%s3571 + $0x428] sm:$0xff]
    %v3706 = vld [vmem:[%s3571 + $0x430] sm:$0xff]
    %v3707 = vld [vmem:[%s3571 + $0x438] sm:$0xff]
    %v3708 = vld [vmem:[%s3571 + $0x440] sm:$0xff]
    %v3709 = vld [vmem:[%s3571 + $0x448] sm:$0xff]
    %v3710 = vld [vmem:[%s3571 + $0x450] sm:$0xff]
    %v3711 = vld [vmem:[%s3571 + $0x458] sm:$0xff]
    %v3712 = vld [vmem:[%s3571 + $0x460] sm:$0xff]
    %v3713 = vld [vmem:[%s3571 + $0x468] sm:$0xff]
    %v3714 = vld [vmem:[%s3571 + $0x470] sm:$0xff]
    %v3715 = vld [vmem:[%s3571 + $0x478] sm:$0xff]
    %v3716 = vld [vmem:[%s3571 + $0x480] sm:$0xff]
    %v3717 = vld [vmem:[%s3571 + $0x488] sm:$0xff]
    %v3718 = vld [vmem:[%s3571 + $0x490] sm:$0xff]
    %v3719 = vld [vmem:[%s3571 + $0x498] sm:$0xff]
    %v3720 = vld [vmem:[%s3571 + $0x4a0] sm:$0xff]
    %v3721 = vld [vmem:[%s3571 + $0x4a8] sm:$0xff]
    %v3722 = vld [vmem:[%s3571 + $0x4b0] sm:$0xff]
    %v3723 = vld [vmem:[%s3571 + $0x4b8] sm:$0xff]
    %v3724 = vld [vmem:[%s3571 + $0x4c0] sm:$0xff]
    %v3725 = vld [vmem:[%s3571 + $0x4c8] sm:$0xff]
    %v3726 = vld [vmem:[%s3571 + $0x4d0] sm:$0xff]
    %v3727 = vld [vmem:[%s3571 + $0x4d8] sm:$0xff]
    %v3728 = vld [vmem:[%s3571 + $0x4e0] sm:$0xff]
    %v3729 = vld [vmem:[%s3571 + $0x4e8] sm:$0xff]
    %v3730 = vld [vmem:[%s3571 + $0x4f0] sm:$0xff]
    %v3731 = vld [vmem:[%s3571 + $0x4f8] sm:$0xff]
    %v3732 = vld [vmem:[%s3571 + $0x500] sm:$0xff]
    %v3733 = vld [vmem:[%s3571 + $0x508] sm:$0xff]
    %v3734 = vld [vmem:[%s3571 + $0x510] sm:$0xff]
    %v3735 = vld [vmem:[%s3571 + $0x518] sm:$0xff]
    %v3736 = vld [vmem:[%s3571 + $0x520] sm:$0xff]
    %v3737 = vld [vmem:[%s3571 + $0x528] sm:$0xff]
    %v3738 = vld [vmem:[%s3571 + $0x530] sm:$0xff]
    %v3739 = vld [vmem:[%s3571 + $0x538] sm:$0xff]
    %v3740 = vld [vmem:[%s3571 + $0x540] sm:$0xff]
    %v3741 = vld [vmem:[%s3571 + $0x548] sm:$0xff]
    %v3742 = vld [vmem:[%s3571 + $0x550] sm:$0xff]
    %v3743 = vld [vmem:[%s3571 + $0x558] sm:$0xff]
    %v3744 = vld [vmem:[%s3571 + $0x560] sm:$0xff]
    %v3745 = vld [vmem:[%s3571 + $0x568] sm:$0xff]
    %v3746 = vld [vmem:[%s3571 + $0x570] sm:$0xff]
    %v3747 = vld [vmem:[%s3571 + $0x578] sm:$0xff]
    %v3748 = vld [vmem:[%s3571 + $0x580] sm:$0xff]
    %v3749 = vld [vmem:[%s3571 + $0x588] sm:$0xff]
    %v3750 = vld [vmem:[%s3571 + $0x590] sm:$0xff]
    %v3751 = vld [vmem:[%s3571 + $0x598] sm:$0xff]
    %v3752 = vld [vmem:[%s3571 + $0x5a0] sm:$0xff]
    %v3753 = vld [vmem:[%s3571 + $0x5a8] sm:$0xff]
    %v3754 = vld [vmem:[%s3571 + $0x5b0] sm:$0xff]
    %v3755 = vld [vmem:[%s3571 + $0x5b8] sm:$0xff]
    %v3756 = vld [vmem:[%s3571 + $0x5c0] sm:$0xff]
    %v3757 = vld [vmem:[%s3571 + $0x5c8] sm:$0xff]
    %v3758 = vld [vmem:[%s3571 + $0x5d0] sm:$0xff]
    %v3759 = vld [vmem:[%s3571 + $0x5d8] sm:$0xff]
    %v3760 = vld [vmem:[%s3571 + $0x5e0] sm:$0xff]
    %v3761 = vld [vmem:[%s3571 + $0x5e8] sm:$0xff]
    %v3762 = vld [vmem:[%s3571 + $0x5f0] sm:$0xff]
    %v3763 = vld [vmem:[%s3571 + $0x5f8] sm:$0xff]
    %v3764 = vld [vmem:[%s3571 + $0x600] sm:$0xff]
    %v3765 = vld [vmem:[%s3571 + $0x608] sm:$0xff]
    %v3766 = vld [vmem:[%s3571 + $0x610] sm:$0xff]
    %v3767 = vld [vmem:[%s3571 + $0x618] sm:$0xff]
    %v3768 = vld [vmem:[%s3571 + $0x620] sm:$0xff]
    %v3769 = vld [vmem:[%s3571 + $0x628] sm:$0xff]
    %v3770 = vld [vmem:[%s3571 + $0x630] sm:$0xff]
    %v3771 = vld [vmem:[%s3571 + $0x638] sm:$0xff]
    %v3772 = vld [vmem:[%s3571 + $0x640] sm:$0xff]
    %v3773 = vld [vmem:[%s3571 + $0x648] sm:$0xff]
    %v3774 = vld [vmem:[%s3571 + $0x650] sm:$0xff]
    %v3775 = vld [vmem:[%s3571 + $0x658] sm:$0xff]
    %v3776 = vld [vmem:[%s3571 + $0x660] sm:$0xff]
    %v3777 = vld [vmem:[%s3571 + $0x668] sm:$0xff]
    %v3778 = vld [vmem:[%s3571 + $0x670] sm:$0xff]
    %v3779 = vld [vmem:[%s3571 + $0x678] sm:$0xff]
    %v3780 = vld [vmem:[%s3571 + $0x680] sm:$0xff]
    %v3781 = vld [vmem:[%s3571 + $0x688] sm:$0xff]
    %v3782 = vld [vmem:[%s3571 + $0x690] sm:$0xff]
    %v3783 = vld [vmem:[%s3571 + $0x698] sm:$0xff]
    %v3784 = vld [vmem:[%s3571 + $0x6a0] sm:$0xff]
    %v3785 = vld [vmem:[%s3571 + $0x6a8] sm:$0xff]
    %v3786 = vld [vmem:[%s3571 + $0x6b0] sm:$0xff]
    %v3787 = vld [vmem:[%s3571 + $0x6b8] sm:$0xff]
    %v3788 = vld [vmem:[%s3571 + $0x6c0] sm:$0xff]
    %v3789 = vld [vmem:[%s3571 + $0x6c8] sm:$0xff]
    %v3790 = vld [vmem:[%s3571 + $0x6d0] sm:$0xff]
    %v3791 = vld [vmem:[%s3571 + $0x6d8] sm:$0xff]
    %v3792 = vld [vmem:[%s3571 + $0x6e0] sm:$0xff]
    %v3793 = vld [vmem:[%s3571 + $0x6e8] sm:$0xff]
    %v3794 = vld [vmem:[%s3571 + $0x6f0] sm:$0xff]
    %v3795 = vld [vmem:[%s3571 + $0x6f8] sm:$0xff]
    %s3796 = scalar_lea.vmem %s4, 21
    %v3797 = vld [vmem:[%s3796] sm:$0x7f]
    %v3799 = vlaneseq
    %v3800 = vshrl.u32 %v3799, 7
    %v3801 = vsub.s32 0, %v3800
    %v3802 = vrot.slane %v3797, %v3801
    %v3803 = vlaneseq
    %v3804 = vshrl.u32 %v3803, 7
    %v3805 = vsub.s32 1, %v3804
    %v3806 = vrot.slane %v3797, %v3805
    %v3807 = vlaneseq
    %v3808 = vshrl.u32 %v3807, 7
    %v3809 = vsub.s32 2, %v3808
    %v3810 = vrot.slane %v3797, %v3809
    %v3811 = vlaneseq
    %v3812 = vshrl.u32 %v3811, 7
    %v3813 = vsub.s32 3, %v3812
    %v3814 = vrot.slane %v3797, %v3813
    %v3815 = vlaneseq
    %v3816 = vshrl.u32 %v3815, 7
    %v3817 = vsub.s32 4, %v3816
    %v3818 = vrot.slane %v3797, %v3817
    %v3819 = vlaneseq
    %v3820 = vshrl.u32 %v3819, 7
    %v3821 = vsub.s32 5, %v3820
    %v3822 = vrot.slane %v3797, %v3821
    %v3823 = vlaneseq
    %v3824 = vshrl.u32 %v3823, 7
    %v3825 = vsub.s32 6, %v3824
    %v3826 = vrot.slane %v3797, %v3825
    %3834 = vmatprep.subr.mxu0 %v3678
    %3835 = vmatpush1.msra.mxu0 %v3677
    %3836 = vmatprep.subr.mxu0 %v3671
    %3837 = vmatpush1.msra.mxu0 %v3670
    %3838 = vmatprep.subr.mxu0 %v3664
    %3839 = vmatpush1.msra.mxu0 %v3663
    %3840 = vmatprep.subr.mxu0 %v3657
    %3841 = vmatpush1.msra.mxu0 %v3656
    %3842 = vmatprep.subr.mxu0 %v3650
    %3843 = vmatpush1.msra.mxu0 %v3649
    %3844 = vmatprep.subr.mxu0 %v3643
    %3845 = vmatpush1.msra.mxu0 %v3642
    %3846 = vmatprep.subr.mxu0 %v3636
    %3847 = vmatpush1.msra.mxu0 %v3635
    %3848 = vmatprep.subr.mxu0 %v3629
    %3849 = vmatpush1.msra.mxu0 %v3628
    %3850 = vmatprep.subr.mxu0 %v3622
    %3851 = vmatpush1.msra.mxu0 %v3621
    %3852 = vmatprep.subr.mxu0 %v3615
    %3853 = vmatpush1.msra.mxu0 %v3614
    %3854 = vmatprep.subr.mxu0 %v3608
    %3855 = vmatpush1.msra.mxu0 %v3607
    %3856 = vmatprep.subr.mxu0 %v3601
    %3857 = vmatpush1.msra.mxu0 %v3600
    %3858 = vmatprep.subr.mxu0 %v3594
    %3859 = vmatpush1.msra.mxu0 %v3593
    %3860 = vmatprep.subr.mxu0 %v3587
    %3861 = vmatpush1.msra.mxu0 %v3586
    %3862 = vmatprep.subr.mxu0 %v3580
    %3863 = vmatpush1.msra.mxu0 %v3579
    %3864 = vmatprep.subr.mxu0 %v3573
    %3865 = vmatpush1.msra.mxu0 %v3572
    %3866 = vmatprep.subr.mxu0 %v3790
    %3867 = vmatpush2.msra.mxu0 %v3789
    %3868 = vmatprep.subr.mxu0 %v3783
    %3869 = vmatpush2.msra.mxu0 %v3782
    %3870 = vmatprep.subr.mxu0 %v3776
    %3871 = vmatpush2.msra.mxu0 %v3775
    %3872 = vmatprep.subr.mxu0 %v3769
    %3873 = vmatpush2.msra.mxu0 %v3768
    %3874 = vmatprep.subr.mxu0 %v3762
    %3875 = vmatpush2.msra.mxu0 %v3761
    %3876 = vmatprep.subr.mxu0 %v3755
    %3877 = vmatpush2.msra.mxu0 %v3754
    %3878 = vmatprep.subr.mxu0 %v3748
    %3879 = vmatpush2.msra.mxu0 %v3747
    %3880 = vmatprep.subr.mxu0 %v3741
    %3881 = vmatpush2.msra.mxu0 %v3740
    %3882 = vmatprep.subr.mxu0 %v3734
    %3883 = vmatpush2.msra.mxu0 %v3733
    %3884 = vmatprep.subr.mxu0 %v3727
    %3885 = vmatpush2.msra.mxu0 %v3726
    %3886 = vmatprep.subr.mxu0 %v3720
    %3887 = vmatpush2.msra.mxu0 %v3719
    %3888 = vmatprep.subr.mxu0 %v3713
    %3889 = vmatpush2.msra.mxu0 %v3712
    %3890 = vmatprep.subr.mxu0 %v3706
    %3891 = vmatpush2.msra.mxu0 %v3705
    %3892 = vmatprep.subr.mxu0 %v3699
    %3893 = vmatpush2.msra.mxu0 %v3698
    %3894 = vmatprep.subr.mxu0 %v3692
    %3895 = vmatpush2.msra.mxu0 %v3691
    %3896 = vmatprep.subr.mxu0 %v3685
    %3897 = vmatpush2.msra.mxu0 %v3684
    %3898 = vmatprep.mubr.f32.mxu0 %v3570
    %3899 = vmatmul.mubr.f32.gmra.mxu0 %v3569
    %v3900 = vpop.f32.mrf.mxu0
    %v3901 = vadd.f32 %v3802, %v3900
    %v3902 = vpop.f32.mrf.mxu0
    %v3903 = vadd.f32 %v3806, %v3902
    %3904 = vdwg.mxu0
    %3905 = vmatprep.subr.mxu0 %v3680
    %3906 = vmatpush1.msra.mxu0 %v3679
    %3907 = vmatprep.subr.mxu0 %v3673
    %3908 = vmatpush1.msra.mxu0 %v3672
    %3909 = vmatprep.subr.mxu0 %v3666
    %3910 = vmatpush1.msra.mxu0 %v3665
    %3911 = vmatprep.subr.mxu0 %v3659
    %3912 = vmatpush1.msra.mxu0 %v3658
    %3913 = vmatprep.subr.mxu0 %v3652
    %3914 = vmatpush1.msra.mxu0 %v3651
    %3915 = vmatprep.subr.mxu0 %v3645
    %3916 = vmatpush1.msra.mxu0 %v3644
    %3917 = vmatprep.subr.mxu0 %v3638
    %3918 = vmatpush1.msra.mxu0 %v3637
    %3919 = vmatprep.subr.mxu0 %v3631
    %3920 = vmatpush1.msra.mxu0 %v3630
    %3921 = vmatprep.subr.mxu0 %v3624
    %3922 = vmatpush1.msra.mxu0 %v3623
    %3923 = vmatprep.subr.mxu0 %v3617
    %3924 = vmatpush1.msra.mxu0 %v3616
    %3925 = vmatprep.subr.mxu0 %v3610
    %3926 = vmatpush1.msra.mxu0 %v3609
    %3927 = vmatprep.subr.mxu0 %v3603
    %3928 = vmatpush1.msra.mxu0 %v3602
    %3929 = vmatprep.subr.mxu0 %v3596
    %3930 = vmatpush1.msra.mxu0 %v3595
    %3931 = vmatprep.subr.mxu0 %v3589
    %3932 = vmatpush1.msra.mxu0 %v3588
    %3933 = vmatprep.subr.mxu0 %v3582
    %3934 = vmatpush1.msra.mxu0 %v3581
    %3935 = vmatprep.subr.mxu0 %v3575
    %3936 = vmatpush1.msra.mxu0 %v3574
    %3937 = vmatprep.subr.mxu0 %v3792
    %3938 = vmatpush2.msra.mxu0 %v3791
    %3939 = vmatprep.subr.mxu0 %v3785
    %3940 = vmatpush2.msra.mxu0 %v3784
    %3941 = vmatprep.subr.mxu0 %v3778
    %3942 = vmatpush2.msra.mxu0 %v3777
    %3943 = vmatprep.subr.mxu0 %v3771
    %3944 = vmatpush2.msra.mxu0 %v3770
    %3945 = vmatprep.subr.mxu0 %v3764
    %3946 = vmatpush2.msra.mxu0 %v3763
    %3947 = vmatprep.subr.mxu0 %v3757
    %3948 = vmatpush2.msra.mxu0 %v3756
    %3949 = vmatprep.subr.mxu0 %v3750
    %3950 = vmatpush2.msra.mxu0 %v3749
    %3951 = vmatprep.subr.mxu0 %v3743
    %3952 = vmatpush2.msra.mxu0 %v3742
    %3953 = vmatprep.subr.mxu0 %v3736
    %3954 = vmatpush2.msra.mxu0 %v3735
    %3955 = vmatprep.subr.mxu0 %v3729
    %3956 = vmatpush2.msra.mxu0 %v3728
    %3957 = vmatprep.subr.mxu0 %v3722
    %3958 = vmatpush2.msra.mxu0 %v3721
    %3959 = vmatprep.subr.mxu0 %v3715
    %3960 = vmatpush2.msra.mxu0 %v3714
    %3961 = vmatprep.subr.mxu0 %v3708
    %3962 = vmatpush2.msra.mxu0 %v3707
    %3963 = vmatprep.subr.mxu0 %v3701
    %3964 = vmatpush2.msra.mxu0 %v3700
    %3965 = vmatprep.subr.mxu0 %v3694
    %3966 = vmatpush2.msra.mxu0 %v3693
    %3967 = vmatprep.subr.mxu0 %v3687
    %3968 = vmatpush2.msra.mxu0 %v3686
    %3969 = vmatprep.mubr.f32.mxu0 %v3570
    %3970 = vmatmul.mubr.f32.gmra.mxu0 %v3569
    %v3971 = vpop.f32.mrf.mxu0
    %v3972 = vadd.f32 %v3810, %v3971
    %v3973 = vpop.f32.mrf.mxu0
    %v3974 = vadd.f32 %v3814, %v3973
    %3975 = vdwg.mxu0
    %3976 = vmatprep.subr.mxu0 %v3682
    %3977 = vmatpush1.msra.mxu0 %v3681
    %3978 = vmatprep.subr.mxu0 %v3675
    %3979 = vmatpush1.msra.mxu0 %v3674
    %3980 = vmatprep.subr.mxu0 %v3668
    %3981 = vmatpush1.msra.mxu0 %v3667
    %3982 = vmatprep.subr.mxu0 %v3661
    %3983 = vmatpush1.msra.mxu0 %v3660
    %3984 = vmatprep.subr.mxu0 %v3654
    %3985 = vmatpush1.msra.mxu0 %v3653
    %3986 = vmatprep.subr.mxu0 %v3647
    %3987 = vmatpush1.msra.mxu0 %v3646
    %3988 = vmatprep.subr.mxu0 %v3640
    %3989 = vmatpush1.msra.mxu0 %v3639
    %3990 = vmatprep.subr.mxu0 %v3633
    %3991 = vmatpush1.msra.mxu0 %v3632
    %3992 = vmatprep.subr.mxu0 %v3626
    %3993 = vmatpush1.msra.mxu0 %v3625
    %3994 = vmatprep.subr.mxu0 %v3619
    %3995 = vmatpush1.msra.mxu0 %v3618
    %3996 = vmatprep.subr.mxu0 %v3612
    %3997 = vmatpush1.msra.mxu0 %v3611
    %3998 = vmatprep.subr.mxu0 %v3605
    %3999 = vmatpush1.msra.mxu0 %v3604
    %4000 = vmatprep.subr.mxu0 %v3598
    %4001 = vmatpush1.msra.mxu0 %v3597
    %4002 = vmatprep.subr.mxu0 %v3591
    %4003 = vmatpush1.msra.mxu0 %v3590
    %4004 = vmatprep.subr.mxu0 %v3584
    %4005 = vmatpush1.msra.mxu0 %v3583
    %4006 = vmatprep.subr.mxu0 %v3577
    %4007 = vmatpush1.msra.mxu0 %v3576
    %4008 = vmatprep.subr.mxu0 %v3794
    %4009 = vmatpush2.msra.mxu0 %v3793
    %4010 = vmatprep.subr.mxu0 %v3787
    %4011 = vmatpush2.msra.mxu0 %v3786
    %4012 = vmatprep.subr.mxu0 %v3780
    %4013 = vmatpush2.msra.mxu0 %v3779
    %4014 = vmatprep.subr.mxu0 %v3773
    %4015 = vmatpush2.msra.mxu0 %v3772
    %4016 = vmatprep.subr.mxu0 %v3766
    %4017 = vmatpush2.msra.mxu0 %v3765
    %4018 = vmatprep.subr.mxu0 %v3759
    %4019 = vmatpush2.msra.mxu0 %v3758
    %4020 = vmatprep.subr.mxu0 %v3752
    %4021 = vmatpush2.msra.mxu0 %v3751
    %4022 = vmatprep.subr.mxu0 %v3745
    %4023 = vmatpush2.msra.mxu0 %v3744
    %4024 = vmatprep.subr.mxu0 %v3738
    %4025 = vmatpush2.msra.mxu0 %v3737
    %4026 = vmatprep.subr.mxu0 %v3731
    %4027 = vmatpush2.msra.mxu0 %v3730
    %4028 = vmatprep.subr.mxu0 %v3724
    %4029 = vmatpush2.msra.mxu0 %v3723
    %4030 = vmatprep.subr.mxu0 %v3717
    %4031 = vmatpush2.msra.mxu0 %v3716
    %4032 = vmatprep.subr.mxu0 %v3710
    %4033 = vmatpush2.msra.mxu0 %v3709
    %4034 = vmatprep.subr.mxu0 %v3703
    %4035 = vmatpush2.msra.mxu0 %v3702
    %4036 = vmatprep.subr.mxu0 %v3696
    %4037 = vmatpush2.msra.mxu0 %v3695
    %4038 = vmatprep.subr.mxu0 %v3689
    %4039 = vmatpush2.msra.mxu0 %v3688
    %4040 = vmatprep.mubr.f32.mxu0 %v3570
    %4041 = vmatmul.mubr.f32.gmra.mxu0 %v3569
    %v4042 = vpop.f32.mrf.mxu0
    %v4043 = vadd.f32 %v3818, %v4042
    %v4044 = vpop.f32.mrf.mxu0
    %v4045 = vadd.f32 %v3822, %v4044
    %4046 = vdwg.mxu0
    %4047 = vmatprep.subr.mxu0 0.0
    %4048 = vmatpush1.msra.mxu0 %v3683
    %4049 = vmatprep.subr.mxu0 0.0
    %4050 = vmatpush1.msra.mxu0 %v3676
    %4051 = vmatprep.subr.mxu0 0.0
    %4052 = vmatpush1.msra.mxu0 %v3669
    %4053 = vmatprep.subr.mxu0 0.0
    %4054 = vmatpush1.msra.mxu0 %v3662
    %4055 = vmatprep.subr.mxu0 0.0
    %4056 = vmatpush1.msra.mxu0 %v3655
    %4057 = vmatprep.subr.mxu0 0.0
    %4058 = vmatpush1.msra.mxu0 %v3648
    %4059 = vmatprep.subr.mxu0 0.0
    %4060 = vmatpush1.msra.mxu0 %v3641
    %4061 = vmatprep.subr.mxu0 0.0
    %4062 = vmatpush1.msra.mxu0 %v3634
    %4063 = vmatprep.subr.mxu0 0.0
    %4064 = vmatpush1.msra.mxu0 %v3627
    %4065 = vmatprep.subr.mxu0 0.0
    %4066 = vmatpush1.msra.mxu0 %v3620
    %4067 = vmatprep.subr.mxu0 0.0
    %4068 = vmatpush1.msra.mxu0 %v3613
    %4069 = vmatprep.subr.mxu0 0.0
    %4070 = vmatpush1.msra.mxu0 %v3606
    %4071 = vmatprep.subr.mxu0 0.0
    %4072 = vmatpush1.msra.mxu0 %v3599
    %4073 = vmatprep.subr.mxu0 0.0
    %4074 = vmatpush1.msra.mxu0 %v3592
    %4075 = vmatprep.subr.mxu0 0.0
    %4076 = vmatpush1.msra.mxu0 %v3585
    %4077 = vmatprep.subr.mxu0 0.0
    %4078 = vmatpush1.msra.mxu0 %v3578
    %4079 = vmatprep.subr.mxu0 0.0
    %4080 = vmatpush2.msra.mxu0 %v3795
    %4081 = vmatprep.subr.mxu0 0.0
    %4082 = vmatpush2.msra.mxu0 %v3788
    %4083 = vmatprep.subr.mxu0 0.0
    %4084 = vmatpush2.msra.mxu0 %v3781
    %4085 = vmatprep.subr.mxu0 0.0
    %4086 = vmatpush2.msra.mxu0 %v3774
    %4087 = vmatprep.subr.mxu0 0.0
    %4088 = vmatpush2.msra.mxu0 %v3767
    %4089 = vmatprep.subr.mxu0 0.0
    %4090 = vmatpush2.msra.mxu0 %v3760
    %4091 = vmatprep.subr.mxu0 0.0
    %4092 = vmatpush2.msra.mxu0 %v3753
    %4093 = vmatprep.subr.mxu0 0.0
    %4094 = vmatpush2.msra.mxu0 %v3746
    %4095 = vmatprep.subr.mxu0 0.0
    %4096 = vmatpush2.msra.mxu0 %v3739
    %4097 = vmatprep.subr.mxu0 0.0
    %4098 = vmatpush2.msra.mxu0 %v3732
    %4099 = vmatprep.subr.mxu0 0.0
    %4100 = vmatpush2.msra.mxu0 %v3725
    %4101 = vmatprep.subr.mxu0 0.0
    %4102 = vmatpush2.msra.mxu0 %v3718
    %4103 = vmatprep.subr.mxu0 0.0
    %4104 = vmatpush2.msra.mxu0 %v3711
    %4105 = vmatprep.subr.mxu0 0.0
    %4106 = vmatpush2.msra.mxu0 %v3704
    %4107 = vmatprep.subr.mxu0 0.0
    %4108 = vmatpush2.msra.mxu0 %v3697
    %4109 = vmatprep.subr.mxu0 0.0
    %4110 = vmatpush2.msra.mxu0 %v3690
    %4111 = vmatprep.mubr.f32.mxu0 %v3570
    %4112 = vmatmul.mubr.f32.gmra.mxu0 %v3569
    %v4113 = vpop.f32.mrf.mxu0
    %v4114 = vadd.f32 %v3826, %v4113
    %v4115 = vpop.f32.mrf.mxu0
    %4116 = vdwg.mxu0
    %v4117 = vtanh.pop %v3901
    %v4118 = vtanh.pop %v3903
    %v4119 = vtanh.pop %v3972
    %v4120 = vtanh.pop %v3974
    %v4121 = vmul.f32 %v4117, 0.5
    %v4122 = vmul.f32 %v4118, 0.5
    %v4123 = vmul.f32 %v4119, 0.5
    %v4124 = vmul.f32 %v4120, 0.5
    %v4125 = vadd.f32 %v4121, %v4122
    %v4126 = vadd.f32 %v4125, %v4123
    %v4127 = vsel %vm151, %v4124, 0.0
    %v4128 = vadd.f32 %v4126, %v4127
    %4129 = vadd.xlane.f32.xlu0 %v4128
    %v4130 = vpop.xlane.xlu0 %4129
    %v4131 = vadd.f32 %v3103, %v4130
    %v4132 = vmul.f32 %v4121, 1.442695
    %v4133 = vpow.pop %v4132
    %v4134 = vmul.f32 %v4122, 1.442695
    %v4135 = vpow.pop %v4134
    %4138 = vrot.lane.b32.xlu0 %v4133, 68
    %v4139 = vpop.permute.xlu0 %4138
    %4140 = vrot.lane.b32.xlu0 %v4135, 68
    %v4141 = vpop.permute.xlu0 %4140
    %v4142 = vsel %vm1058, %v4139, %v4141
    %v4146 = vmul.f32 %v2073, %v4139
    %v4147 = vmul.f32 %v2071, %v4142
    %v4148 = vmul.f32 %v2072, %v4141
    %4151 = vrot.lane.b32.xlu0 %v3974, 60
    %v4152 = vpop.permute.xlu0 %4151
    %4153 = vrot.lane.b32.xlu0 %v4043, 60
    %v4154 = vpop.permute.xlu0 %4153
    %v4155 = vsel %vm1054, %v4152, %v4154
    %v4159 = vadd.f32 %v4146, %v4152
    %v4160 = vadd.f32 %v4147, %v4155
    %v4161 = vadd.f32 %v4148, %v4154
    %v4162 = vsel %vm1058, %v2073, %v4159
    %v4163 = vmul.f32 %v4123, 1.442695
    %v4164 = vpow.pop %v4163
    %v4165 = vmul.f32 %v4124, 1.442695
    %v4166 = vpow.pop %v4165
    %v4167 = vmul.f32 %v3136, %v4135
    %v4168 = vmul.f32 %v3137, %v4164
    %v4169 = vmul.f32 %v3138, %v4166
    %4172 = vrot.lane.b32.xlu0 %v4043, 120
    %v4173 = vpop.permute.xlu0 %4172
    %4174 = vrot.lane.b32.xlu0 %v4045, 120
    %v4175 = vpop.permute.xlu0 %4174
    %4176 = vrot.lane.b32.xlu0 %v4114, 120
    %v4177 = vpop.permute.xlu0 %4176
    %v4178 = vsel %vm2101, %v4173, %v4175
    %v4179 = vsel %vm2101, %v4175, %v4177
    %v4183 = vadd.f32 %v4167, %v4178
    %v4184 = vadd.f32 %v4168, %v4179
    %v4185 = vadd.f32 %v4169, %v4177
    %v4186 = vsel %vm1058, %v3136, %v4183
    %4190 = vrot.lane.b32.xlu0 %v3135, 8
    %v4191 = vpop.permute.xlu0 %4190
    %4192 = vrot.lane.b32.xlu0 %v4186, 8
    %v4193 = vpop.permute.xlu0 %4192
    %4194 = vrot.lane.b32.xlu0 %v4184, 8
    %v4195 = vpop.permute.xlu0 %4194
    %4196 = vrot.lane.b32.xlu0 %v4185, 8
    %v4197 = vpop.permute.xlu0 %4196
    %v4198 = vsel %vm151, %v4191, %v4193
    %v4199 = vsel %vm151, %v4193, %v4195
    %v4200 = vsel %vm151, %v4195, %v4197
    %v4205 = vsel %vm151, %v4161, %v4191
    %4206 = vst [vmem:[#allocation2] sm:$0xff] %v26
    %4207 = vst [vmem:[#allocation2 + $0x8] sm:$0xff] %v4162
    %4208 = vst [vmem:[#allocation2 + $0x10] sm:$0xff] %v4160
    %4209 = vst [vmem:[#allocation2 + $0x18] sm:$0xff] %v4205
    %4210 = vst [vmem:[#allocation2 + $0x20] sm:$0xff] %v4198
    %4211 = vst [vmem:[#allocation2 + $0x28] sm:$0xff] %v4199
    %vm4212 = vcmask 130048
    %4213 = vst.msk [vmem:[#allocation2 + $0x30] sm:$0xff] %vm4212, %v4200
    %vm4214 = vcmask 7168
    %4215 = vst.msk [vmem:[%s7] sm:$0xff] %vm4214, %v4131
    // Predicated region
    $region26: #{tpu_custom_call.1} parent=1 // pred_check
      _
    $region27: #{tpu_custom_call.1} parent=1 // pred_check_branch
      %4217 = sbr.rel (0) target = $region29
    $region28: #{tpu_custom_call.1} parent=1 // pred_region
      %s4219 = ssub.s32 896, 896
      %4220 = vsyncadd [#allocation3], %s4219
      %s4222 = sshll.u32 [#allocation2], 4
      %s4223 = int_to_ptr.vmem [resolvable:$true] %s4222
      %4225 = dma.vmem_to_hbm [thread:$0]  %s4223, 896, %s6, [#allocation3]
    $region29: #{tpu_custom_call.1} parent=1 // pred_fallthru
      _
    // Predicated region
    $region30: #{tpu_custom_call.1} parent=1 // pred_check
      _
    $region31: #{tpu_custom_call.1} parent=1 // pred_check_branch
      %4227 = sbr.rel (0) target = $region33
    $region32: #{tpu_custom_call.1} parent=1 // pred_region
      _
    $region33: #{tpu_custom_call.1} parent=1 // pred_fallthru
      _
    // Predicated region
    $region34: #{tpu_custom_call.1} parent=1 // pred_check
      _
    $region35: #{tpu_custom_call.1} parent=1 // pred_check_branch
      %4229 = sbr.rel (0) target = $region37
    $region36: #{tpu_custom_call.1} parent=1 // pred_region
      %4230 = dma.done [#allocation3], 896
    $region37: #{tpu_custom_call.1} parent=1 // pred_fallthru
      _
    // Predicated region
    $region38: #{tpu_custom_call.1} parent=1 // pred_check
      _
    $region39: #{tpu_custom_call.1} parent=1 // pred_check_branch
      %4232 = sbr.rel (0) target = $region41
    $region40: #{tpu_custom_call.1} parent=1 // pred_region
      _
    $region41: #{tpu_custom_call.1} parent=1 // pred_fallthru
      _
    %4233 = vsyncpa [#allocation3], 1

</llo_original>
